<compile_context>
chip_gen: v5e
topology: v5e:2x2
jax: 0.10.0
libtpu: 0.0.40
codegen_flags: <defaults>
</compile_context>

<pallas_src>
import functools

import jax
import jax.numpy as jnp
from jax import lax
from jax.experimental import pallas as pl
from jax.experimental.pallas import tpu as pltpu


# ---------------------------------------------------------------------------
# Model dimensions (small, consistent with the module's construction)
# ---------------------------------------------------------------------------
VOCAB = 30          # word_alphabet.size()
EMB_D = 50          # word_emb_dim (no-bert branch: LSTMEncoder in_size=50)
HID = 100           # per-direction hidden (LSTMEncoder out_size=200, bidirectional)
HID_P = 128         # lane-aligned padded hidden
HIDDEN_DIM = 2 * HID
NUM_LABELS = 10     # label_alphabet_size
LAB_P = 128         # lane-aligned padded label dim
BATCH = 2
SEQ = 8


# ---------------------------------------------------------------------------
# Pallas kernel: embedding + fused bidirectional LSTM + hidden2tag + argmax + mask
# ---------------------------------------------------------------------------
def _bilstm_tag_kernel(
    ids_ref,      # (S*B, 1)     i32   time-major flat word ids
    mask_ref,     # (S*B, 1)     i32   time-major flat mask
    emb_ref,      # (V, D)       f32   embedding table
    w_ih_f_ref,   # (D, 4*Hp)    f32   forward  W_ih^T (gate-padded)
    w_ih_b_ref,   # (D, 4*Hp)    f32   backward W_ih^T (gate-padded)
    b_f_ref,      # (1, 4*Hp)    f32   forward  (b_ih + b_hh)
    b_b_ref,      # (1, 4*Hp)    f32   backward (b_ih + b_hh)
    w_hh_f_ref,   # (Hp, 4*Hp)   f32   forward  W_hh^T (row/gate-padded)
    w_hh_b_ref,   # (Hp, 4*Hp)   f32   backward W_hh^T (row/gate-padded)
    wt_f_ref,     # (Hp, Lp)     f32   hidden2tag weight, forward half (padded)
    wt_b_ref,     # (Hp, Lp)     f32   hidden2tag weight, backward half (padded)
    bt_ref,       # (1, Lp)      f32   hidden2tag bias (-1e30 in pad lanes)
    out_ref,      # (S*B, 1)     i32   decode_seq (time-major, lane-dense)
    *,
    seq_len,
    batch,
):
    S, B = seq_len, batch
    V = emb_ref.shape[0]
    Hp, Lp = wt_f_ref.shape

    # ---- 1) embedding gather (one-hot matmul) + per-direction input projection,
    #         hoisted out of the serial recurrence (MXU-friendly, overlappable). ----
    ids = ids_ref[...]                                                  # (S*B, 1)
    onehot = (ids == lax.broadcasted_iota(jnp.int32, (S * B, V), 1)
              ).astype(jnp.float32)
    x_flat = jnp.dot(onehot, emb_ref[...],
                     preferred_element_type=jnp.float32)                # (S*B, D)
    xw_f = (jnp.dot(x_flat, w_ih_f_ref[...],
                    preferred_element_type=jnp.float32) + b_f_ref[...]) # (S*B, 4Hp)
    xw_b = (jnp.dot(x_flat, w_ih_b_ref[...],
                    preferred_element_type=jnp.float32) + b_b_ref[...])
    # static per-step slices (loop-invariant wrt the recurrence -> off critical path)
    xw_f_steps = [xw_f[t * B:(t + 1) * B, :] for t in range(S)]
    xw_b_steps = [xw_b[t * B:(t + 1) * B, :] for t in range(S)]

    # loop-invariant recurrent weights, read once (hoisted out of the unroll)
    w_hh_f = w_hh_f_ref[...]                                            # (Hp, 4Hp)
    w_hh_b = w_hh_b_ref[...]

    # ---- 2) bidirectional recurrence, fully unrolled (S=8 static).
    #         h/c and per-step hidden states live in registers; no VMEM scratch. ----
    def lstm_gates(g, c_prev):
        # PyTorch gate order: input, forget, cell(g), output — lane-aligned slices.
        i_g = jax.nn.sigmoid(g[:, 0 * Hp:1 * Hp])
        f_g = jax.nn.sigmoid(g[:, 1 * Hp:2 * Hp])
        g_g = jnp.tanh(g[:, 2 * Hp:3 * Hp])
        o_g = jax.nn.sigmoid(g[:, 3 * Hp:4 * Hp])
        c_new = f_g * c_prev + i_g * g_g
        h_new = o_g * jnp.tanh(c_new)
        return h_new, c_new

    h_f = jnp.zeros((B, Hp), jnp.float32)
    h_b = jnp.zeros((B, Hp), jnp.float32)
    c_f = jnp.zeros((B, Hp), jnp.float32)
    c_b = jnp.zeros((B, Hp), jnp.float32)
    hf_steps = [None] * S
    hb_steps = [None] * S

    for step in range(S):                     # static unroll
        t_f = step
        t_b = S - 1 - step
        if step == 0:
            # h_0 == 0 -> recurrent contribution is exactly zero; skip the matmuls.
            g_f = xw_f_steps[t_f]
            g_b = xw_b_steps[t_b]
        else:
            g_f = xw_f_steps[t_f] + jnp.dot(h_f, w_hh_f,
                                            preferred_element_type=jnp.float32)
            g_b = xw_b_steps[t_b] + jnp.dot(h_b, w_hh_b,
                                            preferred_element_type=jnp.float32)
        h_f, c_f = lstm_gates(g_f, c_f)
        h_b, c_b = lstm_gates(g_b, c_b)
        hf_steps[t_f] = h_f
        hb_steps[t_b] = h_b

    hid_f = jnp.concatenate(hf_steps, axis=0)                           # (S*B, Hp)
    hid_b = jnp.concatenate(hb_steps, axis=0)                           # (S*B, Hp)

    # ---- 3) hidden2tag with split, lane-padded weights; argmax; mask ----
    logits = (jnp.dot(hid_f, wt_f_ref[...], preferred_element_type=jnp.float32)
              + jnp.dot(hid_b, wt_b_ref[...], preferred_element_type=jnp.float32)
              + bt_ref[...])                                            # (S*B, Lp)

    # argmax with first-index tie-break (matches torch.max semantics); pad lanes
    # carry -1e30 bias so they can never win.
    col = lax.broadcasted_iota(jnp.int32, logits.shape, 1)
    max_val = jnp.max(logits, axis=1, keepdims=True)
    cand = jnp.where(logits == max_val, col, jnp.int32(Lp))
    tag = jnp.min(cand, axis=1, keepdims=True).astype(jnp.int32)        # (S*B, 1)

    out_ref[...] = mask_ref[...] * tag


# ---------------------------------------------------------------------------
# Wrapper — layout plumbing (transposes/reshapes) lives in XLA, not the kernel.
# ---------------------------------------------------------------------------
@jax.jit
def bilstm_forward(word_inputs, mask, params):
    """word_inputs: (B, S) int32 ids; mask: (B, S) {0,1}. Returns (B, S) int32."""
    B, S = word_inputs.shape

    ids_col = jnp.transpose(word_inputs).reshape(S * B, 1).astype(jnp.int32)
    mask_col = jnp.transpose(mask.astype(jnp.int32)).reshape(S * B, 1)

    vmem = pl.BlockSpec(memory_space=pltpu.MemorySpace.VMEM)

    kernel = functools.partial(_bilstm_tag_kernel, seq_len=S, batch=B)

    out_col = pl.pallas_call(
        kernel,
        out_shape=jax.ShapeDtypeStruct((S * B, 1), jnp.int32),
        in_specs=[vmem] * 12,
        out_specs=vmem,
    )(
        ids_col, mask_col,
        params["word_emb"],
        params["w_ih_f"], params["w_ih_b"], params["b_f"], params["b_b"],
        params["w_hh_f"], params["w_hh_b"],
        params["wt_f"], params["wt_b"], params["bt"],
    )

    return jnp.transpose(out_col.reshape(S, B))                         # (B, S)


# ---------------------------------------------------------------------------
# Deterministic parameter init + one-time packing/padding for the kernel
# ---------------------------------------------------------------------------
def _pad_gate_cols(w, h, hp):
    """w: (rows, 4*h) -> (rows, 4*hp): zero-pad each of the 4 gate blocks."""
    parts = []
    for g in range(4):
        blk = w[:, g * h:(g + 1) * h]
        parts.append(jnp.pad(blk, ((0, 0), (0, hp - h))))
    return jnp.concatenate(parts, axis=1)


def init_params(key):
    ks = jax.random.split(key, 12)
    k = 1.0 / jnp.sqrt(jnp.float32(HID))

    def u(key, shape, scale):
        return jax.random.uniform(key, shape, jnp.float32, -scale, scale)

    # raw (un-padded) parameters, shapes per module __init__
    word_emb = jax.random.normal(ks[0], (VOCAB, EMB_D), jnp.float32)
    wf_ih_t = u(ks[1], (EMB_D, 4 * HID), k)        # forward  W_ih^T
    wf_hh_t = u(ks[2], (HID, 4 * HID), k)          # forward  W_hh^T
    bf = u(ks[3], (1, 4 * HID), k) + u(ks[4], (1, 4 * HID), k)
    wb_ih_t = u(ks[5], (EMB_D, 4 * HID), k)        # backward W_ih^T
    wb_hh_t = u(ks[6], (HID, 4 * HID), k)          # backward W_hh^T
    bb = u(ks[7], (1, 4 * HID), k) + u(ks[8], (1, 4 * HID), k)
    kt = 1.0 / jnp.sqrt(jnp.float32(HIDDEN_DIM))
    wt_t = u(ks[9], (HIDDEN_DIM, NUM_LABELS), kt)  # hidden2tag weight^T (2H, L)
    bt = u(ks[10], (1, NUM_LABELS), kt)

    # --- pack / pad for the kernel (done once, host side) ---
    w_ih_f = _pad_gate_cols(wf_ih_t, HID, HID_P)                        # (D, 4*Hp)
    w_ih_b = _pad_gate_cols(wb_ih_t, HID, HID_P)
    b_f = _pad_gate_cols(bf, HID, HID_P)                                # (1, 4*Hp)
    b_b = _pad_gate_cols(bb, HID, HID_P)

    w_hh_f = jnp.pad(_pad_gate_cols(wf_hh_t, HID, HID_P),
                     ((0, HID_P - HID), (0, 0)))                        # (Hp, 4*Hp)
    w_hh_b = jnp.pad(_pad_gate_cols(wb_hh_t, HID, HID_P),
                     ((0, HID_P - HID), (0, 0)))

    # hidden2tag split halves, padded to (Hp, Lp); pad lanes get -1e30 bias so
    # they can never win the in-kernel argmax.
    wt_f = jnp.pad(wt_t[:HID], ((0, HID_P - HID), (0, LAB_P - NUM_LABELS)))
    wt_b = jnp.pad(wt_t[HID:], ((0, HID_P - HID), (0, LAB_P - NUM_LABELS)))
    bt_p = jnp.concatenate(
        [bt, jnp.full((1, LAB_P - NUM_LABELS), -1e30, jnp.float32)], axis=1)

    return {
        "word_emb": word_emb,
        "w_ih_f": w_ih_f, "w_ih_b": w_ih_b,
        "b_f": b_f, "b_b": b_b,
        "w_hh_f": w_hh_f, "w_hh_b": w_hh_b,
        "wt_f": wt_f, "wt_b": wt_b, "bt": bt_p,
    }


if __name__ == "__main__":
    root = jax.random.PRNGKey(0)
    k_param, k_word = jax.random.split(root)

    params = init_params(k_param)

    word_inputs = jax.random.randint(k_word, (BATCH, SEQ), 0, VOCAB, jnp.int32)
    mask = jnp.ones((BATCH, SEQ), jnp.int32)   # full-length sequences

    decode_seq = bilstm_forward(word_inputs, mask, params)
    jax.block_until_ready(decode_seq)

    assert decode_seq.shape == (BATCH, SEQ)
    assert decode_seq.dtype == jnp.int32
    print("KERNEL_OK")
</pallas_src>

<mosaic_0001>
module attributes {stable_mosaic.version = 11 : i64} {
  func.func @_bilstm_tag_kernel(%arg0: memref<16x1xi32, #tpu.memory_space<vmem>>, %arg1: memref<16x1xi32, #tpu.memory_space<vmem>>, %arg2: memref<30x50xf32, #tpu.memory_space<vmem>>, %arg3: memref<50x512xf32, #tpu.memory_space<vmem>>, %arg4: memref<50x512xf32, #tpu.memory_space<vmem>>, %arg5: memref<1x512xf32, #tpu.memory_space<vmem>>, %arg6: memref<1x512xf32, #tpu.memory_space<vmem>>, %arg7: memref<128x512xf32, #tpu.memory_space<vmem>>, %arg8: memref<128x512xf32, #tpu.memory_space<vmem>>, %arg9: memref<128x128xf32, #tpu.memory_space<vmem>>, %arg10: memref<128x128xf32, #tpu.memory_space<vmem>>, %arg11: memref<1x128xf32, #tpu.memory_space<vmem>>, %arg12: memref<16x1xi32, #tpu.memory_space<vmem>>) attributes {dimension_semantics = [], scalar_prefetch = 0 : i64, scratch_operands = 0 : i64, tpu.core_type = #tpu.core_type<tc>} {
    %c0 = arith.constant 0 : index
    %c0_0 = arith.constant 0 : index
    %0 = vector.load %arg0[%c0, %c0_0] : memref<16x1xi32, #tpu.memory_space<vmem>>, vector<16x1xi32>
    %1 = tpu.iota {dimensions = array<i32: 1>} : vector<16x30xi32>
    %2 = vector.broadcast %0 : vector<16x1xi32> to vector<16x30xi32>
    %3 = arith.cmpi eq, %2, %1 : vector<16x30xi32>
    %4 = arith.extui %3 : vector<16x30xi1> to vector<16x30xi32>
    %5 = arith.sitofp %4 : vector<16x30xi32> to vector<16x30xf32>
    %c0_1 = arith.constant 0 : index
    %c0_2 = arith.constant 0 : index
    %6 = vector.load %arg2[%c0_1, %c0_2] : memref<30x50xf32, #tpu.memory_space<vmem>>, vector<30x50xf32>
    %cst = arith.constant dense<0.000000e+00> : vector<16x50xf32>
    %7 = tpu.matmul %5, %6, %cst {dimension_numbers = #tpu.dot_dimension_numbers<[1], [0], [0], [1], [0, 0, 1, 1], [], []>} : vector<16x30xf32>, vector<30x50xf32>, vector<16x50xf32> -> vector<16x50xf32>
    %c0_3 = arith.constant 0 : index
    %c0_4 = arith.constant 0 : index
    %8 = vector.load %arg3[%c0_3, %c0_4] : memref<50x512xf32, #tpu.memory_space<vmem>>, vector<50x512xf32>
    %cst_5 = arith.constant dense<0.000000e+00> : vector<16x512xf32>
    %9 = tpu.matmul %7, %8, %cst_5 {dimension_numbers = #tpu.dot_dimension_numbers<[1], [0], [0], [1], [0, 0, 1, 1], [], []>} : vector<16x50xf32>, vector<50x512xf32>, vector<16x512xf32> -> vector<16x512xf32>
    %c0_6 = arith.constant 0 : index
    %c0_7 = arith.constant 0 : index
    %10 = vector.load %arg5[%c0_6, %c0_7] : memref<1x512xf32, #tpu.memory_space<vmem>>, vector<1x512xf32>
    %11 = vector.broadcast %10 : vector<1x512xf32> to vector<16x512xf32>
    %12 = arith.addf %9, %11 : vector<16x512xf32>
    %c0_8 = arith.constant 0 : index
    %c0_9 = arith.constant 0 : index
    %13 = vector.load %arg4[%c0_8, %c0_9] : memref<50x512xf32, #tpu.memory_space<vmem>>, vector<50x512xf32>
    %cst_10 = arith.constant dense<0.000000e+00> : vector<16x512xf32>
    %14 = tpu.matmul %7, %13, %cst_10 {dimension_numbers = #tpu.dot_dimension_numbers<[1], [0], [0], [1], [0, 0, 1, 1], [], []>} : vector<16x50xf32>, vector<50x512xf32>, vector<16x512xf32> -> vector<16x512xf32>
    %c0_11 = arith.constant 0 : index
    %c0_12 = arith.constant 0 : index
    %15 = vector.load %arg6[%c0_11, %c0_12] : memref<1x512xf32, #tpu.memory_space<vmem>>, vector<1x512xf32>
    %16 = vector.broadcast %15 : vector<1x512xf32> to vector<16x512xf32>
    %17 = arith.addf %14, %16 : vector<16x512xf32>
    %18 = vector.extract_strided_slice %12 {offsets = [0, 0], sizes = [2, 512], strides = [1, 1]} : vector<16x512xf32> to vector<2x512xf32>
    %19 = vector.extract_strided_slice %12 {offsets = [2, 0], sizes = [2, 512], strides = [1, 1]} : vector<16x512xf32> to vector<2x512xf32>
    %20 = vector.extract_strided_slice %12 {offsets = [4, 0], sizes = [2, 512], strides = [1, 1]} : vector<16x512xf32> to vector<2x512xf32>
    %21 = vector.extract_strided_slice %12 {offsets = [6, 0], sizes = [2, 512], strides = [1, 1]} : vector<16x512xf32> to vector<2x512xf32>
    %22 = vector.extract_strided_slice %12 {offsets = [8, 0], sizes = [2, 512], strides = [1, 1]} : vector<16x512xf32> to vector<2x512xf32>
    %23 = vector.extract_strided_slice %12 {offsets = [10, 0], sizes = [2, 512], strides = [1, 1]} : vector<16x512xf32> to vector<2x512xf32>
    %24 = vector.extract_strided_slice %12 {offsets = [12, 0], sizes = [2, 512], strides = [1, 1]} : vector<16x512xf32> to vector<2x512xf32>
    %25 = vector.extract_strided_slice %12 {offsets = [14, 0], sizes = [2, 512], strides = [1, 1]} : vector<16x512xf32> to vector<2x512xf32>
    %26 = vector.extract_strided_slice %17 {offsets = [0, 0], sizes = [2, 512], strides = [1, 1]} : vector<16x512xf32> to vector<2x512xf32>
    %27 = vector.extract_strided_slice %17 {offsets = [2, 0], sizes = [2, 512], strides = [1, 1]} : vector<16x512xf32> to vector<2x512xf32>
    %28 = vector.extract_strided_slice %17 {offsets = [4, 0], sizes = [2, 512], strides = [1, 1]} : vector<16x512xf32> to vector<2x512xf32>
    %29 = vector.extract_strided_slice %17 {offsets = [6, 0], sizes = [2, 512], strides = [1, 1]} : vector<16x512xf32> to vector<2x512xf32>
    %30 = vector.extract_strided_slice %17 {offsets = [8, 0], sizes = [2, 512], strides = [1, 1]} : vector<16x512xf32> to vector<2x512xf32>
    %31 = vector.extract_strided_slice %17 {offsets = [10, 0], sizes = [2, 512], strides = [1, 1]} : vector<16x512xf32> to vector<2x512xf32>
    %32 = vector.extract_strided_slice %17 {offsets = [12, 0], sizes = [2, 512], strides = [1, 1]} : vector<16x512xf32> to vector<2x512xf32>
    %33 = vector.extract_strided_slice %17 {offsets = [14, 0], sizes = [2, 512], strides = [1, 1]} : vector<16x512xf32> to vector<2x512xf32>
    %c0_13 = arith.constant 0 : index
    %c0_14 = arith.constant 0 : index
    %34 = vector.load %arg7[%c0_13, %c0_14] : memref<128x512xf32, #tpu.memory_space<vmem>>, vector<128x512xf32>
    %c0_15 = arith.constant 0 : index
    %c0_16 = arith.constant 0 : index
    %35 = vector.load %arg8[%c0_15, %c0_16] : memref<128x512xf32, #tpu.memory_space<vmem>>, vector<128x512xf32>
    %cst_17 = arith.constant 0.000000e+00 : f32
    %36 = vector.broadcast %cst_17 : f32 to vector<2x128xf32>
    %cst_18 = arith.constant 0.000000e+00 : f32
    %37 = vector.broadcast %cst_18 : f32 to vector<2x128xf32>
    %38 = vector.extract_strided_slice %18 {offsets = [0, 0], sizes = [2, 128], strides = [1, 1]} : vector<2x512xf32> to vector<2x128xf32>
    %39 = arith.negf %38 : vector<2x128xf32>
    %40 = math.exp %39 : vector<2x128xf32>
    %cst_19 = arith.constant 1.000000e+00 : f32
    %41 = vector.broadcast %cst_19 : f32 to vector<2x128xf32>
    %42 = arith.addf %41, %40 : vector<2x128xf32>
    %43 = arith.divf %41, %42 : vector<2x128xf32>
    %44 = vector.extract_strided_slice %18 {offsets = [0, 128], sizes = [2, 128], strides = [1, 1]} : vector<2x512xf32> to vector<2x128xf32>
    %45 = arith.negf %44 : vector<2x128xf32>
    %46 = math.exp %45 : vector<2x128xf32>
    %cst_20 = arith.constant 1.000000e+00 : f32
    %47 = vector.broadcast %cst_20 : f32 to vector<2x128xf32>
    %48 = arith.addf %47, %46 : vector<2x128xf32>
    %49 = arith.divf %47, %48 : vector<2x128xf32>
    %50 = vector.extract_strided_slice %18 {offsets = [0, 256], sizes = [2, 128], strides = [1, 1]} : vector<2x512xf32> to vector<2x128xf32>
    %51 = math.tanh %50 : vector<2x128xf32>
    %52 = vector.extract_strided_slice %18 {offsets = [0, 384], sizes = [2, 128], strides = [1, 1]} : vector<2x512xf32> to vector<2x128xf32>
    %53 = arith.negf %52 : vector<2x128xf32>
    %54 = math.exp %53 : vector<2x128xf32>
    %cst_21 = arith.constant 1.000000e+00 : f32
    %55 = vector.broadcast %cst_21 : f32 to vector<2x128xf32>
    %56 = arith.addf %55, %54 : vector<2x128xf32>
    %57 = arith.divf %55, %56 : vector<2x128xf32>
    %58 = arith.mulf %49, %36 : vector<2x128xf32>
    %59 = arith.mulf %43, %51 : vector<2x128xf32>
    %60 = arith.addf %58, %59 : vector<2x128xf32>
    %61 = math.tanh %60 : vector<2x128xf32>
    %62 = arith.mulf %57, %61 : vector<2x128xf32>
    %63 = vector.extract_strided_slice %33 {offsets = [0, 0], sizes = [2, 128], strides = [1, 1]} : vector<2x512xf32> to vector<2x128xf32>
    %64 = arith.negf %63 : vector<2x128xf32>
    %65 = math.exp %64 : vector<2x128xf32>
    %cst_22 = arith.constant 1.000000e+00 : f32
    %66 = vector.broadcast %cst_22 : f32 to vector<2x128xf32>
    %67 = arith.addf %66, %65 : vector<2x128xf32>
    %68 = arith.divf %66, %67 : vector<2x128xf32>
    %69 = vector.extract_strided_slice %33 {offsets = [0, 128], sizes = [2, 128], strides = [1, 1]} : vector<2x512xf32> to vector<2x128xf32>
    %70 = arith.negf %69 : vector<2x128xf32>
    %71 = math.exp %70 : vector<2x128xf32>
    %cst_23 = arith.constant 1.000000e+00 : f32
    %72 = vector.broadcast %cst_23 : f32 to vector<2x128xf32>
    %73 = arith.addf %72, %71 : vector<2x128xf32>
    %74 = arith.divf %72, %73 : vector<2x128xf32>
    %75 = vector.extract_strided_slice %33 {offsets = [0, 256], sizes = [2, 128], strides = [1, 1]} : vector<2x512xf32> to vector<2x128xf32>
    %76 = math.tanh %75 : vector<2x128xf32>
    %77 = vector.extract_strided_slice %33 {offsets = [0, 384], sizes = [2, 128], strides = [1, 1]} : vector<2x512xf32> to vector<2x128xf32>
    %78 = arith.negf %77 : vector<2x128xf32>
    %79 = math.exp %78 : vector<2x128xf32>
    %cst_24 = arith.constant 1.000000e+00 : f32
    %80 = vector.broadcast %cst_24 : f32 to vector<2x128xf32>
    %81 = arith.addf %80, %79 : vector<2x128xf32>
    %82 = arith.divf %80, %81 : vector<2x128xf32>
    %83 = arith.mulf %74, %37 : vector<2x128xf32>
    %84 = arith.mulf %68, %76 : vector<2x128xf32>
    %85 = arith.addf %83, %84 : vector<2x128xf32>
    %86 = math.tanh %85 : vector<2x128xf32>
    %87 = arith.mulf %82, %86 : vector<2x128xf32>
    %cst_25 = arith.constant dense<0.000000e+00> : vector<2x512xf32>
    %88 = tpu.matmul %62, %34, %cst_25 {dimension_numbers = #tpu.dot_dimension_numbers<[1], [0], [0], [1], [0, 0, 1, 1], [], []>} : vector<2x128xf32>, vector<128x512xf32>, vector<2x512xf32> -> vector<2x512xf32>
    %89 = arith.addf %19, %88 : vector<2x512xf32>
    %cst_26 = arith.constant dense<0.000000e+00> : vector<2x512xf32>
    %90 = tpu.matmul %87, %35, %cst_26 {dimension_numbers = #tpu.dot_dimension_numbers<[1], [0], [0], [1], [0, 0, 1, 1], [], []>} : vector<2x128xf32>, vector<128x512xf32>, vector<2x512xf32> -> vector<2x512xf32>
    %91 = arith.addf %32, %90 : vector<2x512xf32>
    %92 = vector.extract_strided_slice %89 {offsets = [0, 0], sizes = [2, 128], strides = [1, 1]} : vector<2x512xf32> to vector<2x128xf32>
    %93 = arith.negf %92 : vector<2x128xf32>
    %94 = math.exp %93 : vector<2x128xf32>
    %cst_27 = arith.constant 1.000000e+00 : f32
    %95 = vector.broadcast %cst_27 : f32 to vector<2x128xf32>
    %96 = arith.addf %95, %94 : vector<2x128xf32>
    %97 = arith.divf %95, %96 : vector<2x128xf32>
    %98 = vector.extract_strided_slice %89 {offsets = [0, 128], sizes = [2, 128], strides = [1, 1]} : vector<2x512xf32> to vector<2x128xf32>
    %99 = arith.negf %98 : vector<2x128xf32>
    %100 = math.exp %99 : vector<2x128xf32>
    %cst_28 = arith.constant 1.000000e+00 : f32
    %101 = vector.broadcast %cst_28 : f32 to vector<2x128xf32>
    %102 = arith.addf %101, %100 : vector<2x128xf32>
    %103 = arith.divf %101, %102 : vector<2x128xf32>
    %104 = vector.extract_strided_slice %89 {offsets = [0, 256], sizes = [2, 128], strides = [1, 1]} : vector<2x512xf32> to vector<2x128xf32>
    %105 = math.tanh %104 : vector<2x128xf32>
    %106 = vector.extract_strided_slice %89 {offsets = [0, 384], sizes = [2, 128], strides = [1, 1]} : vector<2x512xf32> to vector<2x128xf32>
    %107 = arith.negf %106 : vector<2x128xf32>
    %108 = math.exp %107 : vector<2x128xf32>
    %cst_29 = arith.constant 1.000000e+00 : f32
    %109 = vector.broadcast %cst_29 : f32 to vector<2x128xf32>
    %110 = arith.addf %109, %108 : vector<2x128xf32>
    %111 = arith.divf %109, %110 : vector<2x128xf32>
    %112 = arith.mulf %103, %60 : vector<2x128xf32>
    %113 = arith.mulf %97, %105 : vector<2x128xf32>
    %114 = arith.addf %112, %113 : vector<2x128xf32>
    %115 = math.tanh %114 : vector<2x128xf32>
    %116 = arith.mulf %111, %115 : vector<2x128xf32>
    %117 = vector.extract_strided_slice %91 {offsets = [0, 0], sizes = [2, 128], strides = [1, 1]} : vector<2x512xf32> to vector<2x128xf32>
    %118 = arith.negf %117 : vector<2x128xf32>
    %119 = math.exp %118 : vector<2x128xf32>
    %cst_30 = arith.constant 1.000000e+00 : f32
    %120 = vector.broadcast %cst_30 : f32 to vector<2x128xf32>
    %121 = arith.addf %120, %119 : vector<2x128xf32>
    %122 = arith.divf %120, %121 : vector<2x128xf32>
    %123 = vector.extract_strided_slice %91 {offsets = [0, 128], sizes = [2, 128], strides = [1, 1]} : vector<2x512xf32> to vector<2x128xf32>
    %124 = arith.negf %123 : vector<2x128xf32>
    %125 = math.exp %124 : vector<2x128xf32>
    %cst_31 = arith.constant 1.000000e+00 : f32
    %126 = vector.broadcast %cst_31 : f32 to vector<2x128xf32>
    %127 = arith.addf %126, %125 : vector<2x128xf32>
    %128 = arith.divf %126, %127 : vector<2x128xf32>
    %129 = vector.extract_strided_slice %91 {offsets = [0, 256], sizes = [2, 128], strides = [1, 1]} : vector<2x512xf32> to vector<2x128xf32>
    %130 = math.tanh %129 : vector<2x128xf32>
    %131 = vector.extract_strided_slice %91 {offsets = [0, 384], sizes = [2, 128], strides = [1, 1]} : vector<2x512xf32> to vector<2x128xf32>
    %132 = arith.negf %131 : vector<2x128xf32>
    %133 = math.exp %132 : vector<2x128xf32>
    %cst_32 = arith.constant 1.000000e+00 : f32
    %134 = vector.broadcast %cst_32 : f32 to vector<2x128xf32>
    %135 = arith.addf %134, %133 : vector<2x128xf32>
    %136 = arith.divf %134, %135 : vector<2x128xf32>
    %137 = arith.mulf %128, %85 : vector<2x128xf32>
    %138 = arith.mulf %122, %130 : vector<2x128xf32>
    %139 = arith.addf %137, %138 : vector<2x128xf32>
    %140 = math.tanh %139 : vector<2x128xf32>
    %141 = arith.mulf %136, %140 : vector<2x128xf32>
    %cst_33 = arith.constant dense<0.000000e+00> : vector<2x512xf32>
    %142 = tpu.matmul %116, %34, %cst_33 {dimension_numbers = #tpu.dot_dimension_numbers<[1], [0], [0], [1], [0, 0, 1, 1], [], []>} : vector<2x128xf32>, vector<128x512xf32>, vector<2x512xf32> -> vector<2x512xf32>
    %143 = arith.addf %20, %142 : vector<2x512xf32>
    %cst_34 = arith.constant dense<0.000000e+00> : vector<2x512xf32>
    %144 = tpu.matmul %141, %35, %cst_34 {dimension_numbers = #tpu.dot_dimension_numbers<[1], [0], [0], [1], [0, 0, 1, 1], [], []>} : vector<2x128xf32>, vector<128x512xf32>, vector<2x512xf32> -> vector<2x512xf32>
    %145 = arith.addf %31, %144 : vector<2x512xf32>
    %146 = vector.extract_strided_slice %143 {offsets = [0, 0], sizes = [2, 128], strides = [1, 1]} : vector<2x512xf32> to vector<2x128xf32>
    %147 = arith.negf %146 : vector<2x128xf32>
    %148 = math.exp %147 : vector<2x128xf32>
    %cst_35 = arith.constant 1.000000e+00 : f32
    %149 = vector.broadcast %cst_35 : f32 to vector<2x128xf32>
    %150 = arith.addf %149, %148 : vector<2x128xf32>
    %151 = arith.divf %149, %150 : vector<2x128xf32>
    %152 = vector.extract_strided_slice %143 {offsets = [0, 128], sizes = [2, 128], strides = [1, 1]} : vector<2x512xf32> to vector<2x128xf32>
    %153 = arith.negf %152 : vector<2x128xf32>
    %154 = math.exp %153 : vector<2x128xf32>
    %cst_36 = arith.constant 1.000000e+00 : f32
    %155 = vector.broadcast %cst_36 : f32 to vector<2x128xf32>
    %156 = arith.addf %155, %154 : vector<2x128xf32>
    %157 = arith.divf %155, %156 : vector<2x128xf32>
    %158 = vector.extract_strided_slice %143 {offsets = [0, 256], sizes = [2, 128], strides = [1, 1]} : vector<2x512xf32> to vector<2x128xf32>
    %159 = math.tanh %158 : vector<2x128xf32>
    %160 = vector.extract_strided_slice %143 {offsets = [0, 384], sizes = [2, 128], strides = [1, 1]} : vector<2x512xf32> to vector<2x128xf32>
    %161 = arith.negf %160 : vector<2x128xf32>
    %162 = math.exp %161 : vector<2x128xf32>
    %cst_37 = arith.constant 1.000000e+00 : f32
    %163 = vector.broadcast %cst_37 : f32 to vector<2x128xf32>
    %164 = arith.addf %163, %162 : vector<2x128xf32>
    %165 = arith.divf %163, %164 : vector<2x128xf32>
    %166 = arith.mulf %157, %114 : vector<2x128xf32>
    %167 = arith.mulf %151, %159 : vector<2x128xf32>
    %168 = arith.addf %166, %167 : vector<2x128xf32>
    %169 = math.tanh %168 : vector<2x128xf32>
    %170 = arith.mulf %165, %169 : vector<2x128xf32>
    %171 = vector.extract_strided_slice %145 {offsets = [0, 0], sizes = [2, 128], strides = [1, 1]} : vector<2x512xf32> to vector<2x128xf32>
    %172 = arith.negf %171 : vector<2x128xf32>
    %173 = math.exp %172 : vector<2x128xf32>
    %cst_38 = arith.constant 1.000000e+00 : f32
    %174 = vector.broadcast %cst_38 : f32 to vector<2x128xf32>
    %175 = arith.addf %174, %173 : vector<2x128xf32>
    %176 = arith.divf %174, %175 : vector<2x128xf32>
    %177 = vector.extract_strided_slice %145 {offsets = [0, 128], sizes = [2, 128], strides = [1, 1]} : vector<2x512xf32> to vector<2x128xf32>
    %178 = arith.negf %177 : vector<2x128xf32>
    %179 = math.exp %178 : vector<2x128xf32>
    %cst_39 = arith.constant 1.000000e+00 : f32
    %180 = vector.broadcast %cst_39 : f32 to vector<2x128xf32>
    %181 = arith.addf %180, %179 : vector<2x128xf32>
    %182 = arith.divf %180, %181 : vector<2x128xf32>
    %183 = vector.extract_strided_slice %145 {offsets = [0, 256], sizes = [2, 128], strides = [1, 1]} : vector<2x512xf32> to vector<2x128xf32>
    %184 = math.tanh %183 : vector<2x128xf32>
    %185 = vector.extract_strided_slice %145 {offsets = [0, 384], sizes = [2, 128], strides = [1, 1]} : vector<2x512xf32> to vector<2x128xf32>
    %186 = arith.negf %185 : vector<2x128xf32>
    %187 = math.exp %186 : vector<2x128xf32>
    %cst_40 = arith.constant 1.000000e+00 : f32
    %188 = vector.broadcast %cst_40 : f32 to vector<2x128xf32>
    %189 = arith.addf %188, %187 : vector<2x128xf32>
    %190 = arith.divf %188, %189 : vector<2x128xf32>
    %191 = arith.mulf %182, %139 : vector<2x128xf32>
    %192 = arith.mulf %176, %184 : vector<2x128xf32>
    %193 = arith.addf %191, %192 : vector<2x128xf32>
    %194 = math.tanh %193 : vector<2x128xf32>
    %195 = arith.mulf %190, %194 : vector<2x128xf32>
    %cst_41 = arith.constant dense<0.000000e+00> : vector<2x512xf32>
    %196 = tpu.matmul %170, %34, %cst_41 {dimension_numbers = #tpu.dot_dimension_numbers<[1], [0], [0], [1], [0, 0, 1, 1], [], []>} : vector<2x128xf32>, vector<128x512xf32>, vector<2x512xf32> -> vector<2x512xf32>
    %197 = arith.addf %21, %196 : vector<2x512xf32>
    %cst_42 = arith.constant dense<0.000000e+00> : vector<2x512xf32>
    %198 = tpu.matmul %195, %35, %cst_42 {dimension_numbers = #tpu.dot_dimension_numbers<[1], [0], [0], [1], [0, 0, 1, 1], [], []>} : vector<2x128xf32>, vector<128x512xf32>, vector<2x512xf32> -> vector<2x512xf32>
    %199 = arith.addf %30, %198 : vector<2x512xf32>
    %200 = vector.extract_strided_slice %197 {offsets = [0, 0], sizes = [2, 128], strides = [1, 1]} : vector<2x512xf32> to vector<2x128xf32>
    %201 = arith.negf %200 : vector<2x128xf32>
    %202 = math.exp %201 : vector<2x128xf32>
    %cst_43 = arith.constant 1.000000e+00 : f32
    %203 = vector.broadcast %cst_43 : f32 to vector<2x128xf32>
    %204 = arith.addf %203, %202 : vector<2x128xf32>
    %205 = arith.divf %203, %204 : vector<2x128xf32>
    %206 = vector.extract_strided_slice %197 {offsets = [0, 128], sizes = [2, 128], strides = [1, 1]} : vector<2x512xf32> to vector<2x128xf32>
    %207 = arith.negf %206 : vector<2x128xf32>
    %208 = math.exp %207 : vector<2x128xf32>
    %cst_44 = arith.constant 1.000000e+00 : f32
    %209 = vector.broadcast %cst_44 : f32 to vector<2x128xf32>
    %210 = arith.addf %209, %208 : vector<2x128xf32>
    %211 = arith.divf %209, %210 : vector<2x128xf32>
    %212 = vector.extract_strided_slice %197 {offsets = [0, 256], sizes = [2, 128], strides = [1, 1]} : vector<2x512xf32> to vector<2x128xf32>
    %213 = math.tanh %212 : vector<2x128xf32>
    %214 = vector.extract_strided_slice %197 {offsets = [0, 384], sizes = [2, 128], strides = [1, 1]} : vector<2x512xf32> to vector<2x128xf32>
    %215 = arith.negf %214 : vector<2x128xf32>
    %216 = math.exp %215 : vector<2x128xf32>
    %cst_45 = arith.constant 1.000000e+00 : f32
    %217 = vector.broadcast %cst_45 : f32 to vector<2x128xf32>
    %218 = arith.addf %217, %216 : vector<2x128xf32>
    %219 = arith.divf %217, %218 : vector<2x128xf32>
    %220 = arith.mulf %211, %168 : vector<2x128xf32>
    %221 = arith.mulf %205, %213 : vector<2x128xf32>
    %222 = arith.addf %220, %221 : vector<2x128xf32>
    %223 = math.tanh %222 : vector<2x128xf32>
    %224 = arith.mulf %219, %223 : vector<2x128xf32>
    %225 = vector.extract_strided_slice %199 {offsets = [0, 0], sizes = [2, 128], strides = [1, 1]} : vector<2x512xf32> to vector<2x128xf32>
    %226 = arith.negf %225 : vector<2x128xf32>
    %227 = math.exp %226 : vector<2x128xf32>
    %cst_46 = arith.constant 1.000000e+00 : f32
    %228 = vector.broadcast %cst_46 : f32 to vector<2x128xf32>
    %229 = arith.addf %228, %227 : vector<2x128xf32>
    %230 = arith.divf %228, %229 : vector<2x128xf32>
    %231 = vector.extract_strided_slice %199 {offsets = [0, 128], sizes = [2, 128], strides = [1, 1]} : vector<2x512xf32> to vector<2x128xf32>
    %232 = arith.negf %231 : vector<2x128xf32>
    %233 = math.exp %232 : vector<2x128xf32>
    %cst_47 = arith.constant 1.000000e+00 : f32
    %234 = vector.broadcast %cst_47 : f32 to vector<2x128xf32>
    %235 = arith.addf %234, %233 : vector<2x128xf32>
    %236 = arith.divf %234, %235 : vector<2x128xf32>
    %237 = vector.extract_strided_slice %199 {offsets = [0, 256], sizes = [2, 128], strides = [1, 1]} : vector<2x512xf32> to vector<2x128xf32>
    %238 = math.tanh %237 : vector<2x128xf32>
    %239 = vector.extract_strided_slice %199 {offsets = [0, 384], sizes = [2, 128], strides = [1, 1]} : vector<2x512xf32> to vector<2x128xf32>
    %240 = arith.negf %239 : vector<2x128xf32>
    %241 = math.exp %240 : vector<2x128xf32>
    %cst_48 = arith.constant 1.000000e+00 : f32
    %242 = vector.broadcast %cst_48 : f32 to vector<2x128xf32>
    %243 = arith.addf %242, %241 : vector<2x128xf32>
    %244 = arith.divf %242, %243 : vector<2x128xf32>
    %245 = arith.mulf %236, %193 : vector<2x128xf32>
    %246 = arith.mulf %230, %238 : vector<2x128xf32>
    %247 = arith.addf %245, %246 : vector<2x128xf32>
    %248 = math.tanh %247 : vector<2x128xf32>
    %249 = arith.mulf %244, %248 : vector<2x128xf32>
    %cst_49 = arith.constant dense<0.000000e+00> : vector<2x512xf32>
    %250 = tpu.matmul %224, %34, %cst_49 {dimension_numbers = #tpu.dot_dimension_numbers<[1], [0], [0], [1], [0, 0, 1, 1], [], []>} : vector<2x128xf32>, vector<128x512xf32>, vector<2x512xf32> -> vector<2x512xf32>
    %251 = arith.addf %22, %250 : vector<2x512xf32>
    %cst_50 = arith.constant dense<0.000000e+00> : vector<2x512xf32>
    %252 = tpu.matmul %249, %35, %cst_50 {dimension_numbers = #tpu.dot_dimension_numbers<[1], [0], [0], [1], [0, 0, 1, 1], [], []>} : vector<2x128xf32>, vector<128x512xf32>, vector<2x512xf32> -> vector<2x512xf32>
    %253 = arith.addf %29, %252 : vector<2x512xf32>
    %254 = vector.extract_strided_slice %251 {offsets = [0, 0], sizes = [2, 128], strides = [1, 1]} : vector<2x512xf32> to vector<2x128xf32>
    %255 = arith.negf %254 : vector<2x128xf32>
    %256 = math.exp %255 : vector<2x128xf32>
    %cst_51 = arith.constant 1.000000e+00 : f32
    %257 = vector.broadcast %cst_51 : f32 to vector<2x128xf32>
    %258 = arith.addf %257, %256 : vector<2x128xf32>
    %259 = arith.divf %257, %258 : vector<2x128xf32>
    %260 = vector.extract_strided_slice %251 {offsets = [0, 128], sizes = [2, 128], strides = [1, 1]} : vector<2x512xf32> to vector<2x128xf32>
    %261 = arith.negf %260 : vector<2x128xf32>
    %262 = math.exp %261 : vector<2x128xf32>
    %cst_52 = arith.constant 1.000000e+00 : f32
    %263 = vector.broadcast %cst_52 : f32 to vector<2x128xf32>
    %264 = arith.addf %263, %262 : vector<2x128xf32>
    %265 = arith.divf %263, %264 : vector<2x128xf32>
    %266 = vector.extract_strided_slice %251 {offsets = [0, 256], sizes = [2, 128], strides = [1, 1]} : vector<2x512xf32> to vector<2x128xf32>
    %267 = math.tanh %266 : vector<2x128xf32>
    %268 = vector.extract_strided_slice %251 {offsets = [0, 384], sizes = [2, 128], strides = [1, 1]} : vector<2x512xf32> to vector<2x128xf32>
    %269 = arith.negf %268 : vector<2x128xf32>
    %270 = math.exp %269 : vector<2x128xf32>
    %cst_53 = arith.constant 1.000000e+00 : f32
    %271 = vector.broadcast %cst_53 : f32 to vector<2x128xf32>
    %272 = arith.addf %271, %270 : vector<2x128xf32>
    %273 = arith.divf %271, %272 : vector<2x128xf32>
    %274 = arith.mulf %265, %222 : vector<2x128xf32>
    %275 = arith.mulf %259, %267 : vector<2x128xf32>
    %276 = arith.addf %274, %275 : vector<2x128xf32>
    %277 = math.tanh %276 : vector<2x128xf32>
    %278 = arith.mulf %273, %277 : vector<2x128xf32>
    %279 = vector.extract_strided_slice %253 {offsets = [0, 0], sizes = [2, 128], strides = [1, 1]} : vector<2x512xf32> to vector<2x128xf32>
    %280 = arith.negf %279 : vector<2x128xf32>
    %281 = math.exp %280 : vector<2x128xf32>
    %cst_54 = arith.constant 1.000000e+00 : f32
    %282 = vector.broadcast %cst_54 : f32 to vector<2x128xf32>
    %283 = arith.addf %282, %281 : vector<2x128xf32>
    %284 = arith.divf %282, %283 : vector<2x128xf32>
    %285 = vector.extract_strided_slice %253 {offsets = [0, 128], sizes = [2, 128], strides = [1, 1]} : vector<2x512xf32> to vector<2x128xf32>
    %286 = arith.negf %285 : vector<2x128xf32>
    %287 = math.exp %286 : vector<2x128xf32>
    %cst_55 = arith.constant 1.000000e+00 : f32
    %288 = vector.broadcast %cst_55 : f32 to vector<2x128xf32>
    %289 = arith.addf %288, %287 : vector<2x128xf32>
    %290 = arith.divf %288, %289 : vector<2x128xf32>
    %291 = vector.extract_strided_slice %253 {offsets = [0, 256], sizes = [2, 128], strides = [1, 1]} : vector<2x512xf32> to vector<2x128xf32>
    %292 = math.tanh %291 : vector<2x128xf32>
    %293 = vector.extract_strided_slice %253 {offsets = [0, 384], sizes = [2, 128], strides = [1, 1]} : vector<2x512xf32> to vector<2x128xf32>
    %294 = arith.negf %293 : vector<2x128xf32>
    %295 = math.exp %294 : vector<2x128xf32>
    %cst_56 = arith.constant 1.000000e+00 : f32
    %296 = vector.broadcast %cst_56 : f32 to vector<2x128xf32>
    %297 = arith.addf %296, %295 : vector<2x128xf32>
    %298 = arith.divf %296, %297 : vector<2x128xf32>
    %299 = arith.mulf %290, %247 : vector<2x128xf32>
    %300 = arith.mulf %284, %292 : vector<2x128xf32>
    %301 = arith.addf %299, %300 : vector<2x128xf32>
    %302 = math.tanh %301 : vector<2x128xf32>
    %303 = arith.mulf %298, %302 : vector<2x128xf32>
    %cst_57 = arith.constant dense<0.000000e+00> : vector<2x512xf32>
    %304 = tpu.matmul %278, %34, %cst_57 {dimension_numbers = #tpu.dot_dimension_numbers<[1], [0], [0], [1], [0, 0, 1, 1], [], []>} : vector<2x128xf32>, vector<128x512xf32>, vector<2x512xf32> -> vector<2x512xf32>
    %305 = arith.addf %23, %304 : vector<2x512xf32>
    %cst_58 = arith.constant dense<0.000000e+00> : vector<2x512xf32>
    %306 = tpu.matmul %303, %35, %cst_58 {dimension_numbers = #tpu.dot_dimension_numbers<[1], [0], [0], [1], [0, 0, 1, 1], [], []>} : vector<2x128xf32>, vector<128x512xf32>, vector<2x512xf32> -> vector<2x512xf32>
    %307 = arith.addf %28, %306 : vector<2x512xf32>
    %308 = vector.extract_strided_slice %305 {offsets = [0, 0], sizes = [2, 128], strides = [1, 1]} : vector<2x512xf32> to vector<2x128xf32>
    %309 = arith.negf %308 : vector<2x128xf32>
    %310 = math.exp %309 : vector<2x128xf32>
    %cst_59 = arith.constant 1.000000e+00 : f32
    %311 = vector.broadcast %cst_59 : f32 to vector<2x128xf32>
    %312 = arith.addf %311, %310 : vector<2x128xf32>
    %313 = arith.divf %311, %312 : vector<2x128xf32>
    %314 = vector.extract_strided_slice %305 {offsets = [0, 128], sizes = [2, 128], strides = [1, 1]} : vector<2x512xf32> to vector<2x128xf32>
    %315 = arith.negf %314 : vector<2x128xf32>
    %316 = math.exp %315 : vector<2x128xf32>
    %cst_60 = arith.constant 1.000000e+00 : f32
    %317 = vector.broadcast %cst_60 : f32 to vector<2x128xf32>
    %318 = arith.addf %317, %316 : vector<2x128xf32>
    %319 = arith.divf %317, %318 : vector<2x128xf32>
    %320 = vector.extract_strided_slice %305 {offsets = [0, 256], sizes = [2, 128], strides = [1, 1]} : vector<2x512xf32> to vector<2x128xf32>
    %321 = math.tanh %320 : vector<2x128xf32>
    %322 = vector.extract_strided_slice %305 {offsets = [0, 384], sizes = [2, 128], strides = [1, 1]} : vector<2x512xf32> to vector<2x128xf32>
    %323 = arith.negf %322 : vector<2x128xf32>
    %324 = math.exp %323 : vector<2x128xf32>
    %cst_61 = arith.constant 1.000000e+00 : f32
    %325 = vector.broadcast %cst_61 : f32 to vector<2x128xf32>
    %326 = arith.addf %325, %324 : vector<2x128xf32>
    %327 = arith.divf %325, %326 : vector<2x128xf32>
    %328 = arith.mulf %319, %276 : vector<2x128xf32>
    %329 = arith.mulf %313, %321 : vector<2x128xf32>
    %330 = arith.addf %328, %329 : vector<2x128xf32>
    %331 = math.tanh %330 : vector<2x128xf32>
    %332 = arith.mulf %327, %331 : vector<2x128xf32>
    %333 = vector.extract_strided_slice %307 {offsets = [0, 0], sizes = [2, 128], strides = [1, 1]} : vector<2x512xf32> to vector<2x128xf32>
    %334 = arith.negf %333 : vector<2x128xf32>
    %335 = math.exp %334 : vector<2x128xf32>
    %cst_62 = arith.constant 1.000000e+00 : f32
    %336 = vector.broadcast %cst_62 : f32 to vector<2x128xf32>
    %337 = arith.addf %336, %335 : vector<2x128xf32>
    %338 = arith.divf %336, %337 : vector<2x128xf32>
    %339 = vector.extract_strided_slice %307 {offsets = [0, 128], sizes = [2, 128], strides = [1, 1]} : vector<2x512xf32> to vector<2x128xf32>
    %340 = arith.negf %339 : vector<2x128xf32>
    %341 = math.exp %340 : vector<2x128xf32>
    %cst_63 = arith.constant 1.000000e+00 : f32
    %342 = vector.broadcast %cst_63 : f32 to vector<2x128xf32>
    %343 = arith.addf %342, %341 : vector<2x128xf32>
    %344 = arith.divf %342, %343 : vector<2x128xf32>
    %345 = vector.extract_strided_slice %307 {offsets = [0, 256], sizes = [2, 128], strides = [1, 1]} : vector<2x512xf32> to vector<2x128xf32>
    %346 = math.tanh %345 : vector<2x128xf32>
    %347 = vector.extract_strided_slice %307 {offsets = [0, 384], sizes = [2, 128], strides = [1, 1]} : vector<2x512xf32> to vector<2x128xf32>
    %348 = arith.negf %347 : vector<2x128xf32>
    %349 = math.exp %348 : vector<2x128xf32>
    %cst_64 = arith.constant 1.000000e+00 : f32
    %350 = vector.broadcast %cst_64 : f32 to vector<2x128xf32>
    %351 = arith.addf %350, %349 : vector<2x128xf32>
    %352 = arith.divf %350, %351 : vector<2x128xf32>
    %353 = arith.mulf %344, %301 : vector<2x128xf32>
    %354 = arith.mulf %338, %346 : vector<2x128xf32>
    %355 = arith.addf %353, %354 : vector<2x128xf32>
    %356 = math.tanh %355 : vector<2x128xf32>
    %357 = arith.mulf %352, %356 : vector<2x128xf32>
    %cst_65 = arith.constant dense<0.000000e+00> : vector<2x512xf32>
    %358 = tpu.matmul %332, %34, %cst_65 {dimension_numbers = #tpu.dot_dimension_numbers<[1], [0], [0], [1], [0, 0, 1, 1], [], []>} : vector<2x128xf32>, vector<128x512xf32>, vector<2x512xf32> -> vector<2x512xf32>
    %359 = arith.addf %24, %358 : vector<2x512xf32>
    %cst_66 = arith.constant dense<0.000000e+00> : vector<2x512xf32>
    %360 = tpu.matmul %357, %35, %cst_66 {dimension_numbers = #tpu.dot_dimension_numbers<[1], [0], [0], [1], [0, 0, 1, 1], [], []>} : vector<2x128xf32>, vector<128x512xf32>, vector<2x512xf32> -> vector<2x512xf32>
    %361 = arith.addf %27, %360 : vector<2x512xf32>
    %362 = vector.extract_strided_slice %359 {offsets = [0, 0], sizes = [2, 128], strides = [1, 1]} : vector<2x512xf32> to vector<2x128xf32>
    %363 = arith.negf %362 : vector<2x128xf32>
    %364 = math.exp %363 : vector<2x128xf32>
    %cst_67 = arith.constant 1.000000e+00 : f32
    %365 = vector.broadcast %cst_67 : f32 to vector<2x128xf32>
    %366 = arith.addf %365, %364 : vector<2x128xf32>
    %367 = arith.divf %365, %366 : vector<2x128xf32>
    %368 = vector.extract_strided_slice %359 {offsets = [0, 128], sizes = [2, 128], strides = [1, 1]} : vector<2x512xf32> to vector<2x128xf32>
    %369 = arith.negf %368 : vector<2x128xf32>
    %370 = math.exp %369 : vector<2x128xf32>
    %cst_68 = arith.constant 1.000000e+00 : f32
    %371 = vector.broadcast %cst_68 : f32 to vector<2x128xf32>
    %372 = arith.addf %371, %370 : vector<2x128xf32>
    %373 = arith.divf %371, %372 : vector<2x128xf32>
    %374 = vector.extract_strided_slice %359 {offsets = [0, 256], sizes = [2, 128], strides = [1, 1]} : vector<2x512xf32> to vector<2x128xf32>
    %375 = math.tanh %374 : vector<2x128xf32>
    %376 = vector.extract_strided_slice %359 {offsets = [0, 384], sizes = [2, 128], strides = [1, 1]} : vector<2x512xf32> to vector<2x128xf32>
    %377 = arith.negf %376 : vector<2x128xf32>
    %378 = math.exp %377 : vector<2x128xf32>
    %cst_69 = arith.constant 1.000000e+00 : f32
    %379 = vector.broadcast %cst_69 : f32 to vector<2x128xf32>
    %380 = arith.addf %379, %378 : vector<2x128xf32>
    %381 = arith.divf %379, %380 : vector<2x128xf32>
    %382 = arith.mulf %373, %330 : vector<2x128xf32>
    %383 = arith.mulf %367, %375 : vector<2x128xf32>
    %384 = arith.addf %382, %383 : vector<2x128xf32>
    %385 = math.tanh %384 : vector<2x128xf32>
    %386 = arith.mulf %381, %385 : vector<2x128xf32>
    %387 = vector.extract_strided_slice %361 {offsets = [0, 0], sizes = [2, 128], strides = [1, 1]} : vector<2x512xf32> to vector<2x128xf32>
    %388 = arith.negf %387 : vector<2x128xf32>
    %389 = math.exp %388 : vector<2x128xf32>
    %cst_70 = arith.constant 1.000000e+00 : f32
    %390 = vector.broadcast %cst_70 : f32 to vector<2x128xf32>
    %391 = arith.addf %390, %389 : vector<2x128xf32>
    %392 = arith.divf %390, %391 : vector<2x128xf32>
    %393 = vector.extract_strided_slice %361 {offsets = [0, 128], sizes = [2, 128], strides = [1, 1]} : vector<2x512xf32> to vector<2x128xf32>
    %394 = arith.negf %393 : vector<2x128xf32>
    %395 = math.exp %394 : vector<2x128xf32>
    %cst_71 = arith.constant 1.000000e+00 : f32
    %396 = vector.broadcast %cst_71 : f32 to vector<2x128xf32>
    %397 = arith.addf %396, %395 : vector<2x128xf32>
    %398 = arith.divf %396, %397 : vector<2x128xf32>
    %399 = vector.extract_strided_slice %361 {offsets = [0, 256], sizes = [2, 128], strides = [1, 1]} : vector<2x512xf32> to vector<2x128xf32>
    %400 = math.tanh %399 : vector<2x128xf32>
    %401 = vector.extract_strided_slice %361 {offsets = [0, 384], sizes = [2, 128], strides = [1, 1]} : vector<2x512xf32> to vector<2x128xf32>
    %402 = arith.negf %401 : vector<2x128xf32>
    %403 = math.exp %402 : vector<2x128xf32>
    %cst_72 = arith.constant 1.000000e+00 : f32
    %404 = vector.broadcast %cst_72 : f32 to vector<2x128xf32>
    %405 = arith.addf %404, %403 : vector<2x128xf32>
    %406 = arith.divf %404, %405 : vector<2x128xf32>
    %407 = arith.mulf %398, %355 : vector<2x128xf32>
    %408 = arith.mulf %392, %400 : vector<2x128xf32>
    %409 = arith.addf %407, %408 : vector<2x128xf32>
    %410 = math.tanh %409 : vector<2x128xf32>
    %411 = arith.mulf %406, %410 : vector<2x128xf32>
    %cst_73 = arith.constant dense<0.000000e+00> : vector<2x512xf32>
    %412 = tpu.matmul %386, %34, %cst_73 {dimension_numbers = #tpu.dot_dimension_numbers<[1], [0], [0], [1], [0, 0, 1, 1], [], []>} : vector<2x128xf32>, vector<128x512xf32>, vector<2x512xf32> -> vector<2x512xf32>
    %413 = arith.addf %25, %412 : vector<2x512xf32>
    %cst_74 = arith.constant dense<0.000000e+00> : vector<2x512xf32>
    %414 = tpu.matmul %411, %35, %cst_74 {dimension_numbers = #tpu.dot_dimension_numbers<[1], [0], [0], [1], [0, 0, 1, 1], [], []>} : vector<2x128xf32>, vector<128x512xf32>, vector<2x512xf32> -> vector<2x512xf32>
    %415 = arith.addf %26, %414 : vector<2x512xf32>
    %416 = vector.extract_strided_slice %413 {offsets = [0, 0], sizes = [2, 128], strides = [1, 1]} : vector<2x512xf32> to vector<2x128xf32>
    %417 = arith.negf %416 : vector<2x128xf32>
    %418 = math.exp %417 : vector<2x128xf32>
    %cst_75 = arith.constant 1.000000e+00 : f32
    %419 = vector.broadcast %cst_75 : f32 to vector<2x128xf32>
    %420 = arith.addf %419, %418 : vector<2x128xf32>
    %421 = arith.divf %419, %420 : vector<2x128xf32>
    %422 = vector.extract_strided_slice %413 {offsets = [0, 128], sizes = [2, 128], strides = [1, 1]} : vector<2x512xf32> to vector<2x128xf32>
    %423 = arith.negf %422 : vector<2x128xf32>
    %424 = math.exp %423 : vector<2x128xf32>
    %cst_76 = arith.constant 1.000000e+00 : f32
    %425 = vector.broadcast %cst_76 : f32 to vector<2x128xf32>
    %426 = arith.addf %425, %424 : vector<2x128xf32>
    %427 = arith.divf %425, %426 : vector<2x128xf32>
    %428 = vector.extract_strided_slice %413 {offsets = [0, 256], sizes = [2, 128], strides = [1, 1]} : vector<2x512xf32> to vector<2x128xf32>
    %429 = math.tanh %428 : vector<2x128xf32>
    %430 = vector.extract_strided_slice %413 {offsets = [0, 384], sizes = [2, 128], strides = [1, 1]} : vector<2x512xf32> to vector<2x128xf32>
    %431 = arith.negf %430 : vector<2x128xf32>
    %432 = math.exp %431 : vector<2x128xf32>
    %cst_77 = arith.constant 1.000000e+00 : f32
    %433 = vector.broadcast %cst_77 : f32 to vector<2x128xf32>
    %434 = arith.addf %433, %432 : vector<2x128xf32>
    %435 = arith.divf %433, %434 : vector<2x128xf32>
    %436 = arith.mulf %427, %384 : vector<2x128xf32>
    %437 = arith.mulf %421, %429 : vector<2x128xf32>
    %438 = arith.addf %436, %437 : vector<2x128xf32>
    %439 = math.tanh %438 : vector<2x128xf32>
    %440 = arith.mulf %435, %439 : vector<2x128xf32>
    %441 = vector.extract_strided_slice %415 {offsets = [0, 0], sizes = [2, 128], strides = [1, 1]} : vector<2x512xf32> to vector<2x128xf32>
    %442 = arith.negf %441 : vector<2x128xf32>
    %443 = math.exp %442 : vector<2x128xf32>
    %cst_78 = arith.constant 1.000000e+00 : f32
    %444 = vector.broadcast %cst_78 : f32 to vector<2x128xf32>
    %445 = arith.addf %444, %443 : vector<2x128xf32>
    %446 = arith.divf %444, %445 : vector<2x128xf32>
    %447 = vector.extract_strided_slice %415 {offsets = [0, 128], sizes = [2, 128], strides = [1, 1]} : vector<2x512xf32> to vector<2x128xf32>
    %448 = arith.negf %447 : vector<2x128xf32>
    %449 = math.exp %448 : vector<2x128xf32>
    %cst_79 = arith.constant 1.000000e+00 : f32
    %450 = vector.broadcast %cst_79 : f32 to vector<2x128xf32>
    %451 = arith.addf %450, %449 : vector<2x128xf32>
    %452 = arith.divf %450, %451 : vector<2x128xf32>
    %453 = vector.extract_strided_slice %415 {offsets = [0, 256], sizes = [2, 128], strides = [1, 1]} : vector<2x512xf32> to vector<2x128xf32>
    %454 = math.tanh %453 : vector<2x128xf32>
    %455 = vector.extract_strided_slice %415 {offsets = [0, 384], sizes = [2, 128], strides = [1, 1]} : vector<2x512xf32> to vector<2x128xf32>
    %456 = arith.negf %455 : vector<2x128xf32>
    %457 = math.exp %456 : vector<2x128xf32>
    %cst_80 = arith.constant 1.000000e+00 : f32
    %458 = vector.broadcast %cst_80 : f32 to vector<2x128xf32>
    %459 = arith.addf %458, %457 : vector<2x128xf32>
    %460 = arith.divf %458, %459 : vector<2x128xf32>
    %461 = arith.mulf %452, %409 : vector<2x128xf32>
    %462 = arith.mulf %446, %454 : vector<2x128xf32>
    %463 = arith.addf %461, %462 : vector<2x128xf32>
    %464 = math.tanh %463 : vector<2x128xf32>
    %465 = arith.mulf %460, %464 : vector<2x128xf32>
    %466 = tpu.concatenate %62, %116, %170, %224, %278, %332, %386, %440 in 0 : vector<2x128xf32>, vector<2x128xf32>, vector<2x128xf32>, vector<2x128xf32>, vector<2x128xf32>, vector<2x128xf32>, vector<2x128xf32>, vector<2x128xf32> -> vector<16x128xf32>
    %467 = tpu.concatenate %465, %411, %357, %303, %249, %195, %141, %87 in 0 : vector<2x128xf32>, vector<2x128xf32>, vector<2x128xf32>, vector<2x128xf32>, vector<2x128xf32>, vector<2x128xf32>, vector<2x128xf32>, vector<2x128xf32> -> vector<16x128xf32>
    %c0_81 = arith.constant 0 : index
    %c0_82 = arith.constant 0 : index
    %468 = vector.load %arg9[%c0_81, %c0_82] : memref<128x128xf32, #tpu.memory_space<vmem>>, vector<128x128xf32>
    %cst_83 = arith.constant dense<0.000000e+00> : vector<16x128xf32>
    %469 = tpu.matmul %466, %468, %cst_83 {dimension_numbers = #tpu.dot_dimension_numbers<[1], [0], [0], [1], [0, 0, 1, 1], [], []>} : vector<16x128xf32>, vector<128x128xf32>, vector<16x128xf32> -> vector<16x128xf32>
    %c0_84 = arith.constant 0 : index
    %c0_85 = arith.constant 0 : index
    %470 = vector.load %arg10[%c0_84, %c0_85] : memref<128x128xf32, #tpu.memory_space<vmem>>, vector<128x128xf32>
    %cst_86 = arith.constant dense<0.000000e+00> : vector<16x128xf32>
    %471 = tpu.matmul %467, %470, %cst_86 {dimension_numbers = #tpu.dot_dimension_numbers<[1], [0], [0], [1], [0, 0, 1, 1], [], []>} : vector<16x128xf32>, vector<128x128xf32>, vector<16x128xf32> -> vector<16x128xf32>
    %472 = arith.addf %469, %471 : vector<16x128xf32>
    %c0_87 = arith.constant 0 : index
    %c0_88 = arith.constant 0 : index
    %473 = vector.load %arg11[%c0_87, %c0_88] : memref<1x128xf32, #tpu.memory_space<vmem>>, vector<1x128xf32>
    %474 = vector.broadcast %473 : vector<1x128xf32> to vector<16x128xf32>
    %475 = arith.addf %472, %474 : vector<16x128xf32>
    %476 = tpu.iota {dimensions = array<i32: 1>} : vector<16x128xi32>
    %cst_89 = arith.constant dense<0xFF800000> : vector<16xf32>
    %477 = vector.multi_reduction <maximumf>, %475, %cst_89 [1] : vector<16x128xf32> to vector<16xf32>
    %478 = vector.shape_cast %477 : vector<16xf32> to vector<16x1xf32>
    %479 = vector.broadcast %478 : vector<16x1xf32> to vector<16x128xf32>
    %480 = arith.cmpf oeq, %475, %479 : vector<16x128xf32>
    %c128_i32 = arith.constant 128 : i32
    %481 = vector.broadcast %c128_i32 : i32 to vector<16x128xi32>
    %482 = arith.select %480, %476, %481 : vector<16x128xi1>, vector<16x128xi32>
    %cst_90 = arith.constant dense<2147483647> : vector<16xi32>
    %483 = vector.multi_reduction <minsi>, %482, %cst_90 [1] : vector<16x128xi32> to vector<16xi32>
    %484 = vector.shape_cast %483 : vector<16xi32> to vector<16x1xi32>
    %c0_91 = arith.constant 0 : index
    %c0_92 = arith.constant 0 : index
    %485 = vector.load %arg1[%c0_91, %c0_92] : memref<16x1xi32, #tpu.memory_space<vmem>>, vector<16x1xi32>
    %486 = arith.muli %485, %484 : vector<16x1xi32>
    %c0_93 = arith.constant 0 : index
    %c0_94 = arith.constant 0 : index
    %487 = vector.load %arg12[%c0_93, %c0_94] : memref<16x1xi32, #tpu.memory_space<vmem>>, vector<16x1xi32>
    tpu.vector_store %arg12[%c0_93, %c0_94], %486 {strides = array<i32>} : memref<16x1xi32, #tpu.memory_space<vmem>>, vector<16x1xi32>,
    return
  }
}

</mosaic_0001>

<llo_original>
// kernel: bilstm_forward.1
$region0: #{bilstm_forward.1}
  #allocation0 [shape = 'u32[]', space=smem, size = 0x4, offset = 0x4, fixed_abs, tag = 'smem constant byte address 0x4 - core index']
  #allocation1 [shape = 'u32[72,128]{1,0:T(1,128)}', space=vmem, size = 0x9000, scoped, tag = 'internal scratch']
  %s0 = inlined_call_operand.vmem [shape: s32[16,1], index: 0, kind: input, shape index: {}]
  %s1 = inlined_call_operand.vmem [shape: s32[16,1], index: 1, kind: input, shape index: {}]
  %s2 = inlined_call_operand.vmem [shape: f32[30,50], index: 2, kind: input, shape index: {}]
  %s3 = inlined_call_operand.hbm [shape: f32[50,512], index: 3, kind: input, shape index: {}]
  %s4 = inlined_call_operand.hbm [shape: f32[50,512], index: 4, kind: input, shape index: {}]
  %s5 = inlined_call_operand.vmem [shape: f32[1,512], index: 5, kind: input, shape index: {}]
  %s6 = inlined_call_operand.vmem [shape: f32[1,512], index: 6, kind: input, shape index: {}]
  %s7 = inlined_call_operand.hbm [shape: f32[128,512], index: 7, kind: input, shape index: {}]
  %s8 = inlined_call_operand.hbm [shape: f32[128,512], index: 8, kind: input, shape index: {}]
  %s9 = inlined_call_operand.hbm [shape: f32[128,128], index: 9, kind: input, shape index: {}]
  %s10 = inlined_call_operand.hbm [shape: f32[128,128], index: 10, kind: input, shape index: {}]
  %s11 = inlined_call_operand.vmem [shape: f32[1,128], index: 11, kind: input, shape index: {}]
  %s12 = inlined_call_operand.vmem [shape: s32[16,1], index: 12, kind: output, shape index: {}]
  %s13 = sld [smem:[#allocation0]]
  $region82: #{bilstm_forward.1} parent=0
    _
  %s15 = ssub.s32 1, %s13
  %s16 = scalar_select 0, %s15, %s13
  $region1: #{bilstm_forward.1} parent=0
    #allocation2 [shape = 'u8[114688]{0}', space=vmem, size = 0x1c000, scoped, tag = 'input window, operand 3, single buffered']
    #allocation3 [shape = 's32[1]{0}', space=sflag, size = 0x4, scoped, tag = 'scoped memory for bilstm_forward.1']
    #allocation4 [shape = 'u8[114688]{0}', space=vmem, size = 0x1c000, scoped, tag = 'input window, operand 4, single buffered']
    #allocation5 [shape = 's32[1]{0}', space=sflag, size = 0x4, scoped, tag = 'scoped memory for bilstm_forward.1']
    #allocation6 [shape = 'u8[262144]{0}', space=vmem, size = 0x40000, scoped, tag = 'input window, operand 7, single buffered']
    #allocation7 [shape = 'u8[262144]{0}', space=vmem, size = 0x40000, scoped, tag = 'input window, operand 8, single buffered']
    #allocation8 [shape = 's32[1]{0}', space=sflag, size = 0x4, scoped, tag = 'scoped memory for bilstm_forward.1']
    #allocation9 [shape = 'u8[65536]{0}', space=vmem, size = 0x10000, scoped, tag = 'input window, operand 9, single buffered']
    #allocation10 [shape = 'u8[65536]{0}', space=vmem, size = 0x10000, scoped, tag = 'input window, operand 10, single buffered']
    #allocation11 [shape = 's32[1]{0}', space=sflag, size = 0x4, scoped, tag = 'scoped memory for bilstm_forward.1']
    %17 = vsyncpa [#allocation3], 0
    %18 = vsyncpa [#allocation5], 0
    %19 = vsyncpa [#allocation8], 0
    %20 = vsyncpa [#allocation11], 0
    // Predicated region
    $region2: #{bilstm_forward.1} parent=1 // pred_check
      _
    $region3: #{bilstm_forward.1} parent=1 // pred_check_branch
      %22 = sbr.rel (0) target = $region5
    $region4: #{bilstm_forward.1} parent=1 // pred_region
      _
    $region5: #{bilstm_forward.1} parent=1 // pred_fallthru
      _
    // Predicated region
    $region6: #{bilstm_forward.1} parent=1 // pred_check
      _
    $region7: #{bilstm_forward.1} parent=1 // pred_check_branch
      %24 = sbr.rel (0) target = $region9
    $region8: #{bilstm_forward.1} parent=1 // pred_region
      _
    $region9: #{bilstm_forward.1} parent=1 // pred_fallthru
      _
    // Predicated region
    $region10: #{bilstm_forward.1} parent=1 // pred_check
      _
    $region11: #{bilstm_forward.1} parent=1 // pred_check_branch
      %26 = sbr.rel (0) target = $region13
    $region12: #{bilstm_forward.1} parent=1 // pred_region
      _
    $region13: #{bilstm_forward.1} parent=1 // pred_fallthru
      _
    // Predicated region
    $region14: #{bilstm_forward.1} parent=1 // pred_check
      _
    $region15: #{bilstm_forward.1} parent=1 // pred_check_branch
      %28 = sbr.rel (0) target = $region17
    $region16: #{bilstm_forward.1} parent=1 // pred_region
      %30 = vsyncadd [#allocation3], 0
      %s31 = sshll.u32 %s3, 4
      %s32 = int_to_ptr.hbm [resolvable:$true] %s31
      %s33 = sshll.u32 [#allocation2], 4
      %s34 = int_to_ptr.vmem [resolvable:$true] %s33
      %39 = dma.hbm_to_vmem [thread:$0]  %s32, 3584, %s34, [#allocation3], 512, 512, 32
    $region17: #{bilstm_forward.1} parent=1 // pred_fallthru
      _
    // Predicated region
    $region18: #{bilstm_forward.1} parent=1 // pred_check
      _
    $region19: #{bilstm_forward.1} parent=1 // pred_check_branch
      %41 = sbr.rel (0) target = $region21
    $region20: #{bilstm_forward.1} parent=1 // pred_region
      %43 = vsyncadd [#allocation5], 0
      %s44 = sshll.u32 %s4, 4
      %s45 = int_to_ptr.hbm [resolvable:$true] %s44
      %s46 = sshll.u32 [#allocation4], 4
      %s47 = int_to_ptr.vmem [resolvable:$true] %s46
      %52 = dma.hbm_to_vmem [thread:$0]  %s45, 3584, %s47, [#allocation5], 512, 512, 32
    $region21: #{bilstm_forward.1} parent=1 // pred_fallthru
      _
    // Predicated region
    $region22: #{bilstm_forward.1} parent=1 // pred_check
      _
    $region23: #{bilstm_forward.1} parent=1 // pred_check_branch
      %54 = sbr.rel (0) target = $region25
    $region24: #{bilstm_forward.1} parent=1 // pred_region
      _
    $region25: #{bilstm_forward.1} parent=1 // pred_fallthru
      _
    // Predicated region
    $region26: #{bilstm_forward.1} parent=1 // pred_check
      _
    $region27: #{bilstm_forward.1} parent=1 // pred_check_branch
      %56 = sbr.rel (0) target = $region29
    $region28: #{bilstm_forward.1} parent=1 // pred_region
      _
    $region29: #{bilstm_forward.1} parent=1 // pred_fallthru
      _
    // Predicated region
    $region30: #{bilstm_forward.1} parent=1 // pred_check
      _
    $region31: #{bilstm_forward.1} parent=1 // pred_check_branch
      %58 = sbr.rel (0) target = $region33
    $region32: #{bilstm_forward.1} parent=1 // pred_region
      %60 = vsyncadd [#allocation5], 0
      %s61 = sshll.u32 %s7, 4
      %s62 = int_to_ptr.hbm [resolvable:$true] %s61
      %s63 = sshll.u32 [#allocation6], 4
      %s64 = int_to_ptr.vmem [resolvable:$true] %s63
      %69 = dma.hbm_to_vmem [thread:$0]  %s62, 8192, %s64, [#allocation5], 512, 512, 32
    $region33: #{bilstm_forward.1} parent=1 // pred_fallthru
      _
    // Predicated region
    $region34: #{bilstm_forward.1} parent=1 // pred_check
      _
    $region35: #{bilstm_forward.1} parent=1 // pred_check_branch
      %71 = sbr.rel (0) target = $region37
    $region36: #{bilstm_forward.1} parent=1 // pred_region
      %73 = vsyncadd [#allocation8], 0
      %s74 = sshll.u32 %s8, 4
      %s75 = int_to_ptr.hbm [resolvable:$true] %s74
      %s76 = sshll.u32 [#allocation7], 4
      %s77 = int_to_ptr.vmem [resolvable:$true] %s76
      %82 = dma.hbm_to_vmem [thread:$0]  %s75, 8192, %s77, [#allocation8], 512, 512, 32
    $region37: #{bilstm_forward.1} parent=1 // pred_fallthru
      _
    // Predicated region
    $region38: #{bilstm_forward.1} parent=1 // pred_check
      _
    $region39: #{bilstm_forward.1} parent=1 // pred_check_branch
      %84 = sbr.rel (0) target = $region41
    $region40: #{bilstm_forward.1} parent=1 // pred_region
      %86 = vsyncadd [#allocation8], 0
      %s87 = sshll.u32 %s9, 4
      %s88 = int_to_ptr.hbm [resolvable:$true] %s87
      %s89 = sshll.u32 [#allocation9], 4
      %s90 = int_to_ptr.vmem [resolvable:$true] %s89
      %95 = dma.hbm_to_vmem [thread:$0]  %s88, 2048, %s90, [#allocation8], 128, 128, 8
    $region41: #{bilstm_forward.1} parent=1 // pred_fallthru
      _
    // Predicated region
    $region42: #{bilstm_forward.1} parent=1 // pred_check
      _
    $region43: #{bilstm_forward.1} parent=1 // pred_check_branch
      %97 = sbr.rel (0) target = $region45
    $region44: #{bilstm_forward.1} parent=1 // pred_region
      %99 = vsyncadd [#allocation11], 0
      %s100 = sshll.u32 %s10, 4
      %s101 = int_to_ptr.hbm [resolvable:$true] %s100
      %s102 = sshll.u32 [#allocation10], 4
      %s103 = int_to_ptr.vmem [resolvable:$true] %s102
      %108 = dma.hbm_to_vmem [thread:$0]  %s101, 2048, %s103, [#allocation11], 128, 128, 8
    $region45: #{bilstm_forward.1} parent=1 // pred_fallthru
      _
    // Predicated region
    $region46: #{bilstm_forward.1} parent=1 // pred_check
      _
    $region47: #{bilstm_forward.1} parent=1 // pred_check_branch
      %110 = sbr.rel (0) target = $region49
    $region48: #{bilstm_forward.1} parent=1 // pred_region
      _
    $region49: #{bilstm_forward.1} parent=1 // pred_fallthru
      _
    // Predicated region
    $region50: #{bilstm_forward.1} parent=1 // pred_check
      _
    $region51: #{bilstm_forward.1} parent=1 // pred_check_branch
      %112 = sbr.rel (0) target = $region53
    $region52: #{bilstm_forward.1} parent=1 // pred_region
      %114 = dma.done [#allocation3], 3584
    $region53: #{bilstm_forward.1} parent=1 // pred_fallthru
      _
    // Predicated region
    $region54: #{bilstm_forward.1} parent=1 // pred_check
      _
    $region55: #{bilstm_forward.1} parent=1 // pred_check_branch
      %116 = sbr.rel (0) target = $region57
    $region56: #{bilstm_forward.1} parent=1 // pred_region
      %118 = dma.done [#allocation5], 3584
    $region57: #{bilstm_forward.1} parent=1 // pred_fallthru
      _
    // Predicated region
    $region58: #{bilstm_forward.1} parent=1 // pred_check
      _
    $region59: #{bilstm_forward.1} parent=1 // pred_check_branch
      %120 = sbr.rel (0) target = $region61
    $region60: #{bilstm_forward.1} parent=1 // pred_region
      %122 = dma.done [#allocation5], 8192
    $region61: #{bilstm_forward.1} parent=1 // pred_fallthru
      _
    // Predicated region
    $region62: #{bilstm_forward.1} parent=1 // pred_check
      _
    $region63: #{bilstm_forward.1} parent=1 // pred_check_branch
      %124 = sbr.rel (0) target = $region65
    $region64: #{bilstm_forward.1} parent=1 // pred_region
      %126 = dma.done [#allocation8], 8192
    $region65: #{bilstm_forward.1} parent=1 // pred_fallthru
      _
    // Predicated region
    $region66: #{bilstm_forward.1} parent=1 // pred_check
      _
    $region67: #{bilstm_forward.1} parent=1 // pred_check_branch
      %128 = sbr.rel (0) target = $region69
    $region68: #{bilstm_forward.1} parent=1 // pred_region
      %130 = dma.done [#allocation8], 2048
    $region69: #{bilstm_forward.1} parent=1 // pred_fallthru
      _
    // Predicated region
    $region70: #{bilstm_forward.1} parent=1 // pred_check
      _
    $region71: #{bilstm_forward.1} parent=1 // pred_check_branch
      %132 = sbr.rel (0) target = $region73
    $region72: #{bilstm_forward.1} parent=1 // pred_region
      %134 = dma.done [#allocation11], 2048
    $region73: #{bilstm_forward.1} parent=1 // pred_fallthru
      _
    %v135 = vld [vmem:[%s0] sm:$0xff]
    %v136 = vld [vmem:[%s0 + $0x8] sm:$0xff]
    %v137 = vlaneseq
    %v138 = vand.u32 %v137, 127
    %139 = vset.pattern.permute.xlu0 0
    %140 = vperm.xlu0 %139, %v135
    %v141 = vpop.permute.xlu0 %140
    %142 = vset.pattern.permute.xlu0 0
    %143 = vperm.xlu0 %142, %v136
    %v144 = vpop.permute.xlu0 %143
    %vm145 = vcmp.eq.s32.totalorder %v141, %v138
    %vm146 = vcmp.eq.s32.totalorder %v144, %v138
    %v147 = vsel %vm145, 1, 0
    %v148 = vsel %vm146, 1, 0
    %v149 = vcvt.s32.f32 %v147
    %v150 = vcvt.s32.f32 %v148
    %v151 = vld [vmem:[%s2] sm:$0xff]
    %v152 = vld [vmem:[%s2 + $0x8] sm:$0xff]
    %v153 = vld [vmem:[%s2 + $0x10] sm:$0xff]
    %v154 = vld [vmem:[%s2 + $0x18] sm:$0x3f]
    %vm155 = vcmask 244736
    %v157 = vsel %vm155, %v149, 0
    %v160 = vsel %vm155, %v150, 0
    %vm162 = vcmask 1045504
    %v164 = vsel %vm162, %v154, 0
    %166 = vmatpush.msra.mxu0 0.0
    %167 = vmatpush.msra.mxu0 0.0
    %168 = vmatpush.msra.mxu0 0.0
    %169 = vmatpush.msra.mxu0 0.0
    %170 = vmatpush.msra.mxu0 0.0
    %171 = vmatpush.msra.mxu0 0.0
    %172 = vmatpush.msra.mxu0 0.0
    %173 = vmatpush.msra.mxu0 0.0
    %174 = vmatpush.msra.mxu0 0.0
    %175 = vmatpush.msra.mxu0 0.0
    %176 = vmatpush.msra.mxu0 0.0
    %177 = vmatpush.msra.mxu0 0.0
    %178 = vmatpush.msra.mxu0 %v164
    %179 = vmatpush.msra.mxu0 %v153
    %180 = vmatpush.msra.mxu0 %v152
    %181 = vmatpush.msra.mxu0 %v151
    %182 = vmatmul.f32.gmra.mxu0 %v157
    %v183 = vpop.f32.mrf.mxu0
    %v184 = vadd.f32 0.0, %v183
    %185 = vmatmul.f32.gmra.mxu0 %v160
    %v186 = vpop.f32.mrf.mxu0
    %v187 = vadd.f32 0.0, %v186
    %188 = vdwg.mxu0
    %v189 = vld [vmem:[#allocation2] sm:$0xff]
    %v190 = vld [vmem:[#allocation2 + $0x8] sm:$0xff]
    %v191 = vld [vmem:[#allocation2 + $0x10] sm:$0xff]
    %v192 = vld [vmem:[#allocation2 + $0x18] sm:$0xff]
    %v193 = vld [vmem:[#allocation2 + $0x20] sm:$0xff]
    %v194 = vld [vmem:[#allocation2 + $0x28] sm:$0xff]
    %v195 = vld [vmem:[#allocation2 + $0x30] sm:$0xff]
    %v196 = vld [vmem:[#allocation2 + $0x38] sm:$0xff]
    %v197 = vld [vmem:[#allocation2 + $0x40] sm:$0xff]
    %v198 = vld [vmem:[#allocation2 + $0x48] sm:$0xff]
    %v199 = vld [vmem:[#allocation2 + $0x50] sm:$0xff]
    %v200 = vld [vmem:[#allocation2 + $0x58] sm:$0xff]
    %v201 = vld [vmem:[#allocation2 + $0x60] sm:$0xff]
    %v202 = vld [vmem:[#allocation2 + $0x68] sm:$0xff]
    %v203 = vld [vmem:[#allocation2 + $0x70] sm:$0xff]
    %v204 = vld [vmem:[#allocation2 + $0x78] sm:$0xff]
    %v205 = vld [vmem:[#allocation2 + $0x80] sm:$0xff]
    %v206 = vld [vmem:[#allocation2 + $0x88] sm:$0xff]
    %v207 = vld [vmem:[#allocation2 + $0x90] sm:$0xff]
    %v208 = vld [vmem:[#allocation2 + $0x98] sm:$0xff]
    %v209 = vld [vmem:[#allocation2 + $0xa0] sm:$0xff]
    %v210 = vld [vmem:[#allocation2 + $0xa8] sm:$0xff]
    %v211 = vld [vmem:[#allocation2 + $0xb0] sm:$0xff]
    %v212 = vld [vmem:[#allocation2 + $0xb8] sm:$0xff]
    %v213 = vld [vmem:[#allocation2 + $0xc0] sm:$0x3]
    %v214 = vld [vmem:[#allocation2 + $0xc8] sm:$0x3]
    %v215 = vld [vmem:[#allocation2 + $0xd0] sm:$0x3]
    %v216 = vld [vmem:[#allocation2 + $0xd8] sm:$0x3]
    %v217 = vld [vmem:[%s5] sm:$0xf]
    %v219 = vperm.slane %v217, 0
    %v220 = vperm.slane %v217, 1
    %v221 = vperm.slane %v217, 2
    %v222 = vperm.slane %v217, 3
    %vm227 = vcmask 408576
    %v229 = vsel %vm227, %v184, 0
    %v232 = vsel %vm227, %v187, 0
    %vm234 = vcmask 1041408
    %v236 = vsel %vm234, %v213, 0
    %v239 = vsel %vm234, %v214, 0
    %v242 = vsel %vm234, %v215, 0
    %v245 = vsel %vm234, %v216, 0
    %247 = vmatpush.msra.mxu0 0.0
    %248 = vmatpush.msra.mxu0 0.0
    %249 = vmatpush.msra.mxu0 0.0
    %250 = vmatpush.msra.mxu0 0.0
    %251 = vmatpush.msra.mxu0 0.0
    %252 = vmatpush.msra.mxu0 0.0
    %253 = vmatpush.msra.mxu0 0.0
    %254 = vmatpush.msra.mxu0 0.0
    %255 = vmatpush.msra.mxu0 0.0
    %256 = vmatpush.msra.mxu0 %v236
    %257 = vmatpush.msra.mxu0 %v209
    %258 = vmatpush.msra.mxu0 %v205
    %259 = vmatpush.msra.mxu0 %v201
    %260 = vmatpush.msra.mxu0 %v197
    %261 = vmatpush.msra.mxu0 %v193
    %262 = vmatpush.msra.mxu0 %v189
    %263 = vmatmul.f32.gmra.mxu0 %v229
    %v264 = vpop.f32.mrf.mxu0
    %v265 = vadd.f32 %v219, %v264
    %266 = vmatmul.f32.gmra.mxu0 %v232
    %v267 = vpop.f32.mrf.mxu0
    %v268 = vadd.f32 %v219, %v267
    %269 = vdwg.mxu0
    %270 = vmatpush.msra.mxu0 0.0
    %271 = vmatpush.msra.mxu0 0.0
    %272 = vmatpush.msra.mxu0 0.0
    %273 = vmatpush.msra.mxu0 0.0
    %274 = vmatpush.msra.mxu0 0.0
    %275 = vmatpush.msra.mxu0 0.0
    %276 = vmatpush.msra.mxu0 0.0
    %277 = vmatpush.msra.mxu0 0.0
    %278 = vmatpush.msra.mxu0 0.0
    %279 = vmatpush.msra.mxu0 %v239
    %280 = vmatpush.msra.mxu0 %v210
    %281 = vmatpush.msra.mxu0 %v206
    %282 = vmatpush.msra.mxu0 %v202
    %283 = vmatpush.msra.mxu0 %v198
    %284 = vmatpush.msra.mxu0 %v194
    %285 = vmatpush.msra.mxu0 %v190
    %286 = vmatmul.f32.gmra.mxu0 %v229
    %v287 = vpop.f32.mrf.mxu0
    %v288 = vadd.f32 %v220, %v287
    %289 = vmatmul.f32.gmra.mxu0 %v232
    %v290 = vpop.f32.mrf.mxu0
    %v291 = vadd.f32 %v220, %v290
    %292 = vdwg.mxu0
    %293 = vmatpush.msra.mxu0 0.0
    %294 = vmatpush.msra.mxu0 0.0
    %295 = vmatpush.msra.mxu0 0.0
    %296 = vmatpush.msra.mxu0 0.0
    %297 = vmatpush.msra.mxu0 0.0
    %298 = vmatpush.msra.mxu0 0.0
    %299 = vmatpush.msra.mxu0 0.0
    %300 = vmatpush.msra.mxu0 0.0
    %301 = vmatpush.msra.mxu0 0.0
    %302 = vmatpush.msra.mxu0 %v242
    %303 = vmatpush.msra.mxu0 %v211
    %304 = vmatpush.msra.mxu0 %v207
    %305 = vmatpush.msra.mxu0 %v203
    %306 = vmatpush.msra.mxu0 %v199
    %307 = vmatpush.msra.mxu0 %v195
    %308 = vmatpush.msra.mxu0 %v191
    %309 = vmatmul.f32.gmra.mxu0 %v229
    %v310 = vpop.f32.mrf.mxu0
    %v311 = vadd.f32 %v221, %v310
    %312 = vmatmul.f32.gmra.mxu0 %v232
    %v313 = vpop.f32.mrf.mxu0
    %v314 = vadd.f32 %v221, %v313
    %315 = vdwg.mxu0
    %316 = vmatpush.msra.mxu0 0.0
    %317 = vmatpush.msra.mxu0 0.0
    %318 = vmatpush.msra.mxu0 0.0
    %319 = vmatpush.msra.mxu0 0.0
    %320 = vmatpush.msra.mxu0 0.0
    %321 = vmatpush.msra.mxu0 0.0
    %322 = vmatpush.msra.mxu0 0.0
    %323 = vmatpush.msra.mxu0 0.0
    %324 = vmatpush.msra.mxu0 0.0
    %325 = vmatpush.msra.mxu0 %v245
    %326 = vmatpush.msra.mxu0 %v212
    %327 = vmatpush.msra.mxu0 %v208
    %328 = vmatpush.msra.mxu0 %v204
    %329 = vmatpush.msra.mxu0 %v200
    %330 = vmatpush.msra.mxu0 %v196
    %331 = vmatpush.msra.mxu0 %v192
    %332 = vmatmul.f32.gmra.mxu0 %v229
    %v333 = vpop.f32.mrf.mxu0
    %v334 = vadd.f32 %v222, %v333
    %335 = vmatmul.f32.gmra.mxu0 %v232
    %v336 = vpop.f32.mrf.mxu0
    %v337 = vadd.f32 %v222, %v336
    %338 = vdwg.mxu0
    %v339 = vld [vmem:[#allocation4] sm:$0xff]
    %v340 = vld [vmem:[#allocation4 + $0x8] sm:$0xff]
    %v341 = vld [vmem:[#allocation4 + $0x10] sm:$0xff]
    %v342 = vld [vmem:[#allocation4 + $0x18] sm:$0xff]
    %v343 = vld [vmem:[#allocation4 + $0x20] sm:$0xff]
    %v344 = vld [vmem:[#allocation4 + $0x28] sm:$0xff]
    %v345 = vld [vmem:[#allocation4 + $0x30] sm:$0xff]
    %v346 = vld [vmem:[#allocation4 + $0x38] sm:$0xff]
    %v347 = vld [vmem:[#allocation4 + $0x40] sm:$0xff]
    %v348 = vld [vmem:[#allocation4 + $0x48] sm:$0xff]
    %v349 = vld [vmem:[#allocation4 + $0x50] sm:$0xff]
    %v350 = vld [vmem:[#allocation4 + $0x58] sm:$0xff]
    %v351 = vld [vmem:[#allocation4 + $0x60] sm:$0xff]
    %v352 = vld [vmem:[#allocation4 + $0x68] sm:$0xff]
    %v353 = vld [vmem:[#allocation4 + $0x70] sm:$0xff]
    %v354 = vld [vmem:[#allocation4 + $0x78] sm:$0xff]
    %v355 = vld [vmem:[#allocation4 + $0x80] sm:$0xff]
    %v356 = vld [vmem:[#allocation4 + $0x88] sm:$0xff]
    %v357 = vld [vmem:[#allocation4 + $0x90] sm:$0xff]
    %v358 = vld [vmem:[#allocation4 + $0x98] sm:$0xff]
    %v359 = vld [vmem:[#allocation4 + $0xa0] sm:$0xff]
    %v360 = vld [vmem:[#allocation4 + $0xa8] sm:$0xff]
    %v361 = vld [vmem:[#allocation4 + $0xb0] sm:$0xff]
    %v362 = vld [vmem:[#allocation4 + $0xb8] sm:$0xff]
    %v363 = vld [vmem:[#allocation4 + $0xc0] sm:$0x3]
    %v364 = vld [vmem:[#allocation4 + $0xc8] sm:$0x3]
    %v365 = vld [vmem:[#allocation4 + $0xd0] sm:$0x3]
    %v366 = vld [vmem:[#allocation4 + $0xd8] sm:$0x3]
    %v367 = vld [vmem:[%s6] sm:$0xf]
    %v369 = vperm.slane %v367, 0
    %v370 = vperm.slane %v367, 1
    %v371 = vperm.slane %v367, 2
    %v372 = vperm.slane %v367, 3
    %v378 = vsel %vm234, %v363, 0
    %v381 = vsel %vm234, %v364, 0
    %v384 = vsel %vm234, %v365, 0
    %v387 = vsel %vm234, %v366, 0
    %389 = vmatpush.msra.mxu0 0.0
    %390 = vmatpush.msra.mxu0 0.0
    %391 = vmatpush.msra.mxu0 0.0
    %392 = vmatpush.msra.mxu0 0.0
    %393 = vmatpush.msra.mxu0 0.0
    %394 = vmatpush.msra.mxu0 0.0
    %395 = vmatpush.msra.mxu0 0.0
    %396 = vmatpush.msra.mxu0 0.0
    %397 = vmatpush.msra.mxu0 0.0
    %398 = vmatpush.msra.mxu0 %v378
    %399 = vmatpush.msra.mxu0 %v359
    %400 = vmatpush.msra.mxu0 %v355
    %401 = vmatpush.msra.mxu0 %v351
    %402 = vmatpush.msra.mxu0 %v347
    %403 = vmatpush.msra.mxu0 %v343
    %404 = vmatpush.msra.mxu0 %v339
    %405 = vmatmul.f32.gmra.mxu0 %v229
    %v406 = vpop.f32.mrf.mxu0
    %v407 = vadd.f32 %v369, %v406
    %408 = vmatmul.f32.gmra.mxu0 %v232
    %v409 = vpop.f32.mrf.mxu0
    %v410 = vadd.f32 %v369, %v409
    %411 = vdwg.mxu0
    %412 = vmatpush.msra.mxu0 0.0
    %413 = vmatpush.msra.mxu0 0.0
    %414 = vmatpush.msra.mxu0 0.0
    %415 = vmatpush.msra.mxu0 0.0
    %416 = vmatpush.msra.mxu0 0.0
    %417 = vmatpush.msra.mxu0 0.0
    %418 = vmatpush.msra.mxu0 0.0
    %419 = vmatpush.msra.mxu0 0.0
    %420 = vmatpush.msra.mxu0 0.0
    %421 = vmatpush.msra.mxu0 %v381
    %422 = vmatpush.msra.mxu0 %v360
    %423 = vmatpush.msra.mxu0 %v356
    %424 = vmatpush.msra.mxu0 %v352
    %425 = vmatpush.msra.mxu0 %v348
    %426 = vmatpush.msra.mxu0 %v344
    %427 = vmatpush.msra.mxu0 %v340
    %428 = vmatmul.f32.gmra.mxu0 %v229
    %v429 = vpop.f32.mrf.mxu0
    %v430 = vadd.f32 %v370, %v429
    %431 = vmatmul.f32.gmra.mxu0 %v232
    %v432 = vpop.f32.mrf.mxu0
    %v433 = vadd.f32 %v370, %v432
    %434 = vdwg.mxu0
    %435 = vmatpush.msra.mxu0 0.0
    %436 = vmatpush.msra.mxu0 0.0
    %437 = vmatpush.msra.mxu0 0.0
    %438 = vmatpush.msra.mxu0 0.0
    %439 = vmatpush.msra.mxu0 0.0
    %440 = vmatpush.msra.mxu0 0.0
    %441 = vmatpush.msra.mxu0 0.0
    %442 = vmatpush.msra.mxu0 0.0
    %443 = vmatpush.msra.mxu0 0.0
    %444 = vmatpush.msra.mxu0 %v384
    %445 = vmatpush.msra.mxu0 %v361
    %446 = vmatpush.msra.mxu0 %v357
    %447 = vmatpush.msra.mxu0 %v353
    %448 = vmatpush.msra.mxu0 %v349
    %449 = vmatpush.msra.mxu0 %v345
    %450 = vmatpush.msra.mxu0 %v341
    %451 = vmatmul.f32.gmra.mxu0 %v229
    %v452 = vpop.f32.mrf.mxu0
    %v453 = vadd.f32 %v371, %v452
    %454 = vmatmul.f32.gmra.mxu0 %v232
    %v455 = vpop.f32.mrf.mxu0
    %v456 = vadd.f32 %v371, %v455
    %457 = vdwg.mxu0
    %458 = vmatpush.msra.mxu0 0.0
    %459 = vmatpush.msra.mxu0 0.0
    %460 = vmatpush.msra.mxu0 0.0
    %461 = vmatpush.msra.mxu0 0.0
    %462 = vmatpush.msra.mxu0 0.0
    %463 = vmatpush.msra.mxu0 0.0
    %464 = vmatpush.msra.mxu0 0.0
    %465 = vmatpush.msra.mxu0 0.0
    %466 = vmatpush.msra.mxu0 0.0
    %467 = vmatpush.msra.mxu0 %v387
    %468 = vmatpush.msra.mxu0 %v362
    %469 = vmatpush.msra.mxu0 %v358
    %470 = vmatpush.msra.mxu0 %v354
    %471 = vmatpush.msra.mxu0 %v350
    %472 = vmatpush.msra.mxu0 %v346
    %473 = vmatpush.msra.mxu0 %v342
    %474 = vmatmul.f32.gmra.mxu0 %v229
    %v475 = vpop.f32.mrf.mxu0
    %v476 = vadd.f32 %v372, %v475
    %477 = vmatmul.f32.gmra.mxu0 %v232
    %v478 = vpop.f32.mrf.mxu0
    %v479 = vadd.f32 %v372, %v478
    %480 = vdwg.mxu0
    %v481 = vld [vmem:[#allocation6] sm:$0xff]
    %v482 = vld [vmem:[#allocation6 + $0x8] sm:$0xff]
    %v483 = vld [vmem:[#allocation6 + $0x10] sm:$0xff]
    %v484 = vld [vmem:[#allocation6 + $0x18] sm:$0xff]
    %v485 = vld [vmem:[#allocation6 + $0x20] sm:$0xff]
    %v486 = vld [vmem:[#allocation6 + $0x28] sm:$0xff]
    %v487 = vld [vmem:[#allocation6 + $0x30] sm:$0xff]
    %v488 = vld [vmem:[#allocation6 + $0x38] sm:$0xff]
    %v489 = vld [vmem:[#allocation6 + $0x40] sm:$0xff]
    %v490 = vld [vmem:[#allocation6 + $0x48] sm:$0xff]
    %v491 = vld [vmem:[#allocation6 + $0x50] sm:$0xff]
    %v492 = vld [vmem:[#allocation6 + $0x58] sm:$0xff]
    %v493 = vld [vmem:[#allocation6 + $0x60] sm:$0xff]
    %v494 = vld [vmem:[#allocation6 + $0x68] sm:$0xff]
    %v495 = vld [vmem:[#allocation6 + $0x70] sm:$0xff]
    %v496 = vld [vmem:[#allocation6 + $0x78] sm:$0xff]
    %v497 = vld [vmem:[#allocation6 + $0x80] sm:$0xff]
    %v498 = vld [vmem:[#allocation6 + $0x88] sm:$0xff]
    %v499 = vld [vmem:[#allocation6 + $0x90] sm:$0xff]
    %v500 = vld [vmem:[#allocation6 + $0x98] sm:$0xff]
    %v501 = vld [vmem:[#allocation6 + $0xa0] sm:$0xff]
    %v502 = vld [vmem:[#allocation6 + $0xa8] sm:$0xff]
    %v503 = vld [vmem:[#allocation6 + $0xb0] sm:$0xff]
    %v504 = vld [vmem:[#allocation6 + $0xb8] sm:$0xff]
    %v505 = vld [vmem:[#allocation6 + $0xc0] sm:$0xff]
    %v506 = vld [vmem:[#allocation6 + $0xc8] sm:$0xff]
    %v507 = vld [vmem:[#allocation6 + $0xd0] sm:$0xff]
    %v508 = vld [vmem:[#allocation6 + $0xd8] sm:$0xff]
    %v509 = vld [vmem:[#allocation6 + $0xe0] sm:$0xff]
    %v510 = vld [vmem:[#allocation6 + $0xe8] sm:$0xff]
    %v511 = vld [vmem:[#allocation6 + $0xf0] sm:$0xff]
    %v512 = vld [vmem:[#allocation6 + $0xf8] sm:$0xff]
    %v513 = vld [vmem:[#allocation6 + $0x100] sm:$0xff]
    %v514 = vld [vmem:[#allocation6 + $0x108] sm:$0xff]
    %v515 = vld [vmem:[#allocation6 + $0x110] sm:$0xff]
    %v516 = vld [vmem:[#allocation6 + $0x118] sm:$0xff]
    %v517 = vld [vmem:[#allocation6 + $0x120] sm:$0xff]
    %v518 = vld [vmem:[#allocation6 + $0x128] sm:$0xff]
    %v519 = vld [vmem:[#allocation6 + $0x130] sm:$0xff]
    %v520 = vld [vmem:[#allocation6 + $0x138] sm:$0xff]
    %v521 = vld [vmem:[#allocation6 + $0x140] sm:$0xff]
    %v522 = vld [vmem:[#allocation6 + $0x148] sm:$0xff]
    %v523 = vld [vmem:[#allocation6 + $0x150] sm:$0xff]
    %v524 = vld [vmem:[#allocation6 + $0x158] sm:$0xff]
    %v525 = vld [vmem:[#allocation6 + $0x160] sm:$0xff]
    %v526 = vld [vmem:[#allocation6 + $0x168] sm:$0xff]
    %v527 = vld [vmem:[#allocation6 + $0x170] sm:$0xff]
    %v528 = vld [vmem:[#allocation6 + $0x178] sm:$0xff]
    %v529 = vld [vmem:[#allocation6 + $0x180] sm:$0xff]
    %v530 = vld [vmem:[#allocation6 + $0x188] sm:$0xff]
    %v531 = vld [vmem:[#allocation6 + $0x190] sm:$0xff]
    %v532 = vld [vmem:[#allocation6 + $0x198] sm:$0xff]
    %v533 = vld [vmem:[#allocation6 + $0x1a0] sm:$0xff]
    %v534 = vld [vmem:[#allocation6 + $0x1a8] sm:$0xff]
    %v535 = vld [vmem:[#allocation6 + $0x1b0] sm:$0xff]
    %v536 = vld [vmem:[#allocation6 + $0x1b8] sm:$0xff]
    %v537 = vld [vmem:[#allocation6 + $0x1c0] sm:$0xff]
    %v538 = vld [vmem:[#allocation6 + $0x1c8] sm:$0xff]
    %v539 = vld [vmem:[#allocation6 + $0x1d0] sm:$0xff]
    %v540 = vld [vmem:[#allocation6 + $0x1d8] sm:$0xff]
    %v541 = vld [vmem:[#allocation6 + $0x1e0] sm:$0xff]
    %v542 = vld [vmem:[#allocation6 + $0x1e8] sm:$0xff]
    %v543 = vld [vmem:[#allocation6 + $0x1f0] sm:$0xff]
    %v544 = vld [vmem:[#allocation6 + $0x1f8] sm:$0xff]
    %v545 = vld [vmem:[#allocation7] sm:$0xff]
    %v546 = vld [vmem:[#allocation7 + $0x8] sm:$0xff]
    %v547 = vld [vmem:[#allocation7 + $0x10] sm:$0xff]
    %v548 = vld [vmem:[#allocation7 + $0x18] sm:$0xff]
    %v549 = vld [vmem:[#allocation7 + $0x20] sm:$0xff]
    %v550 = vld [vmem:[#allocation7 + $0x28] sm:$0xff]
    %v551 = vld [vmem:[#allocation7 + $0x30] sm:$0xff]
    %v552 = vld [vmem:[#allocation7 + $0x38] sm:$0xff]
    %v553 = vld [vmem:[#allocation7 + $0x40] sm:$0xff]
    %v554 = vld [vmem:[#allocation7 + $0x48] sm:$0xff]
    %v555 = vld [vmem:[#allocation7 + $0x50] sm:$0xff]
    %v556 = vld [vmem:[#allocation7 + $0x58] sm:$0xff]
    %v557 = vld [vmem:[#allocation7 + $0x60] sm:$0xff]
    %v558 = vld [vmem:[#allocation7 + $0x68] sm:$0xff]
    %v559 = vld [vmem:[#allocation7 + $0x70] sm:$0xff]
    %v560 = vld [vmem:[#allocation7 + $0x78] sm:$0xff]
    %v561 = vld [vmem:[#allocation7 + $0x80] sm:$0xff]
    %v562 = vld [vmem:[#allocation7 + $0x88] sm:$0xff]
    %v563 = vld [vmem:[#allocation7 + $0x90] sm:$0xff]
    %v564 = vld [vmem:[#allocation7 + $0x98] sm:$0xff]
    %v565 = vld [vmem:[#allocation7 + $0xa0] sm:$0xff]
    %v566 = vld [vmem:[#allocation7 + $0xa8] sm:$0xff]
    %v567 = vld [vmem:[#allocation7 + $0xb0] sm:$0xff]
    %v568 = vld [vmem:[#allocation7 + $0xb8] sm:$0xff]
    %v569 = vld [vmem:[#allocation7 + $0xc0] sm:$0xff]
    %v570 = vld [vmem:[#allocation7 + $0xc8] sm:$0xff]
    %v571 = vld [vmem:[#allocation7 + $0xd0] sm:$0xff]
    %v572 = vld [vmem:[#allocation7 + $0xd8] sm:$0xff]
    %v573 = vld [vmem:[#allocation7 + $0xe0] sm:$0xff]
    %v574 = vld [vmem:[#allocation7 + $0xe8] sm:$0xff]
    %v575 = vld [vmem:[#allocation7 + $0xf0] sm:$0xff]
    %v576 = vld [vmem:[#allocation7 + $0xf8] sm:$0xff]
    %v577 = vld [vmem:[#allocation7 + $0x100] sm:$0xff]
    %v578 = vld [vmem:[#allocation7 + $0x108] sm:$0xff]
    %v579 = vld [vmem:[#allocation7 + $0x110] sm:$0xff]
    %v580 = vld [vmem:[#allocation7 + $0x118] sm:$0xff]
    %v581 = vld [vmem:[#allocation7 + $0x120] sm:$0xff]
    %v582 = vld [vmem:[#allocation7 + $0x128] sm:$0xff]
    %v583 = vld [vmem:[#allocation7 + $0x130] sm:$0xff]
    %v584 = vld [vmem:[#allocation7 + $0x138] sm:$0xff]
    %v585 = vld [vmem:[#allocation7 + $0x140] sm:$0xff]
    %v586 = vld [vmem:[#allocation7 + $0x148] sm:$0xff]
    %v587 = vld [vmem:[#allocation7 + $0x150] sm:$0xff]
    %v588 = vld [vmem:[#allocation7 + $0x158] sm:$0xff]
    %v589 = vld [vmem:[#allocation7 + $0x160] sm:$0xff]
    %v590 = vld [vmem:[#allocation7 + $0x168] sm:$0xff]
    %v591 = vld [vmem:[#allocation7 + $0x170] sm:$0xff]
    %v592 = vld [vmem:[#allocation7 + $0x178] sm:$0xff]
    %v593 = vld [vmem:[#allocation7 + $0x180] sm:$0xff]
    %v594 = vld [vmem:[#allocation7 + $0x188] sm:$0xff]
    %v595 = vld [vmem:[#allocation7 + $0x190] sm:$0xff]
    %v596 = vld [vmem:[#allocation7 + $0x198] sm:$0xff]
    %v597 = vld [vmem:[#allocation7 + $0x1a0] sm:$0xff]
    %v598 = vld [vmem:[#allocation7 + $0x1a8] sm:$0xff]
    %v599 = vld [vmem:[#allocation7 + $0x1b0] sm:$0xff]
    %v600 = vld [vmem:[#allocation7 + $0x1b8] sm:$0xff]
    %v601 = vld [vmem:[#allocation7 + $0x1c0] sm:$0xff]
    %v602 = vld [vmem:[#allocation7 + $0x1c8] sm:$0xff]
    %v603 = vld [vmem:[#allocation7 + $0x1d0] sm:$0xff]
    %v604 = vld [vmem:[#allocation7 + $0x1d8] sm:$0xff]
    %v605 = vld [vmem:[#allocation7 + $0x1e0] sm:$0xff]
    %v606 = vld [vmem:[#allocation7 + $0x1e8] sm:$0xff]
    %v607 = vld [vmem:[#allocation7 + $0x1f0] sm:$0xff]
    %v608 = vld [vmem:[#allocation7 + $0x1f8] sm:$0xff]
    %v609 = vxor.u32 %v265, 2147483648
    %v610 = vmul.f32 %v609, 1.442695
    %v611 = vpow.pop %v610
    %v612 = vadd.f32 %v611, 1.0
    %v613 = vrcp.pop %v612
    %v614 = vmul.f32 %v612, %v613
    %v615 = vsub.f32 1.0, %v614
    %v616 = vmul.f32 %v613, %v615
    %v617 = vadd.f32 %v613, %v616
    %vm618 = vweird.f32 %v612
    %vm619 = vweird.f32 %v613
    %vm620 = vmor %vm618, %vm619
    %v621 = vsel %vm620, %v613, %v617
    %v622 = vand.u32 2147483647, %v612
    %vm623 = vcmp.eq.f32.partialorder %v622, 8.507059e+37
    %v624 = vand.u32 %v612, 2147483648
    %v625 = vor.u32 1.1754944e-38, %v624
    %v626 = vsel %vm623, %v625, %v621
    %v627 = vmul.f32 1.0, %v626
    %v628 = vxor.u32 %v288, 2147483648
    %v629 = vmul.f32 %v628, 1.442695
    %v630 = vpow.pop %v629
    %v631 = vadd.f32 %v630, 1.0
    %v632 = vrcp.pop %v631
    %v633 = vmul.f32 %v631, %v632
    %v634 = vsub.f32 1.0, %v633
    %v635 = vmul.f32 %v632, %v634
    %v636 = vadd.f32 %v632, %v635
    %vm637 = vweird.f32 %v631
    %vm638 = vweird.f32 %v632
    %vm639 = vmor %vm637, %vm638
    %v640 = vsel %vm639, %v632, %v636
    %v641 = vand.u32 2147483647, %v631
    %vm642 = vcmp.eq.f32.partialorder %v641, 8.507059e+37
    %v643 = vand.u32 %v631, 2147483648
    %v644 = vor.u32 1.1754944e-38, %v643
    %v645 = vsel %vm642, %v644, %v640
    %v646 = vmul.f32 1.0, %v645
    %v647 = vtanh.pop %v311
    %v648 = vxor.u32 %v334, 2147483648
    %v649 = vmul.f32 %v648, 1.442695
    %v650 = vpow.pop %v649
    %v651 = vadd.f32 %v650, 1.0
    %v652 = vrcp.pop %v651
    %v653 = vmul.f32 %v651, %v652
    %v654 = vsub.f32 1.0, %v653
    %v655 = vmul.f32 %v652, %v654
    %v656 = vadd.f32 %v652, %v655
    %vm657 = vweird.f32 %v651
    %vm658 = vweird.f32 %v652
    %vm659 = vmor %vm657, %vm658
    %v660 = vsel %vm659, %v652, %v656
    %v661 = vand.u32 2147483647, %v651
    %vm662 = vcmp.eq.f32.partialorder %v661, 8.507059e+37
    %v663 = vand.u32 %v651, 2147483648
    %v664 = vor.u32 1.1754944e-38, %v663
    %v665 = vsel %vm662, %v664, %v660
    %v666 = vmul.f32 1.0, %v665
    %v667 = vmul.f32 %v646, 0.0
    %v668 = vmul.f32 %v627, %v647
    %v669 = vadd.f32 %v667, %v668
    %v670 = vtanh.pop %v669
    %v671 = vmul.f32 %v666, %v670
    %v672 = vxor.u32 %v410, 2147483648
    %v673 = vmul.f32 %v672, 1.442695
    %v674 = vpow.pop %v673
    %v675 = vadd.f32 %v674, 1.0
    %v676 = vrcp.pop %v675
    %v677 = vmul.f32 %v675, %v676
    %v678 = vsub.f32 1.0, %v677
    %v679 = vmul.f32 %v676, %v678
    %v680 = vadd.f32 %v676, %v679
    %vm681 = vweird.f32 %v675
    %vm682 = vweird.f32 %v676
    %vm683 = vmor %vm681, %vm682
    %v684 = vsel %vm683, %v676, %v680
    %v685 = vand.u32 2147483647, %v675
    %vm686 = vcmp.eq.f32.partialorder %v685, 8.507059e+37
    %v687 = vand.u32 %v675, 2147483648
    %v688 = vor.u32 1.1754944e-38, %v687
    %v689 = vsel %vm686, %v688, %v684
    %v690 = vmul.f32 1.0, %v689
    %v691 = vxor.u32 %v433, 2147483648
    %v692 = vmul.f32 %v691, 1.442695
    %v693 = vpow.pop %v692
    %v694 = vadd.f32 %v693, 1.0
    %v695 = vrcp.pop %v694
    %v696 = vmul.f32 %v694, %v695
    %v697 = vsub.f32 1.0, %v696
    %v698 = vmul.f32 %v695, %v697
    %v699 = vadd.f32 %v695, %v698
    %vm700 = vweird.f32 %v694
    %vm701 = vweird.f32 %v695
    %vm702 = vmor %vm700, %vm701
    %v703 = vsel %vm702, %v695, %v699
    %v704 = vand.u32 2147483647, %v694
    %vm705 = vcmp.eq.f32.partialorder %v704, 8.507059e+37
    %v706 = vand.u32 %v694, 2147483648
    %v707 = vor.u32 1.1754944e-38, %v706
    %v708 = vsel %vm705, %v707, %v703
    %v709 = vmul.f32 1.0, %v708
    %v710 = vtanh.pop %v456
    %v711 = vxor.u32 %v479, 2147483648
    %v712 = vmul.f32 %v711, 1.442695
    %v713 = vpow.pop %v712
    %v714 = vadd.f32 %v713, 1.0
    %v715 = vrcp.pop %v714
    %v716 = vmul.f32 %v714, %v715
    %v717 = vsub.f32 1.0, %v716
    %v718 = vmul.f32 %v715, %v717
    %v719 = vadd.f32 %v715, %v718
    %vm720 = vweird.f32 %v714
    %vm721 = vweird.f32 %v715
    %vm722 = vmor %vm720, %vm721
    %v723 = vsel %vm722, %v715, %v719
    %v724 = vand.u32 2147483647, %v714
    %vm725 = vcmp.eq.f32.partialorder %v724, 8.507059e+37
    %v726 = vand.u32 %v714, 2147483648
    %v727 = vor.u32 1.1754944e-38, %v726
    %v728 = vsel %vm725, %v727, %v723
    %v729 = vmul.f32 1.0, %v728
    %v730 = vmul.f32 %v709, 0.0
    %v731 = vmul.f32 %v690, %v710
    %v732 = vadd.f32 %v730, %v731
    %v733 = vtanh.pop %v732
    %v734 = vmul.f32 %v729, %v733
    %735 = vmatpush.msra.mxu0 %v541
    %736 = vmatpush.msra.mxu0 %v537
    %737 = vmatpush.msra.mxu0 %v533
    %738 = vmatpush.msra.mxu0 %v529
    %739 = vmatpush.msra.mxu0 %v525
    %740 = vmatpush.msra.mxu0 %v521
    %741 = vmatpush.msra.mxu0 %v517
    %742 = vmatpush.msra.mxu0 %v513
    %743 = vmatpush.msra.mxu0 %v509
    %744 = vmatpush.msra.mxu0 %v505
    %745 = vmatpush.msra.mxu0 %v501
    %746 = vmatpush.msra.mxu0 %v497
    %747 = vmatpush.msra.mxu0 %v493
    %748 = vmatpush.msra.mxu0 %v489
    %749 = vmatpush.msra.mxu0 %v485
    %750 = vmatpush.msra.mxu0 %v481
    %751 = vmatmul.f32.gmra.mxu0 %v671
    %v752 = vpop.f32.mrf.mxu0
    %v753 = vadd.f32 0.0, %v752
    %754 = vdwg.mxu0
    %755 = vmatpush.msra.mxu0 %v542
    %756 = vmatpush.msra.mxu0 %v538
    %757 = vmatpush.msra.mxu0 %v534
    %758 = vmatpush.msra.mxu0 %v530
    %759 = vmatpush.msra.mxu0 %v526
    %760 = vmatpush.msra.mxu0 %v522
    %761 = vmatpush.msra.mxu0 %v518
    %762 = vmatpush.msra.mxu0 %v514
    %763 = vmatpush.msra.mxu0 %v510
    %764 = vmatpush.msra.mxu0 %v506
    %765 = vmatpush.msra.mxu0 %v502
    %766 = vmatpush.msra.mxu0 %v498
    %767 = vmatpush.msra.mxu0 %v494
    %768 = vmatpush.msra.mxu0 %v490
    %769 = vmatpush.msra.mxu0 %v486
    %770 = vmatpush.msra.mxu0 %v482
    %771 = vmatmul.f32.gmra.mxu0 %v671
    %v772 = vpop.f32.mrf.mxu0
    %v773 = vadd.f32 0.0, %v772
    %774 = vdwg.mxu0
    %775 = vmatpush.msra.mxu0 %v543
    %776 = vmatpush.msra.mxu0 %v539
    %777 = vmatpush.msra.mxu0 %v535
    %778 = vmatpush.msra.mxu0 %v531
    %779 = vmatpush.msra.mxu0 %v527
    %780 = vmatpush.msra.mxu0 %v523
    %781 = vmatpush.msra.mxu0 %v519
    %782 = vmatpush.msra.mxu0 %v515
    %783 = vmatpush.msra.mxu0 %v511
    %784 = vmatpush.msra.mxu0 %v507
    %785 = vmatpush.msra.mxu0 %v503
    %786 = vmatpush.msra.mxu0 %v499
    %787 = vmatpush.msra.mxu0 %v495
    %788 = vmatpush.msra.mxu0 %v491
    %789 = vmatpush.msra.mxu0 %v487
    %790 = vmatpush.msra.mxu0 %v483
    %791 = vmatmul.f32.gmra.mxu0 %v671
    %v792 = vpop.f32.mrf.mxu0
    %v793 = vadd.f32 0.0, %v792
    %794 = vdwg.mxu0
    %795 = vmatpush.msra.mxu0 %v544
    %796 = vmatpush.msra.mxu0 %v540
    %797 = vmatpush.msra.mxu0 %v536
    %798 = vmatpush.msra.mxu0 %v532
    %799 = vmatpush.msra.mxu0 %v528
    %800 = vmatpush.msra.mxu0 %v524
    %801 = vmatpush.msra.mxu0 %v520
    %802 = vmatpush.msra.mxu0 %v516
    %803 = vmatpush.msra.mxu0 %v512
    %804 = vmatpush.msra.mxu0 %v508
    %805 = vmatpush.msra.mxu0 %v504
    %806 = vmatpush.msra.mxu0 %v500
    %807 = vmatpush.msra.mxu0 %v496
    %808 = vmatpush.msra.mxu0 %v492
    %809 = vmatpush.msra.mxu0 %v488
    %810 = vmatpush.msra.mxu0 %v484
    %811 = vmatmul.f32.gmra.mxu0 %v671
    %v812 = vpop.f32.mrf.mxu0
    %v813 = vadd.f32 0.0, %v812
    %814 = vdwg.mxu0
    %v819 = vrot.slane %v753, 6
    %v820 = vrot.slane %v773, 6
    %v821 = vrot.slane %v793, 6
    %v822 = vrot.slane %v813, 6
    %v827 = vadd.f32 %v265, %v819
    %v828 = vadd.f32 %v288, %v820
    %v829 = vadd.f32 %v311, %v821
    %v830 = vadd.f32 %v334, %v822
    %v832 = vrot.slane %v734, 6
    %834 = vmatpush.msra.mxu0 %v605
    %835 = vmatpush.msra.mxu0 %v601
    %836 = vmatpush.msra.mxu0 %v597
    %837 = vmatpush.msra.mxu0 %v593
    %838 = vmatpush.msra.mxu0 %v589
    %839 = vmatpush.msra.mxu0 %v585
    %840 = vmatpush.msra.mxu0 %v581
    %841 = vmatpush.msra.mxu0 %v577
    %842 = vmatpush.msra.mxu0 %v573
    %843 = vmatpush.msra.mxu0 %v569
    %844 = vmatpush.msra.mxu0 %v565
    %845 = vmatpush.msra.mxu0 %v561
    %846 = vmatpush.msra.mxu0 %v557
    %847 = vmatpush.msra.mxu0 %v553
    %848 = vmatpush.msra.mxu0 %v549
    %849 = vmatpush.msra.mxu0 %v545
    %850 = vmatmul.f32.gmra.mxu0 %v832
    %v851 = vpop.f32.mrf.mxu0
    %v852 = vadd.f32 0.0, %v851
    %853 = vdwg.mxu0
    %854 = vmatpush.msra.mxu0 %v606
    %855 = vmatpush.msra.mxu0 %v602
    %856 = vmatpush.msra.mxu0 %v598
    %857 = vmatpush.msra.mxu0 %v594
    %858 = vmatpush.msra.mxu0 %v590
    %859 = vmatpush.msra.mxu0 %v586
    %860 = vmatpush.msra.mxu0 %v582
    %861 = vmatpush.msra.mxu0 %v578
    %862 = vmatpush.msra.mxu0 %v574
    %863 = vmatpush.msra.mxu0 %v570
    %864 = vmatpush.msra.mxu0 %v566
    %865 = vmatpush.msra.mxu0 %v562
    %866 = vmatpush.msra.mxu0 %v558
    %867 = vmatpush.msra.mxu0 %v554
    %868 = vmatpush.msra.mxu0 %v550
    %869 = vmatpush.msra.mxu0 %v546
    %870 = vmatmul.f32.gmra.mxu0 %v832
    %v871 = vpop.f32.mrf.mxu0
    %v872 = vadd.f32 0.0, %v871
    %873 = vdwg.mxu0
    %874 = vmatpush.msra.mxu0 %v607
    %875 = vmatpush.msra.mxu0 %v603
    %876 = vmatpush.msra.mxu0 %v599
    %877 = vmatpush.msra.mxu0 %v595
    %878 = vmatpush.msra.mxu0 %v591
    %879 = vmatpush.msra.mxu0 %v587
    %880 = vmatpush.msra.mxu0 %v583
    %881 = vmatpush.msra.mxu0 %v579
    %882 = vmatpush.msra.mxu0 %v575
    %883 = vmatpush.msra.mxu0 %v571
    %884 = vmatpush.msra.mxu0 %v567
    %885 = vmatpush.msra.mxu0 %v563
    %886 = vmatpush.msra.mxu0 %v559
    %887 = vmatpush.msra.mxu0 %v555
    %888 = vmatpush.msra.mxu0 %v551
    %889 = vmatpush.msra.mxu0 %v547
    %890 = vmatmul.f32.gmra.mxu0 %v832
    %v891 = vpop.f32.mrf.mxu0
    %v892 = vadd.f32 0.0, %v891
    %893 = vdwg.mxu0
    %894 = vmatpush.msra.mxu0 %v608
    %895 = vmatpush.msra.mxu0 %v604
    %896 = vmatpush.msra.mxu0 %v600
    %897 = vmatpush.msra.mxu0 %v596
    %898 = vmatpush.msra.mxu0 %v592
    %899 = vmatpush.msra.mxu0 %v588
    %900 = vmatpush.msra.mxu0 %v584
    %901 = vmatpush.msra.mxu0 %v580
    %902 = vmatpush.msra.mxu0 %v576
    %903 = vmatpush.msra.mxu0 %v572
    %904 = vmatpush.msra.mxu0 %v568
    %905 = vmatpush.msra.mxu0 %v564
    %906 = vmatpush.msra.mxu0 %v560
    %907 = vmatpush.msra.mxu0 %v556
    %908 = vmatpush.msra.mxu0 %v552
    %909 = vmatpush.msra.mxu0 %v548
    %910 = vmatmul.f32.gmra.mxu0 %v832
    %v911 = vpop.f32.mrf.mxu0
    %v912 = vadd.f32 0.0, %v911
    %913 = vdwg.mxu0
    %v918 = vrot.slane %v852, 4
    %v919 = vrot.slane %v872, 4
    %v920 = vrot.slane %v892, 4
    %v921 = vrot.slane %v912, 4
    %v926 = vadd.f32 %v410, %v918
    %v927 = vadd.f32 %v433, %v919
    %v928 = vadd.f32 %v456, %v920
    %v929 = vadd.f32 %v479, %v921
    %v930 = vxor.u32 %v827, 2147483648
    %v931 = vmul.f32 %v930, 1.442695
    %v932 = vpow.pop %v931
    %v933 = vadd.f32 %v932, 1.0
    %v934 = vrcp.pop %v933
    %v935 = vmul.f32 %v933, %v934
    %v936 = vsub.f32 1.0, %v935
    %v937 = vmul.f32 %v934, %v936
    %v938 = vadd.f32 %v934, %v937
    %vm939 = vweird.f32 %v933
    %vm940 = vweird.f32 %v934
    %vm941 = vmor %vm939, %vm940
    %v942 = vsel %vm941, %v934, %v938
    %v943 = vand.u32 2147483647, %v933
    %vm944 = vcmp.eq.f32.partialorder %v943, 8.507059e+37
    %v945 = vand.u32 %v933, 2147483648
    %v946 = vor.u32 1.1754944e-38, %v945
    %v947 = vsel %vm944, %v946, %v942
    %v948 = vmul.f32 1.0, %v947
    %v949 = vxor.u32 %v828, 2147483648
    %v950 = vmul.f32 %v949, 1.442695
    %v951 = vpow.pop %v950
    %v952 = vadd.f32 %v951, 1.0
    %v953 = vrcp.pop %v952
    %v954 = vmul.f32 %v952, %v953
    %v955 = vsub.f32 1.0, %v954
    %v956 = vmul.f32 %v953, %v955
    %v957 = vadd.f32 %v953, %v956
    %vm958 = vweird.f32 %v952
    %vm959 = vweird.f32 %v953
    %vm960 = vmor %vm958, %vm959
    %v961 = vsel %vm960, %v953, %v957
    %v962 = vand.u32 2147483647, %v952
    %vm963 = vcmp.eq.f32.partialorder %v962, 8.507059e+37
    %v964 = vand.u32 %v952, 2147483648
    %v965 = vor.u32 1.1754944e-38, %v964
    %v966 = vsel %vm963, %v965, %v961
    %v967 = vmul.f32 1.0, %v966
    %v968 = vtanh.pop %v829
    %v969 = vxor.u32 %v830, 2147483648
    %v970 = vmul.f32 %v969, 1.442695
    %v971 = vpow.pop %v970
    %v972 = vadd.f32 %v971, 1.0
    %v973 = vrcp.pop %v972
    %v974 = vmul.f32 %v972, %v973
    %v975 = vsub.f32 1.0, %v974
    %v976 = vmul.f32 %v973, %v975
    %v977 = vadd.f32 %v973, %v976
    %vm978 = vweird.f32 %v972
    %vm979 = vweird.f32 %v973
    %vm980 = vmor %vm978, %vm979
    %v981 = vsel %vm980, %v973, %v977
    %v982 = vand.u32 2147483647, %v972
    %vm983 = vcmp.eq.f32.partialorder %v982, 8.507059e+37
    %v984 = vand.u32 %v972, 2147483648
    %v985 = vor.u32 1.1754944e-38, %v984
    %v986 = vsel %vm983, %v985, %v981
    %v987 = vmul.f32 1.0, %v986
    %v989 = vrot.slane %v669, 6
    %v991 = vmul.f32 %v967, %v989
    %v992 = vmul.f32 %v948, %v968
    %v993 = vadd.f32 %v991, %v992
    %v994 = vtanh.pop %v993
    %v995 = vmul.f32 %v987, %v994
    %v996 = vxor.u32 %v926, 2147483648
    %v997 = vmul.f32 %v996, 1.442695
    %v998 = vpow.pop %v997
    %v999 = vadd.f32 %v998, 1.0
    %v1000 = vrcp.pop %v999
    %v1001 = vmul.f32 %v999, %v1000
    %v1002 = vsub.f32 1.0, %v1001
    %v1003 = vmul.f32 %v1000, %v1002
    %v1004 = vadd.f32 %v1000, %v1003
    %vm1005 = vweird.f32 %v999
    %vm1006 = vweird.f32 %v1000
    %vm1007 = vmor %vm1005, %vm1006
    %v1008 = vsel %vm1007, %v1000, %v1004
    %v1009 = vand.u32 2147483647, %v999
    %vm1010 = vcmp.eq.f32.partialorder %v1009, 8.507059e+37
    %v1011 = vand.u32 %v999, 2147483648
    %v1012 = vor.u32 1.1754944e-38, %v1011
    %v1013 = vsel %vm1010, %v1012, %v1008
    %v1014 = vmul.f32 1.0, %v1013
    %v1015 = vxor.u32 %v927, 2147483648
    %v1016 = vmul.f32 %v1015, 1.442695
    %v1017 = vpow.pop %v1016
    %v1018 = vadd.f32 %v1017, 1.0
    %v1019 = vrcp.pop %v1018
    %v1020 = vmul.f32 %v1018, %v1019
    %v1021 = vsub.f32 1.0, %v1020
    %v1022 = vmul.f32 %v1019, %v1021
    %v1023 = vadd.f32 %v1019, %v1022
    %vm1024 = vweird.f32 %v1018
    %vm1025 = vweird.f32 %v1019
    %vm1026 = vmor %vm1024, %vm1025
    %v1027 = vsel %vm1026, %v1019, %v1023
    %v1028 = vand.u32 2147483647, %v1018
    %vm1029 = vcmp.eq.f32.partialorder %v1028, 8.507059e+37
    %v1030 = vand.u32 %v1018, 2147483648
    %v1031 = vor.u32 1.1754944e-38, %v1030
    %v1032 = vsel %vm1029, %v1031, %v1027
    %v1033 = vmul.f32 1.0, %v1032
    %v1034 = vtanh.pop %v928
    %v1035 = vxor.u32 %v929, 2147483648
    %v1036 = vmul.f32 %v1035, 1.442695
    %v1037 = vpow.pop %v1036
    %v1038 = vadd.f32 %v1037, 1.0
    %v1039 = vrcp.pop %v1038
    %v1040 = vmul.f32 %v1038, %v1039
    %v1041 = vsub.f32 1.0, %v1040
    %v1042 = vmul.f32 %v1039, %v1041
    %v1043 = vadd.f32 %v1039, %v1042
    %vm1044 = vweird.f32 %v1038
    %vm1045 = vweird.f32 %v1039
    %vm1046 = vmor %vm1044, %vm1045
    %v1047 = vsel %vm1046, %v1039, %v1043
    %v1048 = vand.u32 2147483647, %v1038
    %vm1049 = vcmp.eq.f32.partialorder %v1048, 8.507059e+37
    %v1050 = vand.u32 %v1038, 2147483648
    %v1051 = vor.u32 1.1754944e-38, %v1050
    %v1052 = vsel %vm1049, %v1051, %v1047
    %v1053 = vmul.f32 1.0, %v1052
    %v1055 = vrot.slane %v732, 2
    %v1057 = vmul.f32 %v1033, %v1055
    %v1058 = vmul.f32 %v1014, %v1034
    %v1059 = vadd.f32 %v1057, %v1058
    %v1060 = vtanh.pop %v1059
    %v1061 = vmul.f32 %v1053, %v1060
    %v1063 = vrot.slane %v995, 2
    %1065 = vmatpush.msra.mxu0 %v541
    %1066 = vmatpush.msra.mxu0 %v537
    %1067 = vmatpush.msra.mxu0 %v533
    %1068 = vmatpush.msra.mxu0 %v529
    %1069 = vmatpush.msra.mxu0 %v525
    %1070 = vmatpush.msra.mxu0 %v521
    %1071 = vmatpush.msra.mxu0 %v517
    %1072 = vmatpush.msra.mxu0 %v513
    %1073 = vmatpush.msra.mxu0 %v509
    %1074 = vmatpush.msra.mxu0 %v505
    %1075 = vmatpush.msra.mxu0 %v501
    %1076 = vmatpush.msra.mxu0 %v497
    %1077 = vmatpush.msra.mxu0 %v493
    %1078 = vmatpush.msra.mxu0 %v489
    %1079 = vmatpush.msra.mxu0 %v485
    %1080 = vmatpush.msra.mxu0 %v481
    %1081 = vmatmul.f32.gmra.mxu0 %v1063
    %v1082 = vpop.f32.mrf.mxu0
    %v1083 = vadd.f32 0.0, %v1082
    %1084 = vdwg.mxu0
    %1085 = vmatpush.msra.mxu0 %v542
    %1086 = vmatpush.msra.mxu0 %v538
    %1087 = vmatpush.msra.mxu0 %v534
    %1088 = vmatpush.msra.mxu0 %v530
    %1089 = vmatpush.msra.mxu0 %v526
    %1090 = vmatpush.msra.mxu0 %v522
    %1091 = vmatpush.msra.mxu0 %v518
    %1092 = vmatpush.msra.mxu0 %v514
    %1093 = vmatpush.msra.mxu0 %v510
    %1094 = vmatpush.msra.mxu0 %v506
    %1095 = vmatpush.msra.mxu0 %v502
    %1096 = vmatpush.msra.mxu0 %v498
    %1097 = vmatpush.msra.mxu0 %v494
    %1098 = vmatpush.msra.mxu0 %v490
    %1099 = vmatpush.msra.mxu0 %v486
    %1100 = vmatpush.msra.mxu0 %v482
    %1101 = vmatmul.f32.gmra.mxu0 %v1063
    %v1102 = vpop.f32.mrf.mxu0
    %v1103 = vadd.f32 0.0, %v1102
    %1104 = vdwg.mxu0
    %1105 = vmatpush.msra.mxu0 %v543
    %1106 = vmatpush.msra.mxu0 %v539
    %1107 = vmatpush.msra.mxu0 %v535
    %1108 = vmatpush.msra.mxu0 %v531
    %1109 = vmatpush.msra.mxu0 %v527
    %1110 = vmatpush.msra.mxu0 %v523
    %1111 = vmatpush.msra.mxu0 %v519
    %1112 = vmatpush.msra.mxu0 %v515
    %1113 = vmatpush.msra.mxu0 %v511
    %1114 = vmatpush.msra.mxu0 %v507
    %1115 = vmatpush.msra.mxu0 %v503
    %1116 = vmatpush.msra.mxu0 %v499
    %1117 = vmatpush.msra.mxu0 %v495
    %1118 = vmatpush.msra.mxu0 %v491
    %1119 = vmatpush.msra.mxu0 %v487
    %1120 = vmatpush.msra.mxu0 %v483
    %1121 = vmatmul.f32.gmra.mxu0 %v1063
    %v1122 = vpop.f32.mrf.mxu0
    %v1123 = vadd.f32 0.0, %v1122
    %1124 = vdwg.mxu0
    %1125 = vmatpush.msra.mxu0 %v544
    %1126 = vmatpush.msra.mxu0 %v540
    %1127 = vmatpush.msra.mxu0 %v536
    %1128 = vmatpush.msra.mxu0 %v532
    %1129 = vmatpush.msra.mxu0 %v528
    %1130 = vmatpush.msra.mxu0 %v524
    %1131 = vmatpush.msra.mxu0 %v520
    %1132 = vmatpush.msra.mxu0 %v516
    %1133 = vmatpush.msra.mxu0 %v512
    %1134 = vmatpush.msra.mxu0 %v508
    %1135 = vmatpush.msra.mxu0 %v504
    %1136 = vmatpush.msra.mxu0 %v500
    %1137 = vmatpush.msra.mxu0 %v496
    %1138 = vmatpush.msra.mxu0 %v492
    %1139 = vmatpush.msra.mxu0 %v488
    %1140 = vmatpush.msra.mxu0 %v484
    %1141 = vmatmul.f32.gmra.mxu0 %v1063
    %v1142 = vpop.f32.mrf.mxu0
    %v1143 = vadd.f32 0.0, %v1142
    %1144 = vdwg.mxu0
    %v1149 = vrot.slane %v1083, 4
    %v1150 = vrot.slane %v1103, 4
    %v1151 = vrot.slane %v1123, 4
    %v1152 = vrot.slane %v1143, 4
    %v1157 = vadd.f32 %v265, %v1149
    %v1158 = vadd.f32 %v288, %v1150
    %v1159 = vadd.f32 %v311, %v1151
    %v1160 = vadd.f32 %v334, %v1152
    %v1162 = vrot.slane %v1061, 4
    %1164 = vmatpush.msra.mxu0 %v605
    %1165 = vmatpush.msra.mxu0 %v601
    %1166 = vmatpush.msra.mxu0 %v597
    %1167 = vmatpush.msra.mxu0 %v593
    %1168 = vmatpush.msra.mxu0 %v589
    %1169 = vmatpush.msra.mxu0 %v585
    %1170 = vmatpush.msra.mxu0 %v581
    %1171 = vmatpush.msra.mxu0 %v577
    %1172 = vmatpush.msra.mxu0 %v573
    %1173 = vmatpush.msra.mxu0 %v569
    %1174 = vmatpush.msra.mxu0 %v565
    %1175 = vmatpush.msra.mxu0 %v561
    %1176 = vmatpush.msra.mxu0 %v557
    %1177 = vmatpush.msra.mxu0 %v553
    %1178 = vmatpush.msra.mxu0 %v549
    %1179 = vmatpush.msra.mxu0 %v545
    %1180 = vmatmul.f32.gmra.mxu0 %v1162
    %v1181 = vpop.f32.mrf.mxu0
    %v1182 = vadd.f32 0.0, %v1181
    %1183 = vdwg.mxu0
    %1184 = vmatpush.msra.mxu0 %v606
    %1185 = vmatpush.msra.mxu0 %v602
    %1186 = vmatpush.msra.mxu0 %v598
    %1187 = vmatpush.msra.mxu0 %v594
    %1188 = vmatpush.msra.mxu0 %v590
    %1189 = vmatpush.msra.mxu0 %v586
    %1190 = vmatpush.msra.mxu0 %v582
    %1191 = vmatpush.msra.mxu0 %v578
    %1192 = vmatpush.msra.mxu0 %v574
    %1193 = vmatpush.msra.mxu0 %v570
    %1194 = vmatpush.msra.mxu0 %v566
    %1195 = vmatpush.msra.mxu0 %v562
    %1196 = vmatpush.msra.mxu0 %v558
    %1197 = vmatpush.msra.mxu0 %v554
    %1198 = vmatpush.msra.mxu0 %v550
    %1199 = vmatpush.msra.mxu0 %v546
    %1200 = vmatmul.f32.gmra.mxu0 %v1162
    %v1201 = vpop.f32.mrf.mxu0
    %v1202 = vadd.f32 0.0, %v1201
    %1203 = vdwg.mxu0
    %1204 = vmatpush.msra.mxu0 %v607
    %1205 = vmatpush.msra.mxu0 %v603
    %1206 = vmatpush.msra.mxu0 %v599
    %1207 = vmatpush.msra.mxu0 %v595
    %1208 = vmatpush.msra.mxu0 %v591
    %1209 = vmatpush.msra.mxu0 %v587
    %1210 = vmatpush.msra.mxu0 %v583
    %1211 = vmatpush.msra.mxu0 %v579
    %1212 = vmatpush.msra.mxu0 %v575
    %1213 = vmatpush.msra.mxu0 %v571
    %1214 = vmatpush.msra.mxu0 %v567
    %1215 = vmatpush.msra.mxu0 %v563
    %1216 = vmatpush.msra.mxu0 %v559
    %1217 = vmatpush.msra.mxu0 %v555
    %1218 = vmatpush.msra.mxu0 %v551
    %1219 = vmatpush.msra.mxu0 %v547
    %1220 = vmatmul.f32.gmra.mxu0 %v1162
    %v1221 = vpop.f32.mrf.mxu0
    %v1222 = vadd.f32 0.0, %v1221
    %1223 = vdwg.mxu0
    %1224 = vmatpush.msra.mxu0 %v608
    %1225 = vmatpush.msra.mxu0 %v604
    %1226 = vmatpush.msra.mxu0 %v600
    %1227 = vmatpush.msra.mxu0 %v596
    %1228 = vmatpush.msra.mxu0 %v592
    %1229 = vmatpush.msra.mxu0 %v588
    %1230 = vmatpush.msra.mxu0 %v584
    %1231 = vmatpush.msra.mxu0 %v580
    %1232 = vmatpush.msra.mxu0 %v576
    %1233 = vmatpush.msra.mxu0 %v572
    %1234 = vmatpush.msra.mxu0 %v568
    %1235 = vmatpush.msra.mxu0 %v564
    %1236 = vmatpush.msra.mxu0 %v560
    %1237 = vmatpush.msra.mxu0 %v556
    %1238 = vmatpush.msra.mxu0 %v552
    %1239 = vmatpush.msra.mxu0 %v548
    %1240 = vmatmul.f32.gmra.mxu0 %v1162
    %v1241 = vpop.f32.mrf.mxu0
    %v1242 = vadd.f32 0.0, %v1241
    %1243 = vdwg.mxu0
    %v1248 = vrot.slane %v1182, 6
    %v1249 = vrot.slane %v1202, 6
    %v1250 = vrot.slane %v1222, 6
    %v1251 = vrot.slane %v1242, 6
    %v1256 = vadd.f32 %v410, %v1248
    %v1257 = vadd.f32 %v433, %v1249
    %v1258 = vadd.f32 %v456, %v1250
    %v1259 = vadd.f32 %v479, %v1251
    %v1260 = vxor.u32 %v1157, 2147483648
    %v1261 = vmul.f32 %v1260, 1.442695
    %v1262 = vpow.pop %v1261
    %v1263 = vadd.f32 %v1262, 1.0
    %v1264 = vrcp.pop %v1263
    %v1265 = vmul.f32 %v1263, %v1264
    %v1266 = vsub.f32 1.0, %v1265
    %v1267 = vmul.f32 %v1264, %v1266
    %v1268 = vadd.f32 %v1264, %v1267
    %vm1269 = vweird.f32 %v1263
    %vm1270 = vweird.f32 %v1264
    %vm1271 = vmor %vm1269, %vm1270
    %v1272 = vsel %vm1271, %v1264, %v1268
    %v1273 = vand.u32 2147483647, %v1263
    %vm1274 = vcmp.eq.f32.partialorder %v1273, 8.507059e+37
    %v1275 = vand.u32 %v1263, 2147483648
    %v1276 = vor.u32 1.1754944e-38, %v1275
    %v1277 = vsel %vm1274, %v1276, %v1272
    %v1278 = vmul.f32 1.0, %v1277
    %v1279 = vxor.u32 %v1158, 2147483648
    %v1280 = vmul.f32 %v1279, 1.442695
    %v1281 = vpow.pop %v1280
    %v1282 = vadd.f32 %v1281, 1.0
    %v1283 = vrcp.pop %v1282
    %v1284 = vmul.f32 %v1282, %v1283
    %v1285 = vsub.f32 1.0, %v1284
    %v1286 = vmul.f32 %v1283, %v1285
    %v1287 = vadd.f32 %v1283, %v1286
    %vm1288 = vweird.f32 %v1282
    %vm1289 = vweird.f32 %v1283
    %vm1290 = vmor %vm1288, %vm1289
    %v1291 = vsel %vm1290, %v1283, %v1287
    %v1292 = vand.u32 2147483647, %v1282
    %vm1293 = vcmp.eq.f32.partialorder %v1292, 8.507059e+37
    %v1294 = vand.u32 %v1282, 2147483648
    %v1295 = vor.u32 1.1754944e-38, %v1294
    %v1296 = vsel %vm1293, %v1295, %v1291
    %v1297 = vmul.f32 1.0, %v1296
    %v1298 = vtanh.pop %v1159
    %v1299 = vxor.u32 %v1160, 2147483648
    %v1300 = vmul.f32 %v1299, 1.442695
    %v1301 = vpow.pop %v1300
    %v1302 = vadd.f32 %v1301, 1.0
    %v1303 = vrcp.pop %v1302
    %v1304 = vmul.f32 %v1302, %v1303
    %v1305 = vsub.f32 1.0, %v1304
    %v1306 = vmul.f32 %v1303, %v1305
    %v1307 = vadd.f32 %v1303, %v1306
    %vm1308 = vweird.f32 %v1302
    %vm1309 = vweird.f32 %v1303
    %vm1310 = vmor %vm1308, %vm1309
    %v1311 = vsel %vm1310, %v1303, %v1307
    %v1312 = vand.u32 2147483647, %v1302
    %vm1313 = vcmp.eq.f32.partialorder %v1312, 8.507059e+37
    %v1314 = vand.u32 %v1302, 2147483648
    %v1315 = vor.u32 1.1754944e-38, %v1314
    %v1316 = vsel %vm1313, %v1315, %v1311
    %v1317 = vmul.f32 1.0, %v1316
    %v1319 = vrot.slane %v993, 6
    %v1321 = vmul.f32 %v1297, %v1319
    %v1322 = vmul.f32 %v1278, %v1298
    %v1323 = vadd.f32 %v1321, %v1322
    %v1324 = vtanh.pop %v1323
    %v1325 = vmul.f32 %v1317, %v1324
    %v1326 = vxor.u32 %v1256, 2147483648
    %v1327 = vmul.f32 %v1326, 1.442695
    %v1328 = vpow.pop %v1327
    %v1329 = vadd.f32 %v1328, 1.0
    %v1330 = vrcp.pop %v1329
    %v1331 = vmul.f32 %v1329, %v1330
    %v1332 = vsub.f32 1.0, %v1331
    %v1333 = vmul.f32 %v1330, %v1332
    %v1334 = vadd.f32 %v1330, %v1333
    %vm1335 = vweird.f32 %v1329
    %vm1336 = vweird.f32 %v1330
    %vm1337 = vmor %vm1335, %vm1336
    %v1338 = vsel %vm1337, %v1330, %v1334
    %v1339 = vand.u32 2147483647, %v1329
    %vm1340 = vcmp.eq.f32.partialorder %v1339, 8.507059e+37
    %v1341 = vand.u32 %v1329, 2147483648
    %v1342 = vor.u32 1.1754944e-38, %v1341
    %v1343 = vsel %vm1340, %v1342, %v1338
    %v1344 = vmul.f32 1.0, %v1343
    %v1345 = vxor.u32 %v1257, 2147483648
    %v1346 = vmul.f32 %v1345, 1.442695
    %v1347 = vpow.pop %v1346
    %v1348 = vadd.f32 %v1347, 1.0
    %v1349 = vrcp.pop %v1348
    %v1350 = vmul.f32 %v1348, %v1349
    %v1351 = vsub.f32 1.0, %v1350
    %v1352 = vmul.f32 %v1349, %v1351
    %v1353 = vadd.f32 %v1349, %v1352
    %vm1354 = vweird.f32 %v1348
    %vm1355 = vweird.f32 %v1349
    %vm1356 = vmor %vm1354, %vm1355
    %v1357 = vsel %vm1356, %v1349, %v1353
    %v1358 = vand.u32 2147483647, %v1348
    %vm1359 = vcmp.eq.f32.partialorder %v1358, 8.507059e+37
    %v1360 = vand.u32 %v1348, 2147483648
    %v1361 = vor.u32 1.1754944e-38, %v1360
    %v1362 = vsel %vm1359, %v1361, %v1357
    %v1363 = vmul.f32 1.0, %v1362
    %v1364 = vtanh.pop %v1258
    %v1365 = vxor.u32 %v1259, 2147483648
    %v1366 = vmul.f32 %v1365, 1.442695
    %v1367 = vpow.pop %v1366
    %v1368 = vadd.f32 %v1367, 1.0
    %v1369 = vrcp.pop %v1368
    %v1370 = vmul.f32 %v1368, %v1369
    %v1371 = vsub.f32 1.0, %v1370
    %v1372 = vmul.f32 %v1369, %v1371
    %v1373 = vadd.f32 %v1369, %v1372
    %vm1374 = vweird.f32 %v1368
    %vm1375 = vweird.f32 %v1369
    %vm1376 = vmor %vm1374, %vm1375
    %v1377 = vsel %vm1376, %v1369, %v1373
    %v1378 = vand.u32 2147483647, %v1368
    %vm1379 = vcmp.eq.f32.partialorder %v1378, 8.507059e+37
    %v1380 = vand.u32 %v1368, 2147483648
    %v1381 = vor.u32 1.1754944e-38, %v1380
    %v1382 = vsel %vm1379, %v1381, %v1377
    %v1383 = vmul.f32 1.0, %v1382
    %v1385 = vrot.slane %v1059, 2
    %v1387 = vmul.f32 %v1363, %v1385
    %v1388 = vmul.f32 %v1344, %v1364
    %v1389 = vadd.f32 %v1387, %v1388
    %v1390 = vtanh.pop %v1389
    %v1391 = vmul.f32 %v1383, %v1390
    %v1393 = vrot.slane %v1325, 4
    %1395 = vmatpush.msra.mxu0 %v541
    %1396 = vmatpush.msra.mxu0 %v537
    %1397 = vmatpush.msra.mxu0 %v533
    %1398 = vmatpush.msra.mxu0 %v529
    %1399 = vmatpush.msra.mxu0 %v525
    %1400 = vmatpush.msra.mxu0 %v521
    %1401 = vmatpush.msra.mxu0 %v517
    %1402 = vmatpush.msra.mxu0 %v513
    %1403 = vmatpush.msra.mxu0 %v509
    %1404 = vmatpush.msra.mxu0 %v505
    %1405 = vmatpush.msra.mxu0 %v501
    %1406 = vmatpush.msra.mxu0 %v497
    %1407 = vmatpush.msra.mxu0 %v493
    %1408 = vmatpush.msra.mxu0 %v489
    %1409 = vmatpush.msra.mxu0 %v485
    %1410 = vmatpush.msra.mxu0 %v481
    %1411 = vmatmul.f32.gmra.mxu0 %v1393
    %v1412 = vpop.f32.mrf.mxu0
    %v1413 = vadd.f32 0.0, %v1412
    %1414 = vdwg.mxu0
    %1415 = vmatpush.msra.mxu0 %v542
    %1416 = vmatpush.msra.mxu0 %v538
    %1417 = vmatpush.msra.mxu0 %v534
    %1418 = vmatpush.msra.mxu0 %v530
    %1419 = vmatpush.msra.mxu0 %v526
    %1420 = vmatpush.msra.mxu0 %v522
    %1421 = vmatpush.msra.mxu0 %v518
    %1422 = vmatpush.msra.mxu0 %v514
    %1423 = vmatpush.msra.mxu0 %v510
    %1424 = vmatpush.msra.mxu0 %v506
    %1425 = vmatpush.msra.mxu0 %v502
    %1426 = vmatpush.msra.mxu0 %v498
    %1427 = vmatpush.msra.mxu0 %v494
    %1428 = vmatpush.msra.mxu0 %v490
    %1429 = vmatpush.msra.mxu0 %v486
    %1430 = vmatpush.msra.mxu0 %v482
    %1431 = vmatmul.f32.gmra.mxu0 %v1393
    %v1432 = vpop.f32.mrf.mxu0
    %v1433 = vadd.f32 0.0, %v1432
    %1434 = vdwg.mxu0
    %1435 = vmatpush.msra.mxu0 %v543
    %1436 = vmatpush.msra.mxu0 %v539
    %1437 = vmatpush.msra.mxu0 %v535
    %1438 = vmatpush.msra.mxu0 %v531
    %1439 = vmatpush.msra.mxu0 %v527
    %1440 = vmatpush.msra.mxu0 %v523
    %1441 = vmatpush.msra.mxu0 %v519
    %1442 = vmatpush.msra.mxu0 %v515
    %1443 = vmatpush.msra.mxu0 %v511
    %1444 = vmatpush.msra.mxu0 %v507
    %1445 = vmatpush.msra.mxu0 %v503
    %1446 = vmatpush.msra.mxu0 %v499
    %1447 = vmatpush.msra.mxu0 %v495
    %1448 = vmatpush.msra.mxu0 %v491
    %1449 = vmatpush.msra.mxu0 %v487
    %1450 = vmatpush.msra.mxu0 %v483
    %1451 = vmatmul.f32.gmra.mxu0 %v1393
    %v1452 = vpop.f32.mrf.mxu0
    %v1453 = vadd.f32 0.0, %v1452
    %1454 = vdwg.mxu0
    %1455 = vmatpush.msra.mxu0 %v544
    %1456 = vmatpush.msra.mxu0 %v540
    %1457 = vmatpush.msra.mxu0 %v536
    %1458 = vmatpush.msra.mxu0 %v532
    %1459 = vmatpush.msra.mxu0 %v528
    %1460 = vmatpush.msra.mxu0 %v524
    %1461 = vmatpush.msra.mxu0 %v520
    %1462 = vmatpush.msra.mxu0 %v516
    %1463 = vmatpush.msra.mxu0 %v512
    %1464 = vmatpush.msra.mxu0 %v508
    %1465 = vmatpush.msra.mxu0 %v504
    %1466 = vmatpush.msra.mxu0 %v500
    %1467 = vmatpush.msra.mxu0 %v496
    %1468 = vmatpush.msra.mxu0 %v492
    %1469 = vmatpush.msra.mxu0 %v488
    %1470 = vmatpush.msra.mxu0 %v484
    %1471 = vmatmul.f32.gmra.mxu0 %v1393
    %v1472 = vpop.f32.mrf.mxu0
    %v1473 = vadd.f32 0.0, %v1472
    %1474 = vdwg.mxu0
    %v1479 = vrot.slane %v1413, 2
    %v1480 = vrot.slane %v1433, 2
    %v1481 = vrot.slane %v1453, 2
    %v1482 = vrot.slane %v1473, 2
    %v1487 = vadd.f32 %v265, %v1479
    %v1488 = vadd.f32 %v288, %v1480
    %v1489 = vadd.f32 %v311, %v1481
    %v1490 = vadd.f32 %v334, %v1482
    %v1492 = vrot.slane %v1391, 2
    %1494 = vmatpush.msra.mxu0 %v605
    %1495 = vmatpush.msra.mxu0 %v601
    %1496 = vmatpush.msra.mxu0 %v597
    %1497 = vmatpush.msra.mxu0 %v593
    %1498 = vmatpush.msra.mxu0 %v589
    %1499 = vmatpush.msra.mxu0 %v585
    %1500 = vmatpush.msra.mxu0 %v581
    %1501 = vmatpush.msra.mxu0 %v577
    %1502 = vmatpush.msra.mxu0 %v573
    %1503 = vmatpush.msra.mxu0 %v569
    %1504 = vmatpush.msra.mxu0 %v565
    %1505 = vmatpush.msra.mxu0 %v561
    %1506 = vmatpush.msra.mxu0 %v557
    %1507 = vmatpush.msra.mxu0 %v553
    %1508 = vmatpush.msra.mxu0 %v549
    %1509 = vmatpush.msra.mxu0 %v545
    %1510 = vmatmul.f32.gmra.mxu0 %v1492
    %v1511 = vpop.f32.mrf.mxu0
    %v1512 = vadd.f32 0.0, %v1511
    %1513 = vdwg.mxu0
    %1514 = vmatpush.msra.mxu0 %v606
    %1515 = vmatpush.msra.mxu0 %v602
    %1516 = vmatpush.msra.mxu0 %v598
    %1517 = vmatpush.msra.mxu0 %v594
    %1518 = vmatpush.msra.mxu0 %v590
    %1519 = vmatpush.msra.mxu0 %v586
    %1520 = vmatpush.msra.mxu0 %v582
    %1521 = vmatpush.msra.mxu0 %v578
    %1522 = vmatpush.msra.mxu0 %v574
    %1523 = vmatpush.msra.mxu0 %v570
    %1524 = vmatpush.msra.mxu0 %v566
    %1525 = vmatpush.msra.mxu0 %v562
    %1526 = vmatpush.msra.mxu0 %v558
    %1527 = vmatpush.msra.mxu0 %v554
    %1528 = vmatpush.msra.mxu0 %v550
    %1529 = vmatpush.msra.mxu0 %v546
    %1530 = vmatmul.f32.gmra.mxu0 %v1492
    %v1531 = vpop.f32.mrf.mxu0
    %v1532 = vadd.f32 0.0, %v1531
    %1533 = vdwg.mxu0
    %1534 = vmatpush.msra.mxu0 %v607
    %1535 = vmatpush.msra.mxu0 %v603
    %1536 = vmatpush.msra.mxu0 %v599
    %1537 = vmatpush.msra.mxu0 %v595
    %1538 = vmatpush.msra.mxu0 %v591
    %1539 = vmatpush.msra.mxu0 %v587
    %1540 = vmatpush.msra.mxu0 %v583
    %1541 = vmatpush.msra.mxu0 %v579
    %1542 = vmatpush.msra.mxu0 %v575
    %1543 = vmatpush.msra.mxu0 %v571
    %1544 = vmatpush.msra.mxu0 %v567
    %1545 = vmatpush.msra.mxu0 %v563
    %1546 = vmatpush.msra.mxu0 %v559
    %1547 = vmatpush.msra.mxu0 %v555
    %1548 = vmatpush.msra.mxu0 %v551
    %1549 = vmatpush.msra.mxu0 %v547
    %1550 = vmatmul.f32.gmra.mxu0 %v1492
    %v1551 = vpop.f32.mrf.mxu0
    %v1552 = vadd.f32 0.0, %v1551
    %1553 = vdwg.mxu0
    %1554 = vmatpush.msra.mxu0 %v608
    %1555 = vmatpush.msra.mxu0 %v604
    %1556 = vmatpush.msra.mxu0 %v600
    %1557 = vmatpush.msra.mxu0 %v596
    %1558 = vmatpush.msra.mxu0 %v592
    %1559 = vmatpush.msra.mxu0 %v588
    %1560 = vmatpush.msra.mxu0 %v584
    %1561 = vmatpush.msra.mxu0 %v580
    %1562 = vmatpush.msra.mxu0 %v576
    %1563 = vmatpush.msra.mxu0 %v572
    %1564 = vmatpush.msra.mxu0 %v568
    %1565 = vmatpush.msra.mxu0 %v564
    %1566 = vmatpush.msra.mxu0 %v560
    %1567 = vmatpush.msra.mxu0 %v556
    %1568 = vmatpush.msra.mxu0 %v552
    %1569 = vmatpush.msra.mxu0 %v548
    %1570 = vmatmul.f32.gmra.mxu0 %v1492
    %v1571 = vpop.f32.mrf.mxu0
    %v1572 = vadd.f32 0.0, %v1571
    %1573 = vdwg.mxu0
    %v1574 = vadd.f32 %v410, %v1512
    %v1575 = vadd.f32 %v433, %v1532
    %v1576 = vadd.f32 %v456, %v1552
    %v1577 = vadd.f32 %v479, %v1572
    %v1578 = vxor.u32 %v1487, 2147483648
    %v1579 = vmul.f32 %v1578, 1.442695
    %v1580 = vpow.pop %v1579
    %v1581 = vadd.f32 %v1580, 1.0
    %v1582 = vrcp.pop %v1581
    %v1583 = vmul.f32 %v1581, %v1582
    %v1584 = vsub.f32 1.0, %v1583
    %v1585 = vmul.f32 %v1582, %v1584
    %v1586 = vadd.f32 %v1582, %v1585
    %vm1587 = vweird.f32 %v1581
    %vm1588 = vweird.f32 %v1582
    %vm1589 = vmor %vm1587, %vm1588
    %v1590 = vsel %vm1589, %v1582, %v1586
    %v1591 = vand.u32 2147483647, %v1581
    %vm1592 = vcmp.eq.f32.partialorder %v1591, 8.507059e+37
    %v1593 = vand.u32 %v1581, 2147483648
    %v1594 = vor.u32 1.1754944e-38, %v1593
    %v1595 = vsel %vm1592, %v1594, %v1590
    %v1596 = vmul.f32 1.0, %v1595
    %v1597 = vxor.u32 %v1488, 2147483648
    %v1598 = vmul.f32 %v1597, 1.442695
    %v1599 = vpow.pop %v1598
    %v1600 = vadd.f32 %v1599, 1.0
    %v1601 = vrcp.pop %v1600
    %v1602 = vmul.f32 %v1600, %v1601
    %v1603 = vsub.f32 1.0, %v1602
    %v1604 = vmul.f32 %v1601, %v1603
    %v1605 = vadd.f32 %v1601, %v1604
    %vm1606 = vweird.f32 %v1600
    %vm1607 = vweird.f32 %v1601
    %vm1608 = vmor %vm1606, %vm1607
    %v1609 = vsel %vm1608, %v1601, %v1605
    %v1610 = vand.u32 2147483647, %v1600
    %vm1611 = vcmp.eq.f32.partialorder %v1610, 8.507059e+37
    %v1612 = vand.u32 %v1600, 2147483648
    %v1613 = vor.u32 1.1754944e-38, %v1612
    %v1614 = vsel %vm1611, %v1613, %v1609
    %v1615 = vmul.f32 1.0, %v1614
    %v1616 = vtanh.pop %v1489
    %v1617 = vxor.u32 %v1490, 2147483648
    %v1618 = vmul.f32 %v1617, 1.442695
    %v1619 = vpow.pop %v1618
    %v1620 = vadd.f32 %v1619, 1.0
    %v1621 = vrcp.pop %v1620
    %v1622 = vmul.f32 %v1620, %v1621
    %v1623 = vsub.f32 1.0, %v1622
    %v1624 = vmul.f32 %v1621, %v1623
    %v1625 = vadd.f32 %v1621, %v1624
    %vm1626 = vweird.f32 %v1620
    %vm1627 = vweird.f32 %v1621
    %vm1628 = vmor %vm1626, %vm1627
    %v1629 = vsel %vm1628, %v1621, %v1625
    %v1630 = vand.u32 2147483647, %v1620
    %vm1631 = vcmp.eq.f32.partialorder %v1630, 8.507059e+37
    %v1632 = vand.u32 %v1620, 2147483648
    %v1633 = vor.u32 1.1754944e-38, %v1632
    %v1634 = vsel %vm1631, %v1633, %v1629
    %v1635 = vmul.f32 1.0, %v1634
    %v1637 = vrot.slane %v1323, 6
    %v1639 = vmul.f32 %v1615, %v1637
    %v1640 = vmul.f32 %v1596, %v1616
    %v1641 = vadd.f32 %v1639, %v1640
    %v1642 = vtanh.pop %v1641
    %v1643 = vmul.f32 %v1635, %v1642
    %v1644 = vxor.u32 %v1574, 2147483648
    %v1645 = vmul.f32 %v1644, 1.442695
    %v1646 = vpow.pop %v1645
    %v1647 = vadd.f32 %v1646, 1.0
    %v1648 = vrcp.pop %v1647
    %v1649 = vmul.f32 %v1647, %v1648
    %v1650 = vsub.f32 1.0, %v1649
    %v1651 = vmul.f32 %v1648, %v1650
    %v1652 = vadd.f32 %v1648, %v1651
    %vm1653 = vweird.f32 %v1647
    %vm1654 = vweird.f32 %v1648
    %vm1655 = vmor %vm1653, %vm1654
    %v1656 = vsel %vm1655, %v1648, %v1652
    %v1657 = vand.u32 2147483647, %v1647
    %vm1658 = vcmp.eq.f32.partialorder %v1657, 8.507059e+37
    %v1659 = vand.u32 %v1647, 2147483648
    %v1660 = vor.u32 1.1754944e-38, %v1659
    %v1661 = vsel %vm1658, %v1660, %v1656
    %v1662 = vmul.f32 1.0, %v1661
    %v1663 = vxor.u32 %v1575, 2147483648
    %v1664 = vmul.f32 %v1663, 1.442695
    %v1665 = vpow.pop %v1664
    %v1666 = vadd.f32 %v1665, 1.0
    %v1667 = vrcp.pop %v1666
    %v1668 = vmul.f32 %v1666, %v1667
    %v1669 = vsub.f32 1.0, %v1668
    %v1670 = vmul.f32 %v1667, %v1669
    %v1671 = vadd.f32 %v1667, %v1670
    %vm1672 = vweird.f32 %v1666
    %vm1673 = vweird.f32 %v1667
    %vm1674 = vmor %vm1672, %vm1673
    %v1675 = vsel %vm1674, %v1667, %v1671
    %v1676 = vand.u32 2147483647, %v1666
    %vm1677 = vcmp.eq.f32.partialorder %v1676, 8.507059e+37
    %v1678 = vand.u32 %v1666, 2147483648
    %v1679 = vor.u32 1.1754944e-38, %v1678
    %v1680 = vsel %vm1677, %v1679, %v1675
    %v1681 = vmul.f32 1.0, %v1680
    %v1682 = vtanh.pop %v1576
    %v1683 = vxor.u32 %v1577, 2147483648
    %v1684 = vmul.f32 %v1683, 1.442695
    %v1685 = vpow.pop %v1684
    %v1686 = vadd.f32 %v1685, 1.0
    %v1687 = vrcp.pop %v1686
    %v1688 = vmul.f32 %v1686, %v1687
    %v1689 = vsub.f32 1.0, %v1688
    %v1690 = vmul.f32 %v1687, %v1689
    %v1691 = vadd.f32 %v1687, %v1690
    %vm1692 = vweird.f32 %v1686
    %vm1693 = vweird.f32 %v1687
    %vm1694 = vmor %vm1692, %vm1693
    %v1695 = vsel %vm1694, %v1687, %v1691
    %v1696 = vand.u32 2147483647, %v1686
    %vm1697 = vcmp.eq.f32.partialorder %v1696, 8.507059e+37
    %v1698 = vand.u32 %v1686, 2147483648
    %v1699 = vor.u32 1.1754944e-38, %v1698
    %v1700 = vsel %vm1697, %v1699, %v1695
    %v1701 = vmul.f32 1.0, %v1700
    %v1703 = vrot.slane %v1389, 2
    %v1705 = vmul.f32 %v1681, %v1703
    %v1706 = vmul.f32 %v1662, %v1682
    %v1707 = vadd.f32 %v1705, %v1706
    %v1708 = vtanh.pop %v1707
    %v1709 = vmul.f32 %v1701, %v1708
    %v1711 = vrot.slane %v1643, 6
    %1713 = vmatpush.msra.mxu0 %v541
    %1714 = vmatpush.msra.mxu0 %v537
    %1715 = vmatpush.msra.mxu0 %v533
    %1716 = vmatpush.msra.mxu0 %v529
    %1717 = vmatpush.msra.mxu0 %v525
    %1718 = vmatpush.msra.mxu0 %v521
    %1719 = vmatpush.msra.mxu0 %v517
    %1720 = vmatpush.msra.mxu0 %v513
    %1721 = vmatpush.msra.mxu0 %v509
    %1722 = vmatpush.msra.mxu0 %v505
    %1723 = vmatpush.msra.mxu0 %v501
    %1724 = vmatpush.msra.mxu0 %v497
    %1725 = vmatpush.msra.mxu0 %v493
    %1726 = vmatpush.msra.mxu0 %v489
    %1727 = vmatpush.msra.mxu0 %v485
    %1728 = vmatpush.msra.mxu0 %v481
    %1729 = vmatmul.f32.gmra.mxu0 %v1711
    %v1730 = vpop.f32.mrf.mxu0
    %v1731 = vadd.f32 0.0, %v1730
    %1732 = vdwg.mxu0
    %1733 = vmatpush.msra.mxu0 %v542
    %1734 = vmatpush.msra.mxu0 %v538
    %1735 = vmatpush.msra.mxu0 %v534
    %1736 = vmatpush.msra.mxu0 %v530
    %1737 = vmatpush.msra.mxu0 %v526
    %1738 = vmatpush.msra.mxu0 %v522
    %1739 = vmatpush.msra.mxu0 %v518
    %1740 = vmatpush.msra.mxu0 %v514
    %1741 = vmatpush.msra.mxu0 %v510
    %1742 = vmatpush.msra.mxu0 %v506
    %1743 = vmatpush.msra.mxu0 %v502
    %1744 = vmatpush.msra.mxu0 %v498
    %1745 = vmatpush.msra.mxu0 %v494
    %1746 = vmatpush.msra.mxu0 %v490
    %1747 = vmatpush.msra.mxu0 %v486
    %1748 = vmatpush.msra.mxu0 %v482
    %1749 = vmatmul.f32.gmra.mxu0 %v1711
    %v1750 = vpop.f32.mrf.mxu0
    %v1751 = vadd.f32 0.0, %v1750
    %1752 = vdwg.mxu0
    %1753 = vmatpush.msra.mxu0 %v543
    %1754 = vmatpush.msra.mxu0 %v539
    %1755 = vmatpush.msra.mxu0 %v535
    %1756 = vmatpush.msra.mxu0 %v531
    %1757 = vmatpush.msra.mxu0 %v527
    %1758 = vmatpush.msra.mxu0 %v523
    %1759 = vmatpush.msra.mxu0 %v519
    %1760 = vmatpush.msra.mxu0 %v515
    %1761 = vmatpush.msra.mxu0 %v511
    %1762 = vmatpush.msra.mxu0 %v507
    %1763 = vmatpush.msra.mxu0 %v503
    %1764 = vmatpush.msra.mxu0 %v499
    %1765 = vmatpush.msra.mxu0 %v495
    %1766 = vmatpush.msra.mxu0 %v491
    %1767 = vmatpush.msra.mxu0 %v487
    %1768 = vmatpush.msra.mxu0 %v483
    %1769 = vmatmul.f32.gmra.mxu0 %v1711
    %v1770 = vpop.f32.mrf.mxu0
    %v1771 = vadd.f32 0.0, %v1770
    %1772 = vdwg.mxu0
    %1773 = vmatpush.msra.mxu0 %v544
    %1774 = vmatpush.msra.mxu0 %v540
    %1775 = vmatpush.msra.mxu0 %v536
    %1776 = vmatpush.msra.mxu0 %v532
    %1777 = vmatpush.msra.mxu0 %v528
    %1778 = vmatpush.msra.mxu0 %v524
    %1779 = vmatpush.msra.mxu0 %v520
    %1780 = vmatpush.msra.mxu0 %v516
    %1781 = vmatpush.msra.mxu0 %v512
    %1782 = vmatpush.msra.mxu0 %v508
    %1783 = vmatpush.msra.mxu0 %v504
    %1784 = vmatpush.msra.mxu0 %v500
    %1785 = vmatpush.msra.mxu0 %v496
    %1786 = vmatpush.msra.mxu0 %v492
    %1787 = vmatpush.msra.mxu0 %v488
    %1788 = vmatpush.msra.mxu0 %v484
    %1789 = vmatmul.f32.gmra.mxu0 %v1711
    %v1790 = vpop.f32.mrf.mxu0
    %v1791 = vadd.f32 0.0, %v1790
    %1792 = vdwg.mxu0
    %v1793 = vadd.f32 %v268, %v1731
    %v1794 = vadd.f32 %v291, %v1751
    %v1795 = vadd.f32 %v314, %v1771
    %v1796 = vadd.f32 %v337, %v1791
    %1797 = vmatpush.msra.mxu0 %v605
    %1798 = vmatpush.msra.mxu0 %v601
    %1799 = vmatpush.msra.mxu0 %v597
    %1800 = vmatpush.msra.mxu0 %v593
    %1801 = vmatpush.msra.mxu0 %v589
    %1802 = vmatpush.msra.mxu0 %v585
    %1803 = vmatpush.msra.mxu0 %v581
    %1804 = vmatpush.msra.mxu0 %v577
    %1805 = vmatpush.msra.mxu0 %v573
    %1806 = vmatpush.msra.mxu0 %v569
    %1807 = vmatpush.msra.mxu0 %v565
    %1808 = vmatpush.msra.mxu0 %v561
    %1809 = vmatpush.msra.mxu0 %v557
    %1810 = vmatpush.msra.mxu0 %v553
    %1811 = vmatpush.msra.mxu0 %v549
    %1812 = vmatpush.msra.mxu0 %v545
    %1813 = vmatmul.f32.gmra.mxu0 %v1709
    %v1814 = vpop.f32.mrf.mxu0
    %v1815 = vadd.f32 0.0, %v1814
    %1816 = vdwg.mxu0
    %1817 = vmatpush.msra.mxu0 %v606
    %1818 = vmatpush.msra.mxu0 %v602
    %1819 = vmatpush.msra.mxu0 %v598
    %1820 = vmatpush.msra.mxu0 %v594
    %1821 = vmatpush.msra.mxu0 %v590
    %1822 = vmatpush.msra.mxu0 %v586
    %1823 = vmatpush.msra.mxu0 %v582
    %1824 = vmatpush.msra.mxu0 %v578
    %1825 = vmatpush.msra.mxu0 %v574
    %1826 = vmatpush.msra.mxu0 %v570
    %1827 = vmatpush.msra.mxu0 %v566
    %1828 = vmatpush.msra.mxu0 %v562
    %1829 = vmatpush.msra.mxu0 %v558
    %1830 = vmatpush.msra.mxu0 %v554
    %1831 = vmatpush.msra.mxu0 %v550
    %1832 = vmatpush.msra.mxu0 %v546
    %1833 = vmatmul.f32.gmra.mxu0 %v1709
    %v1834 = vpop.f32.mrf.mxu0
    %v1835 = vadd.f32 0.0, %v1834
    %1836 = vdwg.mxu0
    %1837 = vmatpush.msra.mxu0 %v607
    %1838 = vmatpush.msra.mxu0 %v603
    %1839 = vmatpush.msra.mxu0 %v599
    %1840 = vmatpush.msra.mxu0 %v595
    %1841 = vmatpush.msra.mxu0 %v591
    %1842 = vmatpush.msra.mxu0 %v587
    %1843 = vmatpush.msra.mxu0 %v583
    %1844 = vmatpush.msra.mxu0 %v579
    %1845 = vmatpush.msra.mxu0 %v575
    %1846 = vmatpush.msra.mxu0 %v571
    %1847 = vmatpush.msra.mxu0 %v567
    %1848 = vmatpush.msra.mxu0 %v563
    %1849 = vmatpush.msra.mxu0 %v559
    %1850 = vmatpush.msra.mxu0 %v555
    %1851 = vmatpush.msra.mxu0 %v551
    %1852 = vmatpush.msra.mxu0 %v547
    %1853 = vmatmul.f32.gmra.mxu0 %v1709
    %v1854 = vpop.f32.mrf.mxu0
    %v1855 = vadd.f32 0.0, %v1854
    %1856 = vdwg.mxu0
    %1857 = vmatpush.msra.mxu0 %v608
    %1858 = vmatpush.msra.mxu0 %v604
    %1859 = vmatpush.msra.mxu0 %v600
    %1860 = vmatpush.msra.mxu0 %v596
    %1861 = vmatpush.msra.mxu0 %v592
    %1862 = vmatpush.msra.mxu0 %v588
    %1863 = vmatpush.msra.mxu0 %v584
    %1864 = vmatpush.msra.mxu0 %v580
    %1865 = vmatpush.msra.mxu0 %v576
    %1866 = vmatpush.msra.mxu0 %v572
    %1867 = vmatpush.msra.mxu0 %v568
    %1868 = vmatpush.msra.mxu0 %v564
    %1869 = vmatpush.msra.mxu0 %v560
    %1870 = vmatpush.msra.mxu0 %v556
    %1871 = vmatpush.msra.mxu0 %v552
    %1872 = vmatpush.msra.mxu0 %v548
    %1873 = vmatmul.f32.gmra.mxu0 %v1709
    %v1874 = vpop.f32.mrf.mxu0
    %v1875 = vadd.f32 0.0, %v1874
    %1876 = vdwg.mxu0
    %v1881 = vrot.slane %v1815, 2
    %v1882 = vrot.slane %v1835, 2
    %v1883 = vrot.slane %v1855, 2
    %v1884 = vrot.slane %v1875, 2
    %v1889 = vadd.f32 %v407, %v1881
    %v1890 = vadd.f32 %v430, %v1882
    %v1891 = vadd.f32 %v453, %v1883
    %v1892 = vadd.f32 %v476, %v1884
    %v1893 = vxor.u32 %v1793, 2147483648
    %v1894 = vmul.f32 %v1893, 1.442695
    %v1895 = vpow.pop %v1894
    %v1896 = vadd.f32 %v1895, 1.0
    %v1897 = vrcp.pop %v1896
    %v1898 = vmul.f32 %v1896, %v1897
    %v1899 = vsub.f32 1.0, %v1898
    %v1900 = vmul.f32 %v1897, %v1899
    %v1901 = vadd.f32 %v1897, %v1900
    %vm1902 = vweird.f32 %v1896
    %vm1903 = vweird.f32 %v1897
    %vm1904 = vmor %vm1902, %vm1903
    %v1905 = vsel %vm1904, %v1897, %v1901
    %v1906 = vand.u32 2147483647, %v1896
    %vm1907 = vcmp.eq.f32.partialorder %v1906, 8.507059e+37
    %v1908 = vand.u32 %v1896, 2147483648
    %v1909 = vor.u32 1.1754944e-38, %v1908
    %v1910 = vsel %vm1907, %v1909, %v1905
    %v1911 = vmul.f32 1.0, %v1910
    %v1912 = vxor.u32 %v1794, 2147483648
    %v1913 = vmul.f32 %v1912, 1.442695
    %v1914 = vpow.pop %v1913
    %v1915 = vadd.f32 %v1914, 1.0
    %v1916 = vrcp.pop %v1915
    %v1917 = vmul.f32 %v1915, %v1916
    %v1918 = vsub.f32 1.0, %v1917
    %v1919 = vmul.f32 %v1916, %v1918
    %v1920 = vadd.f32 %v1916, %v1919
    %vm1921 = vweird.f32 %v1915
    %vm1922 = vweird.f32 %v1916
    %vm1923 = vmor %vm1921, %vm1922
    %v1924 = vsel %vm1923, %v1916, %v1920
    %v1925 = vand.u32 2147483647, %v1915
    %vm1926 = vcmp.eq.f32.partialorder %v1925, 8.507059e+37
    %v1927 = vand.u32 %v1915, 2147483648
    %v1928 = vor.u32 1.1754944e-38, %v1927
    %v1929 = vsel %vm1926, %v1928, %v1924
    %v1930 = vmul.f32 1.0, %v1929
    %v1931 = vtanh.pop %v1795
    %v1932 = vxor.u32 %v1796, 2147483648
    %v1933 = vmul.f32 %v1932, 1.442695
    %v1934 = vpow.pop %v1933
    %v1935 = vadd.f32 %v1934, 1.0
    %v1936 = vrcp.pop %v1935
    %v1937 = vmul.f32 %v1935, %v1936
    %v1938 = vsub.f32 1.0, %v1937
    %v1939 = vmul.f32 %v1936, %v1938
    %v1940 = vadd.f32 %v1936, %v1939
    %vm1941 = vweird.f32 %v1935
    %vm1942 = vweird.f32 %v1936
    %vm1943 = vmor %vm1941, %vm1942
    %v1944 = vsel %vm1943, %v1936, %v1940
    %v1945 = vand.u32 2147483647, %v1935
    %vm1946 = vcmp.eq.f32.partialorder %v1945, 8.507059e+37
    %v1947 = vand.u32 %v1935, 2147483648
    %v1948 = vor.u32 1.1754944e-38, %v1947
    %v1949 = vsel %vm1946, %v1948, %v1944
    %v1950 = vmul.f32 1.0, %v1949
    %v1952 = vrot.slane %v1641, 6
    %v1954 = vmul.f32 %v1930, %v1952
    %v1955 = vmul.f32 %v1911, %v1931
    %v1956 = vadd.f32 %v1954, %v1955
    %v1957 = vtanh.pop %v1956
    %v1958 = vmul.f32 %v1950, %v1957
    %v1959 = vxor.u32 %v1889, 2147483648
    %v1960 = vmul.f32 %v1959, 1.442695
    %v1961 = vpow.pop %v1960
    %v1962 = vadd.f32 %v1961, 1.0
    %v1963 = vrcp.pop %v1962
    %v1964 = vmul.f32 %v1962, %v1963
    %v1965 = vsub.f32 1.0, %v1964
    %v1966 = vmul.f32 %v1963, %v1965
    %v1967 = vadd.f32 %v1963, %v1966
    %vm1968 = vweird.f32 %v1962
    %vm1969 = vweird.f32 %v1963
    %vm1970 = vmor %vm1968, %vm1969
    %v1971 = vsel %vm1970, %v1963, %v1967
    %v1972 = vand.u32 2147483647, %v1962
    %vm1973 = vcmp.eq.f32.partialorder %v1972, 8.507059e+37
    %v1974 = vand.u32 %v1962, 2147483648
    %v1975 = vor.u32 1.1754944e-38, %v1974
    %v1976 = vsel %vm1973, %v1975, %v1971
    %v1977 = vmul.f32 1.0, %v1976
    %v1978 = vxor.u32 %v1890, 2147483648
    %v1979 = vmul.f32 %v1978, 1.442695
    %v1980 = vpow.pop %v1979
    %v1981 = vadd.f32 %v1980, 1.0
    %v1982 = vrcp.pop %v1981
    %v1983 = vmul.f32 %v1981, %v1982
    %v1984 = vsub.f32 1.0, %v1983
    %v1985 = vmul.f32 %v1982, %v1984
    %v1986 = vadd.f32 %v1982, %v1985
    %vm1987 = vweird.f32 %v1981
    %vm1988 = vweird.f32 %v1982
    %vm1989 = vmor %vm1987, %vm1988
    %v1990 = vsel %vm1989, %v1982, %v1986
    %v1991 = vand.u32 2147483647, %v1981
    %vm1992 = vcmp.eq.f32.partialorder %v1991, 8.507059e+37
    %v1993 = vand.u32 %v1981, 2147483648
    %v1994 = vor.u32 1.1754944e-38, %v1993
    %v1995 = vsel %vm1992, %v1994, %v1990
    %v1996 = vmul.f32 1.0, %v1995
    %v1997 = vtanh.pop %v1891
    %v1998 = vxor.u32 %v1892, 2147483648
    %v1999 = vmul.f32 %v1998, 1.442695
    %v2000 = vpow.pop %v1999
    %v2001 = vadd.f32 %v2000, 1.0
    %v2002 = vrcp.pop %v2001
    %v2003 = vmul.f32 %v2001, %v2002
    %v2004 = vsub.f32 1.0, %v2003
    %v2005 = vmul.f32 %v2002, %v2004
    %v2006 = vadd.f32 %v2002, %v2005
    %vm2007 = vweird.f32 %v2001
    %vm2008 = vweird.f32 %v2002
    %vm2009 = vmor %vm2007, %vm2008
    %v2010 = vsel %vm2009, %v2002, %v2006
    %v2011 = vand.u32 2147483647, %v2001
    %vm2012 = vcmp.eq.f32.partialorder %v2011, 8.507059e+37
    %v2013 = vand.u32 %v2001, 2147483648
    %v2014 = vor.u32 1.1754944e-38, %v2013
    %v2015 = vsel %vm2012, %v2014, %v2010
    %v2016 = vmul.f32 1.0, %v2015
    %v2018 = vrot.slane %v1707, 2
    %v2020 = vmul.f32 %v1996, %v2018
    %v2021 = vmul.f32 %v1977, %v1997
    %v2022 = vadd.f32 %v2020, %v2021
    %v2023 = vtanh.pop %v2022
    %v2024 = vmul.f32 %v2016, %v2023
    %2025 = vmatpush.msra.mxu0 %v541
    %2026 = vmatpush.msra.mxu0 %v537
    %2027 = vmatpush.msra.mxu0 %v533
    %2028 = vmatpush.msra.mxu0 %v529
    %2029 = vmatpush.msra.mxu0 %v525
    %2030 = vmatpush.msra.mxu0 %v521
    %2031 = vmatpush.msra.mxu0 %v517
    %2032 = vmatpush.msra.mxu0 %v513
    %2033 = vmatpush.msra.mxu0 %v509
    %2034 = vmatpush.msra.mxu0 %v505
    %2035 = vmatpush.msra.mxu0 %v501
    %2036 = vmatpush.msra.mxu0 %v497
    %2037 = vmatpush.msra.mxu0 %v493
    %2038 = vmatpush.msra.mxu0 %v489
    %2039 = vmatpush.msra.mxu0 %v485
    %2040 = vmatpush.msra.mxu0 %v481
    %2041 = vmatmul.f32.gmra.mxu0 %v1958
    %v2042 = vpop.f32.mrf.mxu0
    %v2043 = vadd.f32 0.0, %v2042
    %2044 = vdwg.mxu0
    %2045 = vmatpush.msra.mxu0 %v542
    %2046 = vmatpush.msra.mxu0 %v538
    %2047 = vmatpush.msra.mxu0 %v534
    %2048 = vmatpush.msra.mxu0 %v530
    %2049 = vmatpush.msra.mxu0 %v526
    %2050 = vmatpush.msra.mxu0 %v522
    %2051 = vmatpush.msra.mxu0 %v518
    %2052 = vmatpush.msra.mxu0 %v514
    %2053 = vmatpush.msra.mxu0 %v510
    %2054 = vmatpush.msra.mxu0 %v506
    %2055 = vmatpush.msra.mxu0 %v502
    %2056 = vmatpush.msra.mxu0 %v498
    %2057 = vmatpush.msra.mxu0 %v494
    %2058 = vmatpush.msra.mxu0 %v490
    %2059 = vmatpush.msra.mxu0 %v486
    %2060 = vmatpush.msra.mxu0 %v482
    %2061 = vmatmul.f32.gmra.mxu0 %v1958
    %v2062 = vpop.f32.mrf.mxu0
    %v2063 = vadd.f32 0.0, %v2062
    %2064 = vdwg.mxu0
    %2065 = vmatpush.msra.mxu0 %v543
    %2066 = vmatpush.msra.mxu0 %v539
    %2067 = vmatpush.msra.mxu0 %v535
    %2068 = vmatpush.msra.mxu0 %v531
    %2069 = vmatpush.msra.mxu0 %v527
    %2070 = vmatpush.msra.mxu0 %v523
    %2071 = vmatpush.msra.mxu0 %v519
    %2072 = vmatpush.msra.mxu0 %v515
    %2073 = vmatpush.msra.mxu0 %v511
    %2074 = vmatpush.msra.mxu0 %v507
    %2075 = vmatpush.msra.mxu0 %v503
    %2076 = vmatpush.msra.mxu0 %v499
    %2077 = vmatpush.msra.mxu0 %v495
    %2078 = vmatpush.msra.mxu0 %v491
    %2079 = vmatpush.msra.mxu0 %v487
    %2080 = vmatpush.msra.mxu0 %v483
    %2081 = vmatmul.f32.gmra.mxu0 %v1958
    %v2082 = vpop.f32.mrf.mxu0
    %v2083 = vadd.f32 0.0, %v2082
    %2084 = vdwg.mxu0
    %2085 = vmatpush.msra.mxu0 %v544
    %2086 = vmatpush.msra.mxu0 %v540
    %2087 = vmatpush.msra.mxu0 %v536
    %2088 = vmatpush.msra.mxu0 %v532
    %2089 = vmatpush.msra.mxu0 %v528
    %2090 = vmatpush.msra.mxu0 %v524
    %2091 = vmatpush.msra.mxu0 %v520
    %2092 = vmatpush.msra.mxu0 %v516
    %2093 = vmatpush.msra.mxu0 %v512
    %2094 = vmatpush.msra.mxu0 %v508
    %2095 = vmatpush.msra.mxu0 %v504
    %2096 = vmatpush.msra.mxu0 %v500
    %2097 = vmatpush.msra.mxu0 %v496
    %2098 = vmatpush.msra.mxu0 %v492
    %2099 = vmatpush.msra.mxu0 %v488
    %2100 = vmatpush.msra.mxu0 %v484
    %2101 = vmatmul.f32.gmra.mxu0 %v1958
    %v2102 = vpop.f32.mrf.mxu0
    %v2103 = vadd.f32 0.0, %v2102
    %2104 = vdwg.mxu0
    %v2109 = vrot.slane %v2043, 6
    %v2110 = vrot.slane %v2063, 6
    %v2111 = vrot.slane %v2083, 6
    %v2112 = vrot.slane %v2103, 6
    %v2117 = vadd.f32 %v268, %v2109
    %v2118 = vadd.f32 %v291, %v2110
    %v2119 = vadd.f32 %v314, %v2111
    %v2120 = vadd.f32 %v337, %v2112
    %v2122 = vrot.slane %v2024, 6
    %2124 = vmatpush.msra.mxu0 %v605
    %2125 = vmatpush.msra.mxu0 %v601
    %2126 = vmatpush.msra.mxu0 %v597
    %2127 = vmatpush.msra.mxu0 %v593
    %2128 = vmatpush.msra.mxu0 %v589
    %2129 = vmatpush.msra.mxu0 %v585
    %2130 = vmatpush.msra.mxu0 %v581
    %2131 = vmatpush.msra.mxu0 %v577
    %2132 = vmatpush.msra.mxu0 %v573
    %2133 = vmatpush.msra.mxu0 %v569
    %2134 = vmatpush.msra.mxu0 %v565
    %2135 = vmatpush.msra.mxu0 %v561
    %2136 = vmatpush.msra.mxu0 %v557
    %2137 = vmatpush.msra.mxu0 %v553
    %2138 = vmatpush.msra.mxu0 %v549
    %2139 = vmatpush.msra.mxu0 %v545
    %2140 = vmatmul.f32.gmra.mxu0 %v2122
    %v2141 = vpop.f32.mrf.mxu0
    %v2142 = vadd.f32 0.0, %v2141
    %2143 = vdwg.mxu0
    %2144 = vmatpush.msra.mxu0 %v606
    %2145 = vmatpush.msra.mxu0 %v602
    %2146 = vmatpush.msra.mxu0 %v598
    %2147 = vmatpush.msra.mxu0 %v594
    %2148 = vmatpush.msra.mxu0 %v590
    %2149 = vmatpush.msra.mxu0 %v586
    %2150 = vmatpush.msra.mxu0 %v582
    %2151 = vmatpush.msra.mxu0 %v578
    %2152 = vmatpush.msra.mxu0 %v574
    %2153 = vmatpush.msra.mxu0 %v570
    %2154 = vmatpush.msra.mxu0 %v566
    %2155 = vmatpush.msra.mxu0 %v562
    %2156 = vmatpush.msra.mxu0 %v558
    %2157 = vmatpush.msra.mxu0 %v554
    %2158 = vmatpush.msra.mxu0 %v550
    %2159 = vmatpush.msra.mxu0 %v546
    %2160 = vmatmul.f32.gmra.mxu0 %v2122
    %v2161 = vpop.f32.mrf.mxu0
    %v2162 = vadd.f32 0.0, %v2161
    %2163 = vdwg.mxu0
    %2164 = vmatpush.msra.mxu0 %v607
    %2165 = vmatpush.msra.mxu0 %v603
    %2166 = vmatpush.msra.mxu0 %v599
    %2167 = vmatpush.msra.mxu0 %v595
    %2168 = vmatpush.msra.mxu0 %v591
    %2169 = vmatpush.msra.mxu0 %v587
    %2170 = vmatpush.msra.mxu0 %v583
    %2171 = vmatpush.msra.mxu0 %v579
    %2172 = vmatpush.msra.mxu0 %v575
    %2173 = vmatpush.msra.mxu0 %v571
    %2174 = vmatpush.msra.mxu0 %v567
    %2175 = vmatpush.msra.mxu0 %v563
    %2176 = vmatpush.msra.mxu0 %v559
    %2177 = vmatpush.msra.mxu0 %v555
    %2178 = vmatpush.msra.mxu0 %v551
    %2179 = vmatpush.msra.mxu0 %v547
    %2180 = vmatmul.f32.gmra.mxu0 %v2122
    %v2181 = vpop.f32.mrf.mxu0
    %v2182 = vadd.f32 0.0, %v2181
    %2183 = vdwg.mxu0
    %2184 = vmatpush.msra.mxu0 %v608
    %2185 = vmatpush.msra.mxu0 %v604
    %2186 = vmatpush.msra.mxu0 %v600
    %2187 = vmatpush.msra.mxu0 %v596
    %2188 = vmatpush.msra.mxu0 %v592
    %2189 = vmatpush.msra.mxu0 %v588
    %2190 = vmatpush.msra.mxu0 %v584
    %2191 = vmatpush.msra.mxu0 %v580
    %2192 = vmatpush.msra.mxu0 %v576
    %2193 = vmatpush.msra.mxu0 %v572
    %2194 = vmatpush.msra.mxu0 %v568
    %2195 = vmatpush.msra.mxu0 %v564
    %2196 = vmatpush.msra.mxu0 %v560
    %2197 = vmatpush.msra.mxu0 %v556
    %2198 = vmatpush.msra.mxu0 %v552
    %2199 = vmatpush.msra.mxu0 %v548
    %2200 = vmatmul.f32.gmra.mxu0 %v2122
    %v2201 = vpop.f32.mrf.mxu0
    %v2202 = vadd.f32 0.0, %v2201
    %2203 = vdwg.mxu0
    %v2208 = vrot.slane %v2142, 4
    %v2209 = vrot.slane %v2162, 4
    %v2210 = vrot.slane %v2182, 4
    %v2211 = vrot.slane %v2202, 4
    %v2216 = vadd.f32 %v407, %v2208
    %v2217 = vadd.f32 %v430, %v2209
    %v2218 = vadd.f32 %v453, %v2210
    %v2219 = vadd.f32 %v476, %v2211
    %v2220 = vxor.u32 %v2117, 2147483648
    %v2221 = vmul.f32 %v2220, 1.442695
    %v2222 = vpow.pop %v2221
    %v2223 = vadd.f32 %v2222, 1.0
    %v2224 = vrcp.pop %v2223
    %v2225 = vmul.f32 %v2223, %v2224
    %v2226 = vsub.f32 1.0, %v2225
    %v2227 = vmul.f32 %v2224, %v2226
    %v2228 = vadd.f32 %v2224, %v2227
    %vm2229 = vweird.f32 %v2223
    %vm2230 = vweird.f32 %v2224
    %vm2231 = vmor %vm2229, %vm2230
    %v2232 = vsel %vm2231, %v2224, %v2228
    %v2233 = vand.u32 2147483647, %v2223
    %vm2234 = vcmp.eq.f32.partialorder %v2233, 8.507059e+37
    %v2235 = vand.u32 %v2223, 2147483648
    %v2236 = vor.u32 1.1754944e-38, %v2235
    %v2237 = vsel %vm2234, %v2236, %v2232
    %v2238 = vmul.f32 1.0, %v2237
    %v2239 = vxor.u32 %v2118, 2147483648
    %v2240 = vmul.f32 %v2239, 1.442695
    %v2241 = vpow.pop %v2240
    %v2242 = vadd.f32 %v2241, 1.0
    %v2243 = vrcp.pop %v2242
    %v2244 = vmul.f32 %v2242, %v2243
    %v2245 = vsub.f32 1.0, %v2244
    %v2246 = vmul.f32 %v2243, %v2245
    %v2247 = vadd.f32 %v2243, %v2246
    %vm2248 = vweird.f32 %v2242
    %vm2249 = vweird.f32 %v2243
    %vm2250 = vmor %vm2248, %vm2249
    %v2251 = vsel %vm2250, %v2243, %v2247
    %v2252 = vand.u32 2147483647, %v2242
    %vm2253 = vcmp.eq.f32.partialorder %v2252, 8.507059e+37
    %v2254 = vand.u32 %v2242, 2147483648
    %v2255 = vor.u32 1.1754944e-38, %v2254
    %v2256 = vsel %vm2253, %v2255, %v2251
    %v2257 = vmul.f32 1.0, %v2256
    %v2258 = vtanh.pop %v2119
    %v2259 = vxor.u32 %v2120, 2147483648
    %v2260 = vmul.f32 %v2259, 1.442695
    %v2261 = vpow.pop %v2260
    %v2262 = vadd.f32 %v2261, 1.0
    %v2263 = vrcp.pop %v2262
    %v2264 = vmul.f32 %v2262, %v2263
    %v2265 = vsub.f32 1.0, %v2264
    %v2266 = vmul.f32 %v2263, %v2265
    %v2267 = vadd.f32 %v2263, %v2266
    %vm2268 = vweird.f32 %v2262
    %vm2269 = vweird.f32 %v2263
    %vm2270 = vmor %vm2268, %vm2269
    %v2271 = vsel %vm2270, %v2263, %v2267
    %v2272 = vand.u32 2147483647, %v2262
    %vm2273 = vcmp.eq.f32.partialorder %v2272, 8.507059e+37
    %v2274 = vand.u32 %v2262, 2147483648
    %v2275 = vor.u32 1.1754944e-38, %v2274
    %v2276 = vsel %vm2273, %v2275, %v2271
    %v2277 = vmul.f32 1.0, %v2276
    %v2279 = vrot.slane %v1956, 6
    %v2281 = vmul.f32 %v2257, %v2279
    %v2282 = vmul.f32 %v2238, %v2258
    %v2283 = vadd.f32 %v2281, %v2282
    %v2284 = vtanh.pop %v2283
    %v2285 = vmul.f32 %v2277, %v2284
    %v2286 = vxor.u32 %v2216, 2147483648
    %v2287 = vmul.f32 %v2286, 1.442695
    %v2288 = vpow.pop %v2287
    %v2289 = vadd.f32 %v2288, 1.0
    %v2290 = vrcp.pop %v2289
    %v2291 = vmul.f32 %v2289, %v2290
    %v2292 = vsub.f32 1.0, %v2291
    %v2293 = vmul.f32 %v2290, %v2292
    %v2294 = vadd.f32 %v2290, %v2293
    %vm2295 = vweird.f32 %v2289
    %vm2296 = vweird.f32 %v2290
    %vm2297 = vmor %vm2295, %vm2296
    %v2298 = vsel %vm2297, %v2290, %v2294
    %v2299 = vand.u32 2147483647, %v2289
    %vm2300 = vcmp.eq.f32.partialorder %v2299, 8.507059e+37
    %v2301 = vand.u32 %v2289, 2147483648
    %v2302 = vor.u32 1.1754944e-38, %v2301
    %v2303 = vsel %vm2300, %v2302, %v2298
    %v2304 = vmul.f32 1.0, %v2303
    %v2305 = vxor.u32 %v2217, 2147483648
    %v2306 = vmul.f32 %v2305, 1.442695
    %v2307 = vpow.pop %v2306
    %v2308 = vadd.f32 %v2307, 1.0
    %v2309 = vrcp.pop %v2308
    %v2310 = vmul.f32 %v2308, %v2309
    %v2311 = vsub.f32 1.0, %v2310
    %v2312 = vmul.f32 %v2309, %v2311
    %v2313 = vadd.f32 %v2309, %v2312
    %vm2314 = vweird.f32 %v2308
    %vm2315 = vweird.f32 %v2309
    %vm2316 = vmor %vm2314, %vm2315
    %v2317 = vsel %vm2316, %v2309, %v2313
    %v2318 = vand.u32 2147483647, %v2308
    %vm2319 = vcmp.eq.f32.partialorder %v2318, 8.507059e+37
    %v2320 = vand.u32 %v2308, 2147483648
    %v2321 = vor.u32 1.1754944e-38, %v2320
    %v2322 = vsel %vm2319, %v2321, %v2317
    %v2323 = vmul.f32 1.0, %v2322
    %v2324 = vtanh.pop %v2218
    %v2325 = vxor.u32 %v2219, 2147483648
    %v2326 = vmul.f32 %v2325, 1.442695
    %v2327 = vpow.pop %v2326
    %v2328 = vadd.f32 %v2327, 1.0
    %v2329 = vrcp.pop %v2328
    %v2330 = vmul.f32 %v2328, %v2329
    %v2331 = vsub.f32 1.0, %v2330
    %v2332 = vmul.f32 %v2329, %v2331
    %v2333 = vadd.f32 %v2329, %v2332
    %vm2334 = vweird.f32 %v2328
    %vm2335 = vweird.f32 %v2329
    %vm2336 = vmor %vm2334, %vm2335
    %v2337 = vsel %vm2336, %v2329, %v2333
    %v2338 = vand.u32 2147483647, %v2328
    %vm2339 = vcmp.eq.f32.partialorder %v2338, 8.507059e+37
    %v2340 = vand.u32 %v2328, 2147483648
    %v2341 = vor.u32 1.1754944e-38, %v2340
    %v2342 = vsel %vm2339, %v2341, %v2337
    %v2343 = vmul.f32 1.0, %v2342
    %v2345 = vrot.slane %v2022, 2
    %v2347 = vmul.f32 %v2323, %v2345
    %v2348 = vmul.f32 %v2304, %v2324
    %v2349 = vadd.f32 %v2347, %v2348
    %v2350 = vtanh.pop %v2349
    %v2351 = vmul.f32 %v2343, %v2350
    %v2353 = vrot.slane %v2285, 2
    %2355 = vmatpush.msra.mxu0 %v541
    %2356 = vmatpush.msra.mxu0 %v537
    %2357 = vmatpush.msra.mxu0 %v533
    %2358 = vmatpush.msra.mxu0 %v529
    %2359 = vmatpush.msra.mxu0 %v525
    %2360 = vmatpush.msra.mxu0 %v521
    %2361 = vmatpush.msra.mxu0 %v517
    %2362 = vmatpush.msra.mxu0 %v513
    %2363 = vmatpush.msra.mxu0 %v509
    %2364 = vmatpush.msra.mxu0 %v505
    %2365 = vmatpush.msra.mxu0 %v501
    %2366 = vmatpush.msra.mxu0 %v497
    %2367 = vmatpush.msra.mxu0 %v493
    %2368 = vmatpush.msra.mxu0 %v489
    %2369 = vmatpush.msra.mxu0 %v485
    %2370 = vmatpush.msra.mxu0 %v481
    %2371 = vmatmul.f32.gmra.mxu0 %v2353
    %v2372 = vpop.f32.mrf.mxu0
    %v2373 = vadd.f32 0.0, %v2372
    %2374 = vdwg.mxu0
    %2375 = vmatpush.msra.mxu0 %v542
    %2376 = vmatpush.msra.mxu0 %v538
    %2377 = vmatpush.msra.mxu0 %v534
    %2378 = vmatpush.msra.mxu0 %v530
    %2379 = vmatpush.msra.mxu0 %v526
    %2380 = vmatpush.msra.mxu0 %v522
    %2381 = vmatpush.msra.mxu0 %v518
    %2382 = vmatpush.msra.mxu0 %v514
    %2383 = vmatpush.msra.mxu0 %v510
    %2384 = vmatpush.msra.mxu0 %v506
    %2385 = vmatpush.msra.mxu0 %v502
    %2386 = vmatpush.msra.mxu0 %v498
    %2387 = vmatpush.msra.mxu0 %v494
    %2388 = vmatpush.msra.mxu0 %v490
    %2389 = vmatpush.msra.mxu0 %v486
    %2390 = vmatpush.msra.mxu0 %v482
    %2391 = vmatmul.f32.gmra.mxu0 %v2353
    %v2392 = vpop.f32.mrf.mxu0
    %v2393 = vadd.f32 0.0, %v2392
    %2394 = vdwg.mxu0
    %2395 = vmatpush.msra.mxu0 %v543
    %2396 = vmatpush.msra.mxu0 %v539
    %2397 = vmatpush.msra.mxu0 %v535
    %2398 = vmatpush.msra.mxu0 %v531
    %2399 = vmatpush.msra.mxu0 %v527
    %2400 = vmatpush.msra.mxu0 %v523
    %2401 = vmatpush.msra.mxu0 %v519
    %2402 = vmatpush.msra.mxu0 %v515
    %2403 = vmatpush.msra.mxu0 %v511
    %2404 = vmatpush.msra.mxu0 %v507
    %2405 = vmatpush.msra.mxu0 %v503
    %2406 = vmatpush.msra.mxu0 %v499
    %2407 = vmatpush.msra.mxu0 %v495
    %2408 = vmatpush.msra.mxu0 %v491
    %2409 = vmatpush.msra.mxu0 %v487
    %2410 = vmatpush.msra.mxu0 %v483
    %2411 = vmatmul.f32.gmra.mxu0 %v2353
    %v2412 = vpop.f32.mrf.mxu0
    %v2413 = vadd.f32 0.0, %v2412
    %2414 = vdwg.mxu0
    %2415 = vmatpush.msra.mxu0 %v544
    %2416 = vmatpush.msra.mxu0 %v540
    %2417 = vmatpush.msra.mxu0 %v536
    %2418 = vmatpush.msra.mxu0 %v532
    %2419 = vmatpush.msra.mxu0 %v528
    %2420 = vmatpush.msra.mxu0 %v524
    %2421 = vmatpush.msra.mxu0 %v520
    %2422 = vmatpush.msra.mxu0 %v516
    %2423 = vmatpush.msra.mxu0 %v512
    %2424 = vmatpush.msra.mxu0 %v508
    %2425 = vmatpush.msra.mxu0 %v504
    %2426 = vmatpush.msra.mxu0 %v500
    %2427 = vmatpush.msra.mxu0 %v496
    %2428 = vmatpush.msra.mxu0 %v492
    %2429 = vmatpush.msra.mxu0 %v488
    %2430 = vmatpush.msra.mxu0 %v484
    %2431 = vmatmul.f32.gmra.mxu0 %v2353
    %v2432 = vpop.f32.mrf.mxu0
    %v2433 = vadd.f32 0.0, %v2432
    %2434 = vdwg.mxu0
    %v2439 = vrot.slane %v2373, 4
    %v2440 = vrot.slane %v2393, 4
    %v2441 = vrot.slane %v2413, 4
    %v2442 = vrot.slane %v2433, 4
    %v2447 = vadd.f32 %v268, %v2439
    %v2448 = vadd.f32 %v291, %v2440
    %v2449 = vadd.f32 %v314, %v2441
    %v2450 = vadd.f32 %v337, %v2442
    %v2452 = vrot.slane %v2351, 4
    %2454 = vmatpush.msra.mxu0 %v605
    %2455 = vmatpush.msra.mxu0 %v601
    %2456 = vmatpush.msra.mxu0 %v597
    %2457 = vmatpush.msra.mxu0 %v593
    %2458 = vmatpush.msra.mxu0 %v589
    %2459 = vmatpush.msra.mxu0 %v585
    %2460 = vmatpush.msra.mxu0 %v581
    %2461 = vmatpush.msra.mxu0 %v577
    %2462 = vmatpush.msra.mxu0 %v573
    %2463 = vmatpush.msra.mxu0 %v569
    %2464 = vmatpush.msra.mxu0 %v565
    %2465 = vmatpush.msra.mxu0 %v561
    %2466 = vmatpush.msra.mxu0 %v557
    %2467 = vmatpush.msra.mxu0 %v553
    %2468 = vmatpush.msra.mxu0 %v549
    %2469 = vmatpush.msra.mxu0 %v545
    %2470 = vmatmul.f32.gmra.mxu0 %v2452
    %v2471 = vpop.f32.mrf.mxu0
    %v2472 = vadd.f32 0.0, %v2471
    %2473 = vdwg.mxu0
    %2474 = vmatpush.msra.mxu0 %v606
    %2475 = vmatpush.msra.mxu0 %v602
    %2476 = vmatpush.msra.mxu0 %v598
    %2477 = vmatpush.msra.mxu0 %v594
    %2478 = vmatpush.msra.mxu0 %v590
    %2479 = vmatpush.msra.mxu0 %v586
    %2480 = vmatpush.msra.mxu0 %v582
    %2481 = vmatpush.msra.mxu0 %v578
    %2482 = vmatpush.msra.mxu0 %v574
    %2483 = vmatpush.msra.mxu0 %v570
    %2484 = vmatpush.msra.mxu0 %v566
    %2485 = vmatpush.msra.mxu0 %v562
    %2486 = vmatpush.msra.mxu0 %v558
    %2487 = vmatpush.msra.mxu0 %v554
    %2488 = vmatpush.msra.mxu0 %v550
    %2489 = vmatpush.msra.mxu0 %v546
    %2490 = vmatmul.f32.gmra.mxu0 %v2452
    %v2491 = vpop.f32.mrf.mxu0
    %v2492 = vadd.f32 0.0, %v2491
    %2493 = vdwg.mxu0
    %2494 = vmatpush.msra.mxu0 %v607
    %2495 = vmatpush.msra.mxu0 %v603
    %2496 = vmatpush.msra.mxu0 %v599
    %2497 = vmatpush.msra.mxu0 %v595
    %2498 = vmatpush.msra.mxu0 %v591
    %2499 = vmatpush.msra.mxu0 %v587
    %2500 = vmatpush.msra.mxu0 %v583
    %2501 = vmatpush.msra.mxu0 %v579
    %2502 = vmatpush.msra.mxu0 %v575
    %2503 = vmatpush.msra.mxu0 %v571
    %2504 = vmatpush.msra.mxu0 %v567
    %2505 = vmatpush.msra.mxu0 %v563
    %2506 = vmatpush.msra.mxu0 %v559
    %2507 = vmatpush.msra.mxu0 %v555
    %2508 = vmatpush.msra.mxu0 %v551
    %2509 = vmatpush.msra.mxu0 %v547
    %2510 = vmatmul.f32.gmra.mxu0 %v2452
    %v2511 = vpop.f32.mrf.mxu0
    %v2512 = vadd.f32 0.0, %v2511
    %2513 = vdwg.mxu0
    %2514 = vmatpush.msra.mxu0 %v608
    %2515 = vmatpush.msra.mxu0 %v604
    %2516 = vmatpush.msra.mxu0 %v600
    %2517 = vmatpush.msra.mxu0 %v596
    %2518 = vmatpush.msra.mxu0 %v592
    %2519 = vmatpush.msra.mxu0 %v588
    %2520 = vmatpush.msra.mxu0 %v584
    %2521 = vmatpush.msra.mxu0 %v580
    %2522 = vmatpush.msra.mxu0 %v576
    %2523 = vmatpush.msra.mxu0 %v572
    %2524 = vmatpush.msra.mxu0 %v568
    %2525 = vmatpush.msra.mxu0 %v564
    %2526 = vmatpush.msra.mxu0 %v560
    %2527 = vmatpush.msra.mxu0 %v556
    %2528 = vmatpush.msra.mxu0 %v552
    %2529 = vmatpush.msra.mxu0 %v548
    %2530 = vmatmul.f32.gmra.mxu0 %v2452
    %v2531 = vpop.f32.mrf.mxu0
    %v2532 = vadd.f32 0.0, %v2531
    %2533 = vdwg.mxu0
    %v2538 = vrot.slane %v2472, 6
    %v2539 = vrot.slane %v2492, 6
    %v2540 = vrot.slane %v2512, 6
    %v2541 = vrot.slane %v2532, 6
    %v2546 = vadd.f32 %v407, %v2538
    %v2547 = vadd.f32 %v430, %v2539
    %v2548 = vadd.f32 %v453, %v2540
    %v2549 = vadd.f32 %v476, %v2541
    %v2550 = vxor.u32 %v2447, 2147483648
    %v2551 = vmul.f32 %v2550, 1.442695
    %v2552 = vpow.pop %v2551
    %v2553 = vadd.f32 %v2552, 1.0
    %v2554 = vrcp.pop %v2553
    %v2555 = vmul.f32 %v2553, %v2554
    %v2556 = vsub.f32 1.0, %v2555
    %v2557 = vmul.f32 %v2554, %v2556
    %v2558 = vadd.f32 %v2554, %v2557
    %vm2559 = vweird.f32 %v2553
    %vm2560 = vweird.f32 %v2554
    %vm2561 = vmor %vm2559, %vm2560
    %v2562 = vsel %vm2561, %v2554, %v2558
    %v2563 = vand.u32 2147483647, %v2553
    %vm2564 = vcmp.eq.f32.partialorder %v2563, 8.507059e+37
    %v2565 = vand.u32 %v2553, 2147483648
    %v2566 = vor.u32 1.1754944e-38, %v2565
    %v2567 = vsel %vm2564, %v2566, %v2562
    %v2568 = vmul.f32 1.0, %v2567
    %v2569 = vxor.u32 %v2448, 2147483648
    %v2570 = vmul.f32 %v2569, 1.442695
    %v2571 = vpow.pop %v2570
    %v2572 = vadd.f32 %v2571, 1.0
    %v2573 = vrcp.pop %v2572
    %v2574 = vmul.f32 %v2572, %v2573
    %v2575 = vsub.f32 1.0, %v2574
    %v2576 = vmul.f32 %v2573, %v2575
    %v2577 = vadd.f32 %v2573, %v2576
    %vm2578 = vweird.f32 %v2572
    %vm2579 = vweird.f32 %v2573
    %vm2580 = vmor %vm2578, %vm2579
    %v2581 = vsel %vm2580, %v2573, %v2577
    %v2582 = vand.u32 2147483647, %v2572
    %vm2583 = vcmp.eq.f32.partialorder %v2582, 8.507059e+37
    %v2584 = vand.u32 %v2572, 2147483648
    %v2585 = vor.u32 1.1754944e-38, %v2584
    %v2586 = vsel %vm2583, %v2585, %v2581
    %v2587 = vmul.f32 1.0, %v2586
    %v2588 = vtanh.pop %v2449
    %v2589 = vxor.u32 %v2450, 2147483648
    %v2590 = vmul.f32 %v2589, 1.442695
    %v2591 = vpow.pop %v2590
    %v2592 = vadd.f32 %v2591, 1.0
    %v2593 = vrcp.pop %v2592
    %v2594 = vmul.f32 %v2592, %v2593
    %v2595 = vsub.f32 1.0, %v2594
    %v2596 = vmul.f32 %v2593, %v2595
    %v2597 = vadd.f32 %v2593, %v2596
    %vm2598 = vweird.f32 %v2592
    %vm2599 = vweird.f32 %v2593
    %vm2600 = vmor %vm2598, %vm2599
    %v2601 = vsel %vm2600, %v2593, %v2597
    %v2602 = vand.u32 2147483647, %v2592
    %vm2603 = vcmp.eq.f32.partialorder %v2602, 8.507059e+37
    %v2604 = vand.u32 %v2592, 2147483648
    %v2605 = vor.u32 1.1754944e-38, %v2604
    %v2606 = vsel %vm2603, %v2605, %v2601
    %v2607 = vmul.f32 1.0, %v2606
    %v2609 = vrot.slane %v2283, 6
    %v2611 = vmul.f32 %v2587, %v2609
    %v2612 = vmul.f32 %v2568, %v2588
    %v2613 = vadd.f32 %v2611, %v2612
    %v2614 = vtanh.pop %v2613
    %v2615 = vmul.f32 %v2607, %v2614
    %v2616 = vxor.u32 %v2546, 2147483648
    %v2617 = vmul.f32 %v2616, 1.442695
    %v2618 = vpow.pop %v2617
    %v2619 = vadd.f32 %v2618, 1.0
    %v2620 = vrcp.pop %v2619
    %v2621 = vmul.f32 %v2619, %v2620
    %v2622 = vsub.f32 1.0, %v2621
    %v2623 = vmul.f32 %v2620, %v2622
    %v2624 = vadd.f32 %v2620, %v2623
    %vm2625 = vweird.f32 %v2619
    %vm2626 = vweird.f32 %v2620
    %vm2627 = vmor %vm2625, %vm2626
    %v2628 = vsel %vm2627, %v2620, %v2624
    %v2629 = vand.u32 2147483647, %v2619
    %vm2630 = vcmp.eq.f32.partialorder %v2629, 8.507059e+37
    %v2631 = vand.u32 %v2619, 2147483648
    %v2632 = vor.u32 1.1754944e-38, %v2631
    %v2633 = vsel %vm2630, %v2632, %v2628
    %v2634 = vmul.f32 1.0, %v2633
    %v2635 = vxor.u32 %v2547, 2147483648
    %v2636 = vmul.f32 %v2635, 1.442695
    %v2637 = vpow.pop %v2636
    %v2638 = vadd.f32 %v2637, 1.0
    %v2639 = vrcp.pop %v2638
    %v2640 = vmul.f32 %v2638, %v2639
    %v2641 = vsub.f32 1.0, %v2640
    %v2642 = vmul.f32 %v2639, %v2641
    %v2643 = vadd.f32 %v2639, %v2642
    %vm2644 = vweird.f32 %v2638
    %vm2645 = vweird.f32 %v2639
    %vm2646 = vmor %vm2644, %vm2645
    %v2647 = vsel %vm2646, %v2639, %v2643
    %v2648 = vand.u32 2147483647, %v2638
    %vm2649 = vcmp.eq.f32.partialorder %v2648, 8.507059e+37
    %v2650 = vand.u32 %v2638, 2147483648
    %v2651 = vor.u32 1.1754944e-38, %v2650
    %v2652 = vsel %vm2649, %v2651, %v2647
    %v2653 = vmul.f32 1.0, %v2652
    %v2654 = vtanh.pop %v2548
    %v2655 = vxor.u32 %v2549, 2147483648
    %v2656 = vmul.f32 %v2655, 1.442695
    %v2657 = vpow.pop %v2656
    %v2658 = vadd.f32 %v2657, 1.0
    %v2659 = vrcp.pop %v2658
    %v2660 = vmul.f32 %v2658, %v2659
    %v2661 = vsub.f32 1.0, %v2660
    %v2662 = vmul.f32 %v2659, %v2661
    %v2663 = vadd.f32 %v2659, %v2662
    %vm2664 = vweird.f32 %v2658
    %vm2665 = vweird.f32 %v2659
    %vm2666 = vmor %vm2664, %vm2665
    %v2667 = vsel %vm2666, %v2659, %v2663
    %v2668 = vand.u32 2147483647, %v2658
    %vm2669 = vcmp.eq.f32.partialorder %v2668, 8.507059e+37
    %v2670 = vand.u32 %v2658, 2147483648
    %v2671 = vor.u32 1.1754944e-38, %v2670
    %v2672 = vsel %vm2669, %v2671, %v2667
    %v2673 = vmul.f32 1.0, %v2672
    %v2675 = vrot.slane %v2349, 2
    %v2677 = vmul.f32 %v2653, %v2675
    %v2678 = vmul.f32 %v2634, %v2654
    %v2679 = vadd.f32 %v2677, %v2678
    %v2680 = vtanh.pop %v2679
    %v2681 = vmul.f32 %v2673, %v2680
    %v2683 = vrot.slane %v2615, 4
    %2685 = vmatpush.msra.mxu0 %v541
    %2686 = vmatpush.msra.mxu0 %v537
    %2687 = vmatpush.msra.mxu0 %v533
    %2688 = vmatpush.msra.mxu0 %v529
    %2689 = vmatpush.msra.mxu0 %v525
    %2690 = vmatpush.msra.mxu0 %v521
    %2691 = vmatpush.msra.mxu0 %v517
    %2692 = vmatpush.msra.mxu0 %v513
    %2693 = vmatpush.msra.mxu0 %v509
    %2694 = vmatpush.msra.mxu0 %v505
    %2695 = vmatpush.msra.mxu0 %v501
    %2696 = vmatpush.msra.mxu0 %v497
    %2697 = vmatpush.msra.mxu0 %v493
    %2698 = vmatpush.msra.mxu0 %v489
    %2699 = vmatpush.msra.mxu0 %v485
    %2700 = vmatpush.msra.mxu0 %v481
    %2701 = vmatmul.f32.gmra.mxu0 %v2683
    %v2702 = vpop.f32.mrf.mxu0
    %v2703 = vadd.f32 0.0, %v2702
    %2704 = vdwg.mxu0
    %2705 = vmatpush.msra.mxu0 %v542
    %2706 = vmatpush.msra.mxu0 %v538
    %2707 = vmatpush.msra.mxu0 %v534
    %2708 = vmatpush.msra.mxu0 %v530
    %2709 = vmatpush.msra.mxu0 %v526
    %2710 = vmatpush.msra.mxu0 %v522
    %2711 = vmatpush.msra.mxu0 %v518
    %2712 = vmatpush.msra.mxu0 %v514
    %2713 = vmatpush.msra.mxu0 %v510
    %2714 = vmatpush.msra.mxu0 %v506
    %2715 = vmatpush.msra.mxu0 %v502
    %2716 = vmatpush.msra.mxu0 %v498
    %2717 = vmatpush.msra.mxu0 %v494
    %2718 = vmatpush.msra.mxu0 %v490
    %2719 = vmatpush.msra.mxu0 %v486
    %2720 = vmatpush.msra.mxu0 %v482
    %2721 = vmatmul.f32.gmra.mxu0 %v2683
    %v2722 = vpop.f32.mrf.mxu0
    %v2723 = vadd.f32 0.0, %v2722
    %2724 = vdwg.mxu0
    %2725 = vmatpush.msra.mxu0 %v543
    %2726 = vmatpush.msra.mxu0 %v539
    %2727 = vmatpush.msra.mxu0 %v535
    %2728 = vmatpush.msra.mxu0 %v531
    %2729 = vmatpush.msra.mxu0 %v527
    %2730 = vmatpush.msra.mxu0 %v523
    %2731 = vmatpush.msra.mxu0 %v519
    %2732 = vmatpush.msra.mxu0 %v515
    %2733 = vmatpush.msra.mxu0 %v511
    %2734 = vmatpush.msra.mxu0 %v507
    %2735 = vmatpush.msra.mxu0 %v503
    %2736 = vmatpush.msra.mxu0 %v499
    %2737 = vmatpush.msra.mxu0 %v495
    %2738 = vmatpush.msra.mxu0 %v491
    %2739 = vmatpush.msra.mxu0 %v487
    %2740 = vmatpush.msra.mxu0 %v483
    %2741 = vmatmul.f32.gmra.mxu0 %v2683
    %v2742 = vpop.f32.mrf.mxu0
    %v2743 = vadd.f32 0.0, %v2742
    %2744 = vdwg.mxu0
    %2745 = vmatpush.msra.mxu0 %v544
    %2746 = vmatpush.msra.mxu0 %v540
    %2747 = vmatpush.msra.mxu0 %v536
    %2748 = vmatpush.msra.mxu0 %v532
    %2749 = vmatpush.msra.mxu0 %v528
    %2750 = vmatpush.msra.mxu0 %v524
    %2751 = vmatpush.msra.mxu0 %v520
    %2752 = vmatpush.msra.mxu0 %v516
    %2753 = vmatpush.msra.mxu0 %v512
    %2754 = vmatpush.msra.mxu0 %v508
    %2755 = vmatpush.msra.mxu0 %v504
    %2756 = vmatpush.msra.mxu0 %v500
    %2757 = vmatpush.msra.mxu0 %v496
    %2758 = vmatpush.msra.mxu0 %v492
    %2759 = vmatpush.msra.mxu0 %v488
    %2760 = vmatpush.msra.mxu0 %v484
    %2761 = vmatmul.f32.gmra.mxu0 %v2683
    %v2762 = vpop.f32.mrf.mxu0
    %v2763 = vadd.f32 0.0, %v2762
    %2764 = vdwg.mxu0
    %v2769 = vrot.slane %v2703, 2
    %v2770 = vrot.slane %v2723, 2
    %v2771 = vrot.slane %v2743, 2
    %v2772 = vrot.slane %v2763, 2
    %v2777 = vadd.f32 %v268, %v2769
    %v2778 = vadd.f32 %v291, %v2770
    %v2779 = vadd.f32 %v314, %v2771
    %v2780 = vadd.f32 %v337, %v2772
    %v2782 = vrot.slane %v2681, 2
    %2784 = vmatpush.msra.mxu0 %v605
    %2785 = vmatpush.msra.mxu0 %v601
    %2786 = vmatpush.msra.mxu0 %v597
    %2787 = vmatpush.msra.mxu0 %v593
    %2788 = vmatpush.msra.mxu0 %v589
    %2789 = vmatpush.msra.mxu0 %v585
    %2790 = vmatpush.msra.mxu0 %v581
    %2791 = vmatpush.msra.mxu0 %v577
    %2792 = vmatpush.msra.mxu0 %v573
    %2793 = vmatpush.msra.mxu0 %v569
    %2794 = vmatpush.msra.mxu0 %v565
    %2795 = vmatpush.msra.mxu0 %v561
    %2796 = vmatpush.msra.mxu0 %v557
    %2797 = vmatpush.msra.mxu0 %v553
    %2798 = vmatpush.msra.mxu0 %v549
    %2799 = vmatpush.msra.mxu0 %v545
    %2800 = vmatmul.f32.gmra.mxu0 %v2782
    %v2801 = vpop.f32.mrf.mxu0
    %v2802 = vadd.f32 0.0, %v2801
    %2803 = vdwg.mxu0
    %2804 = vmatpush.msra.mxu0 %v606
    %2805 = vmatpush.msra.mxu0 %v602
    %2806 = vmatpush.msra.mxu0 %v598
    %2807 = vmatpush.msra.mxu0 %v594
    %2808 = vmatpush.msra.mxu0 %v590
    %2809 = vmatpush.msra.mxu0 %v586
    %2810 = vmatpush.msra.mxu0 %v582
    %2811 = vmatpush.msra.mxu0 %v578
    %2812 = vmatpush.msra.mxu0 %v574
    %2813 = vmatpush.msra.mxu0 %v570
    %2814 = vmatpush.msra.mxu0 %v566
    %2815 = vmatpush.msra.mxu0 %v562
    %2816 = vmatpush.msra.mxu0 %v558
    %2817 = vmatpush.msra.mxu0 %v554
    %2818 = vmatpush.msra.mxu0 %v550
    %2819 = vmatpush.msra.mxu0 %v546
    %2820 = vmatmul.f32.gmra.mxu0 %v2782
    %v2821 = vpop.f32.mrf.mxu0
    %v2822 = vadd.f32 0.0, %v2821
    %2823 = vdwg.mxu0
    %2824 = vmatpush.msra.mxu0 %v607
    %2825 = vmatpush.msra.mxu0 %v603
    %2826 = vmatpush.msra.mxu0 %v599
    %2827 = vmatpush.msra.mxu0 %v595
    %2828 = vmatpush.msra.mxu0 %v591
    %2829 = vmatpush.msra.mxu0 %v587
    %2830 = vmatpush.msra.mxu0 %v583
    %2831 = vmatpush.msra.mxu0 %v579
    %2832 = vmatpush.msra.mxu0 %v575
    %2833 = vmatpush.msra.mxu0 %v571
    %2834 = vmatpush.msra.mxu0 %v567
    %2835 = vmatpush.msra.mxu0 %v563
    %2836 = vmatpush.msra.mxu0 %v559
    %2837 = vmatpush.msra.mxu0 %v555
    %2838 = vmatpush.msra.mxu0 %v551
    %2839 = vmatpush.msra.mxu0 %v547
    %2840 = vmatmul.f32.gmra.mxu0 %v2782
    %v2841 = vpop.f32.mrf.mxu0
    %v2842 = vadd.f32 0.0, %v2841
    %2843 = vdwg.mxu0
    %2844 = vmatpush.msra.mxu0 %v608
    %2845 = vmatpush.msra.mxu0 %v604
    %2846 = vmatpush.msra.mxu0 %v600
    %2847 = vmatpush.msra.mxu0 %v596
    %2848 = vmatpush.msra.mxu0 %v592
    %2849 = vmatpush.msra.mxu0 %v588
    %2850 = vmatpush.msra.mxu0 %v584
    %2851 = vmatpush.msra.mxu0 %v580
    %2852 = vmatpush.msra.mxu0 %v576
    %2853 = vmatpush.msra.mxu0 %v572
    %2854 = vmatpush.msra.mxu0 %v568
    %2855 = vmatpush.msra.mxu0 %v564
    %2856 = vmatpush.msra.mxu0 %v560
    %2857 = vmatpush.msra.mxu0 %v556
    %2858 = vmatpush.msra.mxu0 %v552
    %2859 = vmatpush.msra.mxu0 %v548
    %2860 = vmatmul.f32.gmra.mxu0 %v2782
    %v2861 = vpop.f32.mrf.mxu0
    %v2862 = vadd.f32 0.0, %v2861
    %2863 = vdwg.mxu0
    %v2864 = vadd.f32 %v407, %v2802
    %v2865 = vadd.f32 %v430, %v2822
    %v2866 = vadd.f32 %v453, %v2842
    %v2867 = vadd.f32 %v476, %v2862
    %v2868 = vxor.u32 %v2777, 2147483648
    %v2869 = vmul.f32 %v2868, 1.442695
    %v2870 = vpow.pop %v2869
    %v2871 = vadd.f32 %v2870, 1.0
    %v2872 = vrcp.pop %v2871
    %v2873 = vmul.f32 %v2871, %v2872
    %v2874 = vsub.f32 1.0, %v2873
    %v2875 = vmul.f32 %v2872, %v2874
    %v2876 = vadd.f32 %v2872, %v2875
    %vm2877 = vweird.f32 %v2871
    %vm2878 = vweird.f32 %v2872
    %vm2879 = vmor %vm2877, %vm2878
    %v2880 = vsel %vm2879, %v2872, %v2876
    %v2881 = vand.u32 2147483647, %v2871
    %vm2882 = vcmp.eq.f32.partialorder %v2881, 8.507059e+37
    %v2883 = vand.u32 %v2871, 2147483648
    %v2884 = vor.u32 1.1754944e-38, %v2883
    %v2885 = vsel %vm2882, %v2884, %v2880
    %v2886 = vmul.f32 1.0, %v2885
    %v2887 = vxor.u32 %v2778, 2147483648
    %v2888 = vmul.f32 %v2887, 1.442695
    %v2889 = vpow.pop %v2888
    %v2890 = vadd.f32 %v2889, 1.0
    %v2891 = vrcp.pop %v2890
    %v2892 = vmul.f32 %v2890, %v2891
    %v2893 = vsub.f32 1.0, %v2892
    %v2894 = vmul.f32 %v2891, %v2893
    %v2895 = vadd.f32 %v2891, %v2894
    %vm2896 = vweird.f32 %v2890
    %vm2897 = vweird.f32 %v2891
    %vm2898 = vmor %vm2896, %vm2897
    %v2899 = vsel %vm2898, %v2891, %v2895
    %v2900 = vand.u32 2147483647, %v2890
    %vm2901 = vcmp.eq.f32.partialorder %v2900, 8.507059e+37
    %v2902 = vand.u32 %v2890, 2147483648
    %v2903 = vor.u32 1.1754944e-38, %v2902
    %v2904 = vsel %vm2901, %v2903, %v2899
    %v2905 = vmul.f32 1.0, %v2904
    %v2906 = vtanh.pop %v2779
    %v2907 = vxor.u32 %v2780, 2147483648
    %v2908 = vmul.f32 %v2907, 1.442695
    %v2909 = vpow.pop %v2908
    %v2910 = vadd.f32 %v2909, 1.0
    %v2911 = vrcp.pop %v2910
    %v2912 = vmul.f32 %v2910, %v2911
    %v2913 = vsub.f32 1.0, %v2912
    %v2914 = vmul.f32 %v2911, %v2913
    %v2915 = vadd.f32 %v2911, %v2914
    %vm2916 = vweird.f32 %v2910
    %vm2917 = vweird.f32 %v2911
    %vm2918 = vmor %vm2916, %vm2917
    %v2919 = vsel %vm2918, %v2911, %v2915
    %v2920 = vand.u32 2147483647, %v2910
    %vm2921 = vcmp.eq.f32.partialorder %v2920, 8.507059e+37
    %v2922 = vand.u32 %v2910, 2147483648
    %v2923 = vor.u32 1.1754944e-38, %v2922
    %v2924 = vsel %vm2921, %v2923, %v2919
    %v2925 = vmul.f32 1.0, %v2924
    %v2927 = vrot.slane %v2613, 6
    %v2929 = vmul.f32 %v2905, %v2927
    %v2930 = vmul.f32 %v2886, %v2906
    %v2931 = vadd.f32 %v2929, %v2930
    %v2932 = vtanh.pop %v2931
    %v2933 = vmul.f32 %v2925, %v2932
    %v2934 = vxor.u32 %v2864, 2147483648
    %v2935 = vmul.f32 %v2934, 1.442695
    %v2936 = vpow.pop %v2935
    %v2937 = vadd.f32 %v2936, 1.0
    %v2938 = vrcp.pop %v2937
    %v2939 = vmul.f32 %v2937, %v2938
    %v2940 = vsub.f32 1.0, %v2939
    %v2941 = vmul.f32 %v2938, %v2940
    %v2942 = vadd.f32 %v2938, %v2941
    %vm2943 = vweird.f32 %v2937
    %vm2944 = vweird.f32 %v2938
    %vm2945 = vmor %vm2943, %vm2944
    %v2946 = vsel %vm2945, %v2938, %v2942
    %v2947 = vand.u32 2147483647, %v2937
    %vm2948 = vcmp.eq.f32.partialorder %v2947, 8.507059e+37
    %v2949 = vand.u32 %v2937, 2147483648
    %v2950 = vor.u32 1.1754944e-38, %v2949
    %v2951 = vsel %vm2948, %v2950, %v2946
    %v2952 = vmul.f32 1.0, %v2951
    %v2953 = vxor.u32 %v2865, 2147483648
    %v2954 = vmul.f32 %v2953, 1.442695
    %v2955 = vpow.pop %v2954
    %v2956 = vadd.f32 %v2955, 1.0
    %v2957 = vrcp.pop %v2956
    %v2958 = vmul.f32 %v2956, %v2957
    %v2959 = vsub.f32 1.0, %v2958
    %v2960 = vmul.f32 %v2957, %v2959
    %v2961 = vadd.f32 %v2957, %v2960
    %vm2962 = vweird.f32 %v2956
    %vm2963 = vweird.f32 %v2957
    %vm2964 = vmor %vm2962, %vm2963
    %v2965 = vsel %vm2964, %v2957, %v2961
    %v2966 = vand.u32 2147483647, %v2956
    %vm2967 = vcmp.eq.f32.partialorder %v2966, 8.507059e+37
    %v2968 = vand.u32 %v2956, 2147483648
    %v2969 = vor.u32 1.1754944e-38, %v2968
    %v2970 = vsel %vm2967, %v2969, %v2965
    %v2971 = vmul.f32 1.0, %v2970
    %v2972 = vtanh.pop %v2866
    %v2973 = vxor.u32 %v2867, 2147483648
    %v2974 = vmul.f32 %v2973, 1.442695
    %v2975 = vpow.pop %v2974
    %v2976 = vadd.f32 %v2975, 1.0
    %v2977 = vrcp.pop %v2976
    %v2978 = vmul.f32 %v2976, %v2977
    %v2979 = vsub.f32 1.0, %v2978
    %v2980 = vmul.f32 %v2977, %v2979
    %v2981 = vadd.f32 %v2977, %v2980
    %vm2982 = vweird.f32 %v2976
    %vm2983 = vweird.f32 %v2977
    %vm2984 = vmor %vm2982, %vm2983
    %v2985 = vsel %vm2984, %v2977, %v2981
    %v2986 = vand.u32 2147483647, %v2976
    %vm2987 = vcmp.eq.f32.partialorder %v2986, 8.507059e+37
    %v2988 = vand.u32 %v2976, 2147483648
    %v2989 = vor.u32 1.1754944e-38, %v2988
    %v2990 = vsel %vm2987, %v2989, %v2985
    %v2991 = vmul.f32 1.0, %v2990
    %v2993 = vrot.slane %v2679, 2
    %v2995 = vmul.f32 %v2971, %v2993
    %v2996 = vmul.f32 %v2952, %v2972
    %v2997 = vadd.f32 %v2995, %v2996
    %v2998 = vtanh.pop %v2997
    %v2999 = vmul.f32 %v2991, %v2998
    %v3000 = vsel %vm234, %v671, %v995
    %vm3001 = vcmask 1043456
    %v3002 = vsel %vm3001, %v3000, %v1325
    %v3003 = vsel %vm162, %v3002, %v1643
    %v3004 = vsel %vm234, %v1958, %v2285
    %v3005 = vsel %vm3001, %v3004, %v2615
    %v3006 = vsel %vm162, %v3005, %v2933
    %v3007 = vsel %vm234, %v2999, %v2681
    %v3008 = vsel %vm3001, %v3007, %v2351
    %v3009 = vsel %vm162, %v3008, %v2024
    %v3010 = vsel %vm234, %v1709, %v1391
    %v3011 = vsel %vm3001, %v3010, %v1061
    %v3012 = vsel %vm162, %v3011, %v734
    %v3013 = vld [vmem:[#allocation9] sm:$0xff]
    %v3014 = vld [vmem:[#allocation9 + $0x8] sm:$0xff]
    %v3015 = vld [vmem:[#allocation9 + $0x10] sm:$0xff]
    %v3016 = vld [vmem:[#allocation9 + $0x18] sm:$0xff]
    %v3017 = vld [vmem:[#allocation9 + $0x20] sm:$0xff]
    %v3018 = vld [vmem:[#allocation9 + $0x28] sm:$0xff]
    %v3019 = vld [vmem:[#allocation9 + $0x30] sm:$0xff]
    %v3020 = vld [vmem:[#allocation9 + $0x38] sm:$0xff]
    %v3021 = vld [vmem:[#allocation9 + $0x40] sm:$0xff]
    %v3022 = vld [vmem:[#allocation9 + $0x48] sm:$0xff]
    %v3023 = vld [vmem:[#allocation9 + $0x50] sm:$0xff]
    %v3024 = vld [vmem:[#allocation9 + $0x58] sm:$0xff]
    %v3025 = vld [vmem:[#allocation9 + $0x60] sm:$0xff]
    %v3026 = vld [vmem:[#allocation9 + $0x68] sm:$0xff]
    %v3027 = vld [vmem:[#allocation9 + $0x70] sm:$0xff]
    %v3028 = vld [vmem:[#allocation9 + $0x78] sm:$0xff]
    %v3029 = vld [vmem:[#allocation10] sm:$0xff]
    %v3030 = vld [vmem:[#allocation10 + $0x8] sm:$0xff]
    %v3031 = vld [vmem:[#allocation10 + $0x10] sm:$0xff]
    %v3032 = vld [vmem:[#allocation10 + $0x18] sm:$0xff]
    %v3033 = vld [vmem:[#allocation10 + $0x20] sm:$0xff]
    %v3034 = vld [vmem:[#allocation10 + $0x28] sm:$0xff]
    %v3035 = vld [vmem:[#allocation10 + $0x30] sm:$0xff]
    %v3036 = vld [vmem:[#allocation10 + $0x38] sm:$0xff]
    %v3037 = vld [vmem:[#allocation10 + $0x40] sm:$0xff]
    %v3038 = vld [vmem:[#allocation10 + $0x48] sm:$0xff]
    %v3039 = vld [vmem:[#allocation10 + $0x50] sm:$0xff]
    %v3040 = vld [vmem:[#allocation10 + $0x58] sm:$0xff]
    %v3041 = vld [vmem:[#allocation10 + $0x60] sm:$0xff]
    %v3042 = vld [vmem:[#allocation10 + $0x68] sm:$0xff]
    %v3043 = vld [vmem:[#allocation10 + $0x70] sm:$0xff]
    %v3044 = vld [vmem:[#allocation10 + $0x78] sm:$0xff]
    %3045 = vmatpush.msra.mxu0 %v3044
    %3046 = vmatpush.msra.mxu0 %v3043
    %3047 = vmatpush.msra.mxu0 %v3042
    %3048 = vmatpush.msra.mxu0 %v3041
    %3049 = vmatpush.msra.mxu0 %v3040
    %3050 = vmatpush.msra.mxu0 %v3039
    %3051 = vmatpush.msra.mxu0 %v3038
    %3052 = vmatpush.msra.mxu0 %v3037
    %3053 = vmatpush.msra.mxu0 %v3036
    %3054 = vmatpush.msra.mxu0 %v3035
    %3055 = vmatpush.msra.mxu0 %v3034
    %3056 = vmatpush.msra.mxu0 %v3033
    %3057 = vmatpush.msra.mxu0 %v3032
    %3058 = vmatpush.msra.mxu0 %v3031
    %3059 = vmatpush.msra.mxu0 %v3030
    %3060 = vmatpush.msra.mxu0 %v3029
    %3061 = vmatmul.f32.gmra.mxu0 %v3009
    %v3062 = vpop.f32.mrf.mxu0
    %v3063 = vadd.f32 0.0, %v3062
    %3064 = vmatmul.f32.gmra.mxu0 %v3012
    %v3065 = vpop.f32.mrf.mxu0
    %v3066 = vadd.f32 0.0, %v3065
    %3067 = vdwg.mxu0
    %3068 = vmatpush.msra.mxu0 %v3028
    %3069 = vmatpush.msra.mxu0 %v3027
    %3070 = vmatpush.msra.mxu0 %v3026
    %3071 = vmatpush.msra.mxu0 %v3025
    %3072 = vmatpush.msra.mxu0 %v3024
    %3073 = vmatpush.msra.mxu0 %v3023
    %3074 = vmatpush.msra.mxu0 %v3022
    %3075 = vmatpush.msra.mxu0 %v3021
    %3076 = vmatpush.msra.mxu0 %v3020
    %3077 = vmatpush.msra.mxu0 %v3019
    %3078 = vmatpush.msra.mxu0 %v3018
    %3079 = vmatpush.msra.mxu0 %v3017
    %3080 = vmatpush.msra.mxu0 %v3016
    %3081 = vmatpush.msra.mxu0 %v3015
    %3082 = vmatpush.msra.mxu0 %v3014
    %3083 = vmatpush.msra.mxu0 %v3013
    %3084 = vmatmul.f32.gmra.mxu0 %v3003
    %v3085 = vpop.f32.mrf.mxu0
    %v3086 = vadd.f32 %v3063, %v3085
    %3087 = vmatmul.f32.gmra.mxu0 %v3006
    %v3088 = vpop.f32.mrf.mxu0
    %v3089 = vadd.f32 %v3066, %v3088
    %3090 = vdwg.mxu0
    %v3091 = vld [vmem:[%s11] sm:$0x1]
    %v3093 = vperm.slane %v3091, 0
    %v3095 = vadd.f32 %v3086, %v3093
    %v3096 = vadd.f32 %v3089, %v3093
    %3097 = vmax.xlane.f32.xlu0 %v3095
    %v3098 = vpop.xlane.xlu0 %3097
    %3099 = vmax.xlane.f32.xlu0 %v3096
    %v3100 = vpop.xlane.xlu0 %3099
    %vm3101 = vcmp.eq.f32.partialorder %v3095, %v3098
    %vm3102 = vcmp.eq.f32.partialorder %v3096, %v3100
    %v3103 = vsel %vm3101, %v138, 128
    %v3104 = vsel %vm3102, %v138, 128
    %v3105 = vand.u32 %v3103, 65535
    %v3106 = vshra.s32 %v3103, 16
    %v3107 = vcvt.s32.f32 %v3105
    %v3108 = vcvt.s32.f32 %v3106
    %3109 = vmin.xlane.f32.xlu0 %v3108
    %v3110 = vpop.xlane.xlu0 %3109
    %vm3111 = vcmp.eq.f32.partialorder %v3108, %v3110
    %v3112 = vsel %vm3111, %v3107, inf
    %3113 = vmin.xlane.f32.xlu0 %v3112
    %v3114 = vpop.xlane.xlu0 %3113
    %v3115 = vcvt.f32.s32 %v3114
    %v3116 = vcvt.f32.s32 %v3110
    %v3117 = vshll.u32 %v3116, 16
    %v3118 = vadd.s32 %v3117, %v3115
    %v3119 = vand.u32 %v3104, 65535
    %v3120 = vshra.s32 %v3104, 16
    %v3121 = vcvt.s32.f32 %v3119
    %v3122 = vcvt.s32.f32 %v3120
    %3123 = vmin.xlane.f32.xlu0 %v3122
    %v3124 = vpop.xlane.xlu0 %3123
    %vm3125 = vcmp.eq.f32.partialorder %v3122, %v3124
    %v3126 = vsel %vm3125, %v3121, inf
    %3127 = vmin.xlane.f32.xlu0 %v3126
    %v3128 = vpop.xlane.xlu0 %3127
    %v3129 = vcvt.f32.s32 %v3128
    %v3130 = vcvt.f32.s32 %v3124
    %v3131 = vshll.u32 %v3130, 16
    %v3132 = vadd.s32 %v3131, %v3129
    %v3133 = vld [vmem:[%s1] sm:$0xff]
    %v3134 = vld [vmem:[%s1 + $0x8] sm:$0xff]
    %v3135 = vmul.u32 %v3133, %v3118
    %v3136 = vmul.u32 %v3134, %v3132
    %vm3137 = vcmask 7168
    %3138 = vst.msk [vmem:[%s12] sm:$0xff] %vm3137, %v3135
    %3139 = vst.msk [vmem:[%s12 + $0x8] sm:$0xff] %vm3137, %v3136
    // Predicated region
    $region74: #{bilstm_forward.1} parent=1 // pred_check
      _
    $region75: #{bilstm_forward.1} parent=1 // pred_check_branch
      %3141 = sbr.rel (0) target = $region77
    $region76: #{bilstm_forward.1} parent=1 // pred_region
      _
    $region77: #{bilstm_forward.1} parent=1 // pred_fallthru
      _
    // Predicated region
    $region78: #{bilstm_forward.1} parent=1 // pred_check
      _
    $region79: #{bilstm_forward.1} parent=1 // pred_check_branch
      %3143 = sbr.rel (0) target = $region81
    $region80: #{bilstm_forward.1} parent=1 // pred_region
      _
    $region81: #{bilstm_forward.1} parent=1 // pred_fallthru
      _
    %3144 = vsyncpa [#allocation3], 1
    %3145 = vsyncpa [#allocation5], 1
    %3146 = vsyncpa [#allocation8], 1
    %3147 = vsyncpa [#allocation11], 1

</llo_original>
